<compile_context>
chip_gen: v6e
topology: v6e:2x2x1
jax: 0.10.0
libtpu: 0.0.40
codegen_flags: <defaults>
</compile_context>

<pallas_src>
import functools

import jax
import jax.numpy as jnp
from jax.experimental import pallas as pl
from jax.experimental.pallas import tpu as pltpu


def _phase_partial_convs(x_ref, w_ref, i0, *, row_tile, W, Cin, Cout):
    """Four phase-separated 2x2 convolutions for one row tile.

    x_ref : (1, H+2, W+2, Cin) zero-padded NHWC input block (whole image, resident).
    w_ref : (16, Cin, Cout) phase-folded weights, flat index = a*8 + b*4 + r*2 + s.
    i0    : first original-resolution row of this tile (traced scalar).

    Returns 4 f32 arrays (phase order (a, b) = 00, 01, 10, 11), each of shape
    (row_tile * W, Cout); element (i*W + j, co) is the conv output at upsampled
    position (2*(i0+i)+a, 2*j+b).
    """
    accs = []
    for a in range(2):
        for b in range(2):
            acc = jnp.zeros((row_tile * W, Cout), jnp.float32)
            for r in range(2):
                for s in range(2):
                    xs = x_ref[0, pl.ds(i0 + r + a, row_tile),
                               (s + b):(s + b + W), :]            # (row_tile, W, Cin)
                    xf = xs.reshape(row_tile * W, Cin)
                    w = w_ref[a * 8 + b * 4 + r * 2 + s]          # (Cin, Cout)
                    acc = acc + jnp.dot(xf, w,
                                        preferred_element_type=jnp.float32)
            accs.append(acc)
    return accs


def conv_stats_kernel(x_ref, w_ref, stats_ref, *, row_tile, W, Cin, Cout):
    """Fused upsample+conv, emits per-tile partial BN statistics (sum, sum-of-sq)."""
    i0 = pl.program_id(1) * row_tile
    accs = _phase_partial_convs(x_ref, w_ref, i0,
                                row_tile=row_tile, W=W, Cin=Cin, Cout=Cout)
    s = jnp.zeros((1, Cout), jnp.float32)
    q = jnp.zeros((1, Cout), jnp.float32)
    for acc in accs:
        s = s + jnp.sum(acc, axis=0, keepdims=True)
        q = q + jnp.sum(acc * acc, axis=0, keepdims=True)
    stats_ref[0] = jnp.concatenate([s, q], axis=0)                # (2, Cout)


def conv_bn_relu_kernel(x_ref, w_ref, shift_ref, out_ref, *, row_tile, W, Cin, Cout):
    """Fused upsample+conv (BN scale folded into weights) + shift + ReLU."""
    i0 = pl.program_id(1) * row_tile
    accs = _phase_partial_convs(x_ref, w_ref, i0,
                                row_tile=row_tile, W=W, Cin=Cin, Cout=Cout)
    k = 0
    for a in range(2):
        for b in range(2):
            y = jnp.maximum(accs[k] + shift_ref[...], 0.0)        # (row_tile*W, Cout)
            out_ref[0, a * 2 + b, :, :] = y
            k += 1


@functools.partial(jax.jit, static_argnames=("pad_size", "eps", "row_tile"))
def unet_up_forward(x, skip, conv_w, gamma, beta, *, pad_size, eps=0.8, row_tile=None):
    """x: (N, Cin, H, W) NCHW f32; skip: (N, Cskip, Hs, Ws) NCHW f32.

    Returns (N, Cout + Cskip, 2H, 2W), matching the PyTorch Up-block forward.
    """
    N, Cin, H, W = x.shape
    Cout = conv_w.shape[0]
    H2, W2 = 2 * H, 2 * W

    if row_tile is None:
        row_tile = H
    assert H % row_tile == 0
    T = H // row_tile

    # ---- glue (original resolution, small): NHWC + 1px zero pad -------------
    xp = jnp.pad(jnp.transpose(x, (0, 2, 3, 1)),
                 ((0, 0), (1, 1), (1, 1), (0, 0)))                # (N, H+2, W+2, Cin)

    # ---- fold weights: nearest_up2x . conv3x3  ==  four 2x2 convs -----------
    # sel[a, r, kh]: which original kh taps feed row-tap r of output phase a.
    sel = jnp.array([[[1.0, 0.0, 0.0], [0.0, 1.0, 1.0]],
                     [[1.0, 1.0, 0.0], [0.0, 0.0, 1.0]]], dtype=jnp.float32)
    wf = jnp.einsum("arh,bsw,oihw->abrsio", sel, sel, conv_w.astype(jnp.float32))
    wf = wf.reshape(16, Cin, Cout)                                # flat (a,b,r,s)

    grid = (N, T)
    x_spec = pl.BlockSpec((1, H + 2, W + 2, Cin), lambda n, t: (n, 0, 0, 0))
    w_spec = pl.BlockSpec((16, Cin, Cout), lambda n, t: (0, 0, 0))
    cparams = pltpu.CompilerParams(
        dimension_semantics=("parallel", "parallel"),
        vmem_limit_bytes=48 * 1024 * 1024,
    )

    # ---- kernel A: fused conv + per-tile partial BN statistics --------------
    stats = pl.pallas_call(
        functools.partial(conv_stats_kernel,
                          row_tile=row_tile, W=W, Cin=Cin, Cout=Cout),
        out_shape=jax.ShapeDtypeStruct((N * T, 2, Cout), jnp.float32),
        grid_spec=pltpu.PrefetchScalarGridSpec(
            num_scalar_prefetch=0,
            grid=grid,
            in_specs=[x_spec, w_spec],
            out_specs=pl.BlockSpec((1, 2, Cout), lambda n, t: (n * T + t, 0, 0)),
        ),
        compiler_params=cparams,
    )(xp, wf)

    # ---- finalize train-mode BN (biased variance), fold scale into weights --
    m = float(N * H2 * W2)
    mean = jnp.sum(stats[:, 0, :], axis=0) / m
    var = jnp.maximum(jnp.sum(stats[:, 1, :], axis=0) / m - mean * mean, 0.0)
    scale = gamma.astype(jnp.float32) * jax.lax.rsqrt(var + eps)          # (Cout,)
    shift = (beta.astype(jnp.float32) - mean * scale).reshape(1, Cout)
    wf_scaled = wf * scale.reshape(1, 1, Cout)

    # ---- kernel B: recompute conv + fused BN affine + ReLU ------------------
    out4 = pl.pallas_call(
        functools.partial(conv_bn_relu_kernel,
                          row_tile=row_tile, W=W, Cin=Cin, Cout=Cout),
        out_shape=jax.ShapeDtypeStruct((N, 4, H * W, Cout), jnp.float32),
        grid_spec=pltpu.PrefetchScalarGridSpec(
            num_scalar_prefetch=0,
            grid=grid,
            in_specs=[x_spec, w_spec,
                      pl.BlockSpec((1, Cout), lambda n, t: (0, 0))],
            out_specs=pl.BlockSpec((1, 4, row_tile * W, Cout),
                                   lambda n, t: (n, 0, t, 0)),
        ),
        compiler_params=cparams,
    )(xp, wf_scaled, shift)

    # ---- un-interleave the 2x2 phases back into NCHW, concat padded skip ----
    y = out4.reshape(N, 2, 2, H, W, Cout)           # (n, a, b, i, j, co)
    y = jnp.transpose(y, (0, 5, 3, 1, 4, 2))        # (n, co, i, a, j, b)
    y = y.reshape(N, Cout, H2, W2)
    # F.pad(skip, (pad_size, 0, 0, pad_size)): W-left and H-bottom zero pad.
    skip_p = jnp.pad(skip, ((0, 0), (0, 0), (0, pad_size), (pad_size, 0)))
    return jnp.concatenate([y, skip_p], axis=1)


def unet_up_reference(x, skip, conv_w, gamma, beta, *, pad_size, eps=0.8):
    """Pure-JAX reference mirroring the PyTorch forward (train-mode BN)."""
    xu = jnp.repeat(jnp.repeat(x, 2, axis=2), 2, axis=3)
    conv = jax.lax.conv_general_dilated(
        xu, conv_w, window_strides=(1, 1), padding=((1, 1), (1, 1)),
        dimension_numbers=("NCHW", "OIHW", "NCHW"),
        precision=jax.lax.Precision.HIGHEST)
    mean = conv.mean(axis=(0, 2, 3), keepdims=True)
    var = conv.var(axis=(0, 2, 3), keepdims=True)
    y = (conv - mean) * jax.lax.rsqrt(var + eps)
    y = y * gamma.reshape(1, -1, 1, 1) + beta.reshape(1, -1, 1, 1)
    y = jnp.maximum(y, 0.0)
    skip_p = jnp.pad(skip, ((0, 0), (0, 0), (0, pad_size), (pad_size, 0)))
    return jnp.concatenate([y, skip_p], axis=1)


if __name__ == "__main__":
    key = jax.random.PRNGKey(0)
    k1, k2, k3, k4, k5 = jax.random.split(key, 5)

    # Small shapes consistent with the module.
    N, Cin, Cout = 2, 4, 8          # in_size=4, out_size=8
    H = W = 8                       # conv output (after 2x upsample) is 16x16
    pad_size = 2
    Cskip = 8
    Hs, Ws = 2 * H - pad_size, 2 * W - pad_size   # 14x14 so padded skip matches 16x16

    x = jax.random.normal(k1, (N, Cin, H, W), jnp.float32)
    skip = jax.random.normal(k2, (N, Cskip, Hs, Ws), jnp.float32)
    conv_w = 0.1 * jax.random.normal(k3, (Cout, Cin, 3, 3), jnp.float32)
    gamma = 1.0 + 0.1 * jax.random.normal(k4, (Cout,), jnp.float32)
    beta = 0.1 * jax.random.normal(k5, (Cout,), jnp.float32)

    out = unet_up_forward(x, skip, conv_w, gamma, beta, pad_size=pad_size, eps=0.8)
    out = jax.block_until_ready(out)

    assert out.shape == (N, Cout + Cskip, 2 * H, 2 * W), out.shape

    ref = unet_up_reference(x, skip, conv_w, gamma, beta, pad_size=pad_size, eps=0.8)
    assert jnp.all(jnp.isfinite(out))
    err = float(jnp.max(jnp.abs(out - ref)))
    assert jnp.allclose(out, ref, atol=1e-2, rtol=1e-2), err

    print("KERNEL_OK")
</pallas_src>

<mosaic_0001>
module attributes {stable_mosaic.version = 11 : i64} {
  func.func @conv_stats_kernel(%arg0: i32, %arg1: i32, %arg2: memref<1x10x10x4xf32, #tpu.memory_space<vmem>>, %arg3: memref<16x4x8xf32, #tpu.memory_space<vmem>>, %arg4: memref<1x2x8xf32, #tpu.memory_space<vmem>>) attributes {dimension_semantics = [#tpu.dimension_semantics<parallel>, #tpu.dimension_semantics<parallel>], iteration_bounds = array<i64: 2, 1>, scalar_prefetch = 0 : i64, scratch_operands = 0 : i64, tpu.core_type = #tpu.core_type<tc>, window_params = [{transform_indices = @transform_0, window_bounds = array<i64: 1, 10, 10, 4>}, {pipeline_mode = #tpu.pipeline_mode<synchronous>, transform_indices = @transform_1, window_bounds = array<i64: 16, 4, 8>}, {transform_indices = @transform_2, window_bounds = array<i64: 1, 2, 8>}]} {
    %c8_i32 = arith.constant 8 : i32
    %0 = arith.muli %arg1, %c8_i32 : i32
    %cst = arith.constant 0.000000e+00 : f32
    %1 = vector.broadcast %cst : f32 to vector<64x8xf32>
    %c0_i32 = arith.constant 0 : i32
    %2 = arith.addi %0, %c0_i32 : i32
    %c0_i32_0 = arith.constant 0 : i32
    %3 = arith.addi %2, %c0_i32_0 : i32
    %c0 = arith.constant 0 : index
    %4 = arith.index_cast %3 : i32 to index
    %c0_1 = arith.constant 0 : index
    %c0_2 = arith.constant 0 : index
    %5 = vector.load %arg2[%c0, %4, %c0_1, %c0_2] : memref<1x10x10x4xf32, #tpu.memory_space<vmem>>, vector<1x8x8x4xf32>
    %6 = vector.shape_cast %5 : vector<1x8x8x4xf32> to vector<8x8x4xf32>
    %7 = vector.shape_cast %6 : vector<8x8x4xf32> to vector<64x4xf32>
    %c0_3 = arith.constant 0 : index
    %c0_4 = arith.constant 0 : index
    %c0_5 = arith.constant 0 : index
    %8 = vector.load %arg3[%c0_3, %c0_4, %c0_5] : memref<16x4x8xf32, #tpu.memory_space<vmem>>, vector<1x4x8xf32>
    %9 = vector.shape_cast %8 : vector<1x4x8xf32> to vector<4x8xf32>
    %cst_6 = arith.constant dense<0.000000e+00> : vector<64x8xf32>
    %10 = tpu.matmul %7, %9, %cst_6 {dimension_numbers = #tpu.dot_dimension_numbers<[1], [0], [0], [1], [0, 0, 1, 1], [], []>} : vector<64x4xf32>, vector<4x8xf32>, vector<64x8xf32> -> vector<64x8xf32>
    %11 = arith.addf %1, %10 : vector<64x8xf32>
    %c0_i32_7 = arith.constant 0 : i32
    %12 = arith.addi %0, %c0_i32_7 : i32
    %c0_i32_8 = arith.constant 0 : i32
    %13 = arith.addi %12, %c0_i32_8 : i32
    %c0_9 = arith.constant 0 : index
    %14 = arith.index_cast %13 : i32 to index
    %c1 = arith.constant 1 : index
    %c0_10 = arith.constant 0 : index
    %15 = vector.load %arg2[%c0_9, %14, %c1, %c0_10] : memref<1x10x10x4xf32, #tpu.memory_space<vmem>>, vector<1x8x8x4xf32>
    %16 = vector.shape_cast %15 : vector<1x8x8x4xf32> to vector<8x8x4xf32>
    %17 = vector.shape_cast %16 : vector<8x8x4xf32> to vector<64x4xf32>
    %c1_11 = arith.constant 1 : index
    %c0_12 = arith.constant 0 : index
    %c0_13 = arith.constant 0 : index
    %18 = vector.load %arg3[%c1_11, %c0_12, %c0_13] : memref<16x4x8xf32, #tpu.memory_space<vmem>>, vector<1x4x8xf32>
    %19 = vector.shape_cast %18 : vector<1x4x8xf32> to vector<4x8xf32>
    %cst_14 = arith.constant dense<0.000000e+00> : vector<64x8xf32>
    %20 = tpu.matmul %17, %19, %cst_14 {dimension_numbers = #tpu.dot_dimension_numbers<[1], [0], [0], [1], [0, 0, 1, 1], [], []>} : vector<64x4xf32>, vector<4x8xf32>, vector<64x8xf32> -> vector<64x8xf32>
    %21 = arith.addf %11, %20 : vector<64x8xf32>
    %c1_i32 = arith.constant 1 : i32
    %22 = arith.addi %0, %c1_i32 : i32
    %c0_i32_15 = arith.constant 0 : i32
    %23 = arith.addi %22, %c0_i32_15 : i32
    %c0_16 = arith.constant 0 : index
    %24 = arith.index_cast %23 : i32 to index
    %c0_17 = arith.constant 0 : index
    %c0_18 = arith.constant 0 : index
    %25 = vector.load %arg2[%c0_16, %24, %c0_17, %c0_18] : memref<1x10x10x4xf32, #tpu.memory_space<vmem>>, vector<1x8x8x4xf32>
    %26 = vector.shape_cast %25 : vector<1x8x8x4xf32> to vector<8x8x4xf32>
    %27 = vector.shape_cast %26 : vector<8x8x4xf32> to vector<64x4xf32>
    %c2 = arith.constant 2 : index
    %c0_19 = arith.constant 0 : index
    %c0_20 = arith.constant 0 : index
    %28 = vector.load %arg3[%c2, %c0_19, %c0_20] : memref<16x4x8xf32, #tpu.memory_space<vmem>>, vector<1x4x8xf32>
    %29 = vector.shape_cast %28 : vector<1x4x8xf32> to vector<4x8xf32>
    %cst_21 = arith.constant dense<0.000000e+00> : vector<64x8xf32>
    %30 = tpu.matmul %27, %29, %cst_21 {dimension_numbers = #tpu.dot_dimension_numbers<[1], [0], [0], [1], [0, 0, 1, 1], [], []>} : vector<64x4xf32>, vector<4x8xf32>, vector<64x8xf32> -> vector<64x8xf32>
    %31 = arith.addf %21, %30 : vector<64x8xf32>
    %c1_i32_22 = arith.constant 1 : i32
    %32 = arith.addi %0, %c1_i32_22 : i32
    %c0_i32_23 = arith.constant 0 : i32
    %33 = arith.addi %32, %c0_i32_23 : i32
    %c0_24 = arith.constant 0 : index
    %34 = arith.index_cast %33 : i32 to index
    %c1_25 = arith.constant 1 : index
    %c0_26 = arith.constant 0 : index
    %35 = vector.load %arg2[%c0_24, %34, %c1_25, %c0_26] : memref<1x10x10x4xf32, #tpu.memory_space<vmem>>, vector<1x8x8x4xf32>
    %36 = vector.shape_cast %35 : vector<1x8x8x4xf32> to vector<8x8x4xf32>
    %37 = vector.shape_cast %36 : vector<8x8x4xf32> to vector<64x4xf32>
    %c3 = arith.constant 3 : index
    %c0_27 = arith.constant 0 : index
    %c0_28 = arith.constant 0 : index
    %38 = vector.load %arg3[%c3, %c0_27, %c0_28] : memref<16x4x8xf32, #tpu.memory_space<vmem>>, vector<1x4x8xf32>
    %39 = vector.shape_cast %38 : vector<1x4x8xf32> to vector<4x8xf32>
    %cst_29 = arith.constant dense<0.000000e+00> : vector<64x8xf32>
    %40 = tpu.matmul %37, %39, %cst_29 {dimension_numbers = #tpu.dot_dimension_numbers<[1], [0], [0], [1], [0, 0, 1, 1], [], []>} : vector<64x4xf32>, vector<4x8xf32>, vector<64x8xf32> -> vector<64x8xf32>
    %41 = arith.addf %31, %40 : vector<64x8xf32>
    %cst_30 = arith.constant 0.000000e+00 : f32
    %42 = vector.broadcast %cst_30 : f32 to vector<64x8xf32>
    %c0_i32_31 = arith.constant 0 : i32
    %43 = arith.addi %0, %c0_i32_31 : i32
    %c0_i32_32 = arith.constant 0 : i32
    %44 = arith.addi %43, %c0_i32_32 : i32
    %c0_33 = arith.constant 0 : index
    %45 = arith.index_cast %44 : i32 to index
    %c1_34 = arith.constant 1 : index
    %c0_35 = arith.constant 0 : index
    %46 = vector.load %arg2[%c0_33, %45, %c1_34, %c0_35] : memref<1x10x10x4xf32, #tpu.memory_space<vmem>>, vector<1x8x8x4xf32>
    %47 = vector.shape_cast %46 : vector<1x8x8x4xf32> to vector<8x8x4xf32>
    %48 = vector.shape_cast %47 : vector<8x8x4xf32> to vector<64x4xf32>
    %c4 = arith.constant 4 : index
    %c0_36 = arith.constant 0 : index
    %c0_37 = arith.constant 0 : index
    %49 = vector.load %arg3[%c4, %c0_36, %c0_37] : memref<16x4x8xf32, #tpu.memory_space<vmem>>, vector<1x4x8xf32>
    %50 = vector.shape_cast %49 : vector<1x4x8xf32> to vector<4x8xf32>
    %cst_38 = arith.constant dense<0.000000e+00> : vector<64x8xf32>
    %51 = tpu.matmul %48, %50, %cst_38 {dimension_numbers = #tpu.dot_dimension_numbers<[1], [0], [0], [1], [0, 0, 1, 1], [], []>} : vector<64x4xf32>, vector<4x8xf32>, vector<64x8xf32> -> vector<64x8xf32>
    %52 = arith.addf %42, %51 : vector<64x8xf32>
    %c0_i32_39 = arith.constant 0 : i32
    %53 = arith.addi %0, %c0_i32_39 : i32
    %c0_i32_40 = arith.constant 0 : i32
    %54 = arith.addi %53, %c0_i32_40 : i32
    %c0_41 = arith.constant 0 : index
    %55 = arith.index_cast %54 : i32 to index
    %c2_42 = arith.constant 2 : index
    %c0_43 = arith.constant 0 : index
    %56 = vector.load %arg2[%c0_41, %55, %c2_42, %c0_43] : memref<1x10x10x4xf32, #tpu.memory_space<vmem>>, vector<1x8x8x4xf32>
    %57 = vector.shape_cast %56 : vector<1x8x8x4xf32> to vector<8x8x4xf32>
    %58 = vector.shape_cast %57 : vector<8x8x4xf32> to vector<64x4xf32>
    %c5 = arith.constant 5 : index
    %c0_44 = arith.constant 0 : index
    %c0_45 = arith.constant 0 : index
    %59 = vector.load %arg3[%c5, %c0_44, %c0_45] : memref<16x4x8xf32, #tpu.memory_space<vmem>>, vector<1x4x8xf32>
    %60 = vector.shape_cast %59 : vector<1x4x8xf32> to vector<4x8xf32>
    %cst_46 = arith.constant dense<0.000000e+00> : vector<64x8xf32>
    %61 = tpu.matmul %58, %60, %cst_46 {dimension_numbers = #tpu.dot_dimension_numbers<[1], [0], [0], [1], [0, 0, 1, 1], [], []>} : vector<64x4xf32>, vector<4x8xf32>, vector<64x8xf32> -> vector<64x8xf32>
    %62 = arith.addf %52, %61 : vector<64x8xf32>
    %c1_i32_47 = arith.constant 1 : i32
    %63 = arith.addi %0, %c1_i32_47 : i32
    %c0_i32_48 = arith.constant 0 : i32
    %64 = arith.addi %63, %c0_i32_48 : i32
    %c0_49 = arith.constant 0 : index
    %65 = arith.index_cast %64 : i32 to index
    %c1_50 = arith.constant 1 : index
    %c0_51 = arith.constant 0 : index
    %66 = vector.load %arg2[%c0_49, %65, %c1_50, %c0_51] : memref<1x10x10x4xf32, #tpu.memory_space<vmem>>, vector<1x8x8x4xf32>
    %67 = vector.shape_cast %66 : vector<1x8x8x4xf32> to vector<8x8x4xf32>
    %68 = vector.shape_cast %67 : vector<8x8x4xf32> to vector<64x4xf32>
    %c6 = arith.constant 6 : index
    %c0_52 = arith.constant 0 : index
    %c0_53 = arith.constant 0 : index
    %69 = vector.load %arg3[%c6, %c0_52, %c0_53] : memref<16x4x8xf32, #tpu.memory_space<vmem>>, vector<1x4x8xf32>
    %70 = vector.shape_cast %69 : vector<1x4x8xf32> to vector<4x8xf32>
    %cst_54 = arith.constant dense<0.000000e+00> : vector<64x8xf32>
    %71 = tpu.matmul %68, %70, %cst_54 {dimension_numbers = #tpu.dot_dimension_numbers<[1], [0], [0], [1], [0, 0, 1, 1], [], []>} : vector<64x4xf32>, vector<4x8xf32>, vector<64x8xf32> -> vector<64x8xf32>
    %72 = arith.addf %62, %71 : vector<64x8xf32>
    %c1_i32_55 = arith.constant 1 : i32
    %73 = arith.addi %0, %c1_i32_55 : i32
    %c0_i32_56 = arith.constant 0 : i32
    %74 = arith.addi %73, %c0_i32_56 : i32
    %c0_57 = arith.constant 0 : index
    %75 = arith.index_cast %74 : i32 to index
    %c2_58 = arith.constant 2 : index
    %c0_59 = arith.constant 0 : index
    %76 = vector.load %arg2[%c0_57, %75, %c2_58, %c0_59] : memref<1x10x10x4xf32, #tpu.memory_space<vmem>>, vector<1x8x8x4xf32>
    %77 = vector.shape_cast %76 : vector<1x8x8x4xf32> to vector<8x8x4xf32>
    %78 = vector.shape_cast %77 : vector<8x8x4xf32> to vector<64x4xf32>
    %c7 = arith.constant 7 : index
    %c0_60 = arith.constant 0 : index
    %c0_61 = arith.constant 0 : index
    %79 = vector.load %arg3[%c7, %c0_60, %c0_61] : memref<16x4x8xf32, #tpu.memory_space<vmem>>, vector<1x4x8xf32>
    %80 = vector.shape_cast %79 : vector<1x4x8xf32> to vector<4x8xf32>
    %cst_62 = arith.constant dense<0.000000e+00> : vector<64x8xf32>
    %81 = tpu.matmul %78, %80, %cst_62 {dimension_numbers = #tpu.dot_dimension_numbers<[1], [0], [0], [1], [0, 0, 1, 1], [], []>} : vector<64x4xf32>, vector<4x8xf32>, vector<64x8xf32> -> vector<64x8xf32>
    %82 = arith.addf %72, %81 : vector<64x8xf32>
    %cst_63 = arith.constant 0.000000e+00 : f32
    %83 = vector.broadcast %cst_63 : f32 to vector<64x8xf32>
    %c0_i32_64 = arith.constant 0 : i32
    %84 = arith.addi %0, %c0_i32_64 : i32
    %c1_i32_65 = arith.constant 1 : i32
    %85 = arith.addi %84, %c1_i32_65 : i32
    %c0_66 = arith.constant 0 : index
    %86 = arith.index_cast %85 : i32 to index
    %c0_67 = arith.constant 0 : index
    %c0_68 = arith.constant 0 : index
    %87 = vector.load %arg2[%c0_66, %86, %c0_67, %c0_68] : memref<1x10x10x4xf32, #tpu.memory_space<vmem>>, vector<1x8x8x4xf32>
    %88 = vector.shape_cast %87 : vector<1x8x8x4xf32> to vector<8x8x4xf32>
    %89 = vector.shape_cast %88 : vector<8x8x4xf32> to vector<64x4xf32>
    %c8 = arith.constant 8 : index
    %c0_69 = arith.constant 0 : index
    %c0_70 = arith.constant 0 : index
    %90 = vector.load %arg3[%c8, %c0_69, %c0_70] : memref<16x4x8xf32, #tpu.memory_space<vmem>>, vector<1x4x8xf32>
    %91 = vector.shape_cast %90 : vector<1x4x8xf32> to vector<4x8xf32>
    %cst_71 = arith.constant dense<0.000000e+00> : vector<64x8xf32>
    %92 = tpu.matmul %89, %91, %cst_71 {dimension_numbers = #tpu.dot_dimension_numbers<[1], [0], [0], [1], [0, 0, 1, 1], [], []>} : vector<64x4xf32>, vector<4x8xf32>, vector<64x8xf32> -> vector<64x8xf32>
    %93 = arith.addf %83, %92 : vector<64x8xf32>
    %c0_i32_72 = arith.constant 0 : i32
    %94 = arith.addi %0, %c0_i32_72 : i32
    %c1_i32_73 = arith.constant 1 : i32
    %95 = arith.addi %94, %c1_i32_73 : i32
    %c0_74 = arith.constant 0 : index
    %96 = arith.index_cast %95 : i32 to index
    %c1_75 = arith.constant 1 : index
    %c0_76 = arith.constant 0 : index
    %97 = vector.load %arg2[%c0_74, %96, %c1_75, %c0_76] : memref<1x10x10x4xf32, #tpu.memory_space<vmem>>, vector<1x8x8x4xf32>
    %98 = vector.shape_cast %97 : vector<1x8x8x4xf32> to vector<8x8x4xf32>
    %99 = vector.shape_cast %98 : vector<8x8x4xf32> to vector<64x4xf32>
    %c9 = arith.constant 9 : index
    %c0_77 = arith.constant 0 : index
    %c0_78 = arith.constant 0 : index
    %100 = vector.load %arg3[%c9, %c0_77, %c0_78] : memref<16x4x8xf32, #tpu.memory_space<vmem>>, vector<1x4x8xf32>
    %101 = vector.shape_cast %100 : vector<1x4x8xf32> to vector<4x8xf32>
    %cst_79 = arith.constant dense<0.000000e+00> : vector<64x8xf32>
    %102 = tpu.matmul %99, %101, %cst_79 {dimension_numbers = #tpu.dot_dimension_numbers<[1], [0], [0], [1], [0, 0, 1, 1], [], []>} : vector<64x4xf32>, vector<4x8xf32>, vector<64x8xf32> -> vector<64x8xf32>
    %103 = arith.addf %93, %102 : vector<64x8xf32>
    %c1_i32_80 = arith.constant 1 : i32
    %104 = arith.addi %0, %c1_i32_80 : i32
    %c1_i32_81 = arith.constant 1 : i32
    %105 = arith.addi %104, %c1_i32_81 : i32
    %c0_82 = arith.constant 0 : index
    %106 = arith.index_cast %105 : i32 to index
    %c0_83 = arith.constant 0 : index
    %c0_84 = arith.constant 0 : index
    %107 = vector.load %arg2[%c0_82, %106, %c0_83, %c0_84] : memref<1x10x10x4xf32, #tpu.memory_space<vmem>>, vector<1x8x8x4xf32>
    %108 = vector.shape_cast %107 : vector<1x8x8x4xf32> to vector<8x8x4xf32>
    %109 = vector.shape_cast %108 : vector<8x8x4xf32> to vector<64x4xf32>
    %c10 = arith.constant 10 : index
    %c0_85 = arith.constant 0 : index
    %c0_86 = arith.constant 0 : index
    %110 = vector.load %arg3[%c10, %c0_85, %c0_86] : memref<16x4x8xf32, #tpu.memory_space<vmem>>, vector<1x4x8xf32>
    %111 = vector.shape_cast %110 : vector<1x4x8xf32> to vector<4x8xf32>
    %cst_87 = arith.constant dense<0.000000e+00> : vector<64x8xf32>
    %112 = tpu.matmul %109, %111, %cst_87 {dimension_numbers = #tpu.dot_dimension_numbers<[1], [0], [0], [1], [0, 0, 1, 1], [], []>} : vector<64x4xf32>, vector<4x8xf32>, vector<64x8xf32> -> vector<64x8xf32>
    %113 = arith.addf %103, %112 : vector<64x8xf32>
    %c1_i32_88 = arith.constant 1 : i32
    %114 = arith.addi %0, %c1_i32_88 : i32
    %c1_i32_89 = arith.constant 1 : i32
    %115 = arith.addi %114, %c1_i32_89 : i32
    %c0_90 = arith.constant 0 : index
    %116 = arith.index_cast %115 : i32 to index
    %c1_91 = arith.constant 1 : index
    %c0_92 = arith.constant 0 : index
    %117 = vector.load %arg2[%c0_90, %116, %c1_91, %c0_92] : memref<1x10x10x4xf32, #tpu.memory_space<vmem>>, vector<1x8x8x4xf32>
    %118 = vector.shape_cast %117 : vector<1x8x8x4xf32> to vector<8x8x4xf32>
    %119 = vector.shape_cast %118 : vector<8x8x4xf32> to vector<64x4xf32>
    %c11 = arith.constant 11 : index
    %c0_93 = arith.constant 0 : index
    %c0_94 = arith.constant 0 : index
    %120 = vector.load %arg3[%c11, %c0_93, %c0_94] : memref<16x4x8xf32, #tpu.memory_space<vmem>>, vector<1x4x8xf32>
    %121 = vector.shape_cast %120 : vector<1x4x8xf32> to vector<4x8xf32>
    %cst_95 = arith.constant dense<0.000000e+00> : vector<64x8xf32>
    %122 = tpu.matmul %119, %121, %cst_95 {dimension_numbers = #tpu.dot_dimension_numbers<[1], [0], [0], [1], [0, 0, 1, 1], [], []>} : vector<64x4xf32>, vector<4x8xf32>, vector<64x8xf32> -> vector<64x8xf32>
    %123 = arith.addf %113, %122 : vector<64x8xf32>
    %cst_96 = arith.constant 0.000000e+00 : f32
    %124 = vector.broadcast %cst_96 : f32 to vector<64x8xf32>
    %c0_i32_97 = arith.constant 0 : i32
    %125 = arith.addi %0, %c0_i32_97 : i32
    %c1_i32_98 = arith.constant 1 : i32
    %126 = arith.addi %125, %c1_i32_98 : i32
    %c0_99 = arith.constant 0 : index
    %127 = arith.index_cast %126 : i32 to index
    %c1_100 = arith.constant 1 : index
    %c0_101 = arith.constant 0 : index
    %128 = vector.load %arg2[%c0_99, %127, %c1_100, %c0_101] : memref<1x10x10x4xf32, #tpu.memory_space<vmem>>, vector<1x8x8x4xf32>
    %129 = vector.shape_cast %128 : vector<1x8x8x4xf32> to vector<8x8x4xf32>
    %130 = vector.shape_cast %129 : vector<8x8x4xf32> to vector<64x4xf32>
    %c12 = arith.constant 12 : index
    %c0_102 = arith.constant 0 : index
    %c0_103 = arith.constant 0 : index
    %131 = vector.load %arg3[%c12, %c0_102, %c0_103] : memref<16x4x8xf32, #tpu.memory_space<vmem>>, vector<1x4x8xf32>
    %132 = vector.shape_cast %131 : vector<1x4x8xf32> to vector<4x8xf32>
    %cst_104 = arith.constant dense<0.000000e+00> : vector<64x8xf32>
    %133 = tpu.matmul %130, %132, %cst_104 {dimension_numbers = #tpu.dot_dimension_numbers<[1], [0], [0], [1], [0, 0, 1, 1], [], []>} : vector<64x4xf32>, vector<4x8xf32>, vector<64x8xf32> -> vector<64x8xf32>
    %134 = arith.addf %124, %133 : vector<64x8xf32>
    %c0_i32_105 = arith.constant 0 : i32
    %135 = arith.addi %0, %c0_i32_105 : i32
    %c1_i32_106 = arith.constant 1 : i32
    %136 = arith.addi %135, %c1_i32_106 : i32
    %c0_107 = arith.constant 0 : index
    %137 = arith.index_cast %136 : i32 to index
    %c2_108 = arith.constant 2 : index
    %c0_109 = arith.constant 0 : index
    %138 = vector.load %arg2[%c0_107, %137, %c2_108, %c0_109] : memref<1x10x10x4xf32, #tpu.memory_space<vmem>>, vector<1x8x8x4xf32>
    %139 = vector.shape_cast %138 : vector<1x8x8x4xf32> to vector<8x8x4xf32>
    %140 = vector.shape_cast %139 : vector<8x8x4xf32> to vector<64x4xf32>
    %c13 = arith.constant 13 : index
    %c0_110 = arith.constant 0 : index
    %c0_111 = arith.constant 0 : index
    %141 = vector.load %arg3[%c13, %c0_110, %c0_111] : memref<16x4x8xf32, #tpu.memory_space<vmem>>, vector<1x4x8xf32>
    %142 = vector.shape_cast %141 : vector<1x4x8xf32> to vector<4x8xf32>
    %cst_112 = arith.constant dense<0.000000e+00> : vector<64x8xf32>
    %143 = tpu.matmul %140, %142, %cst_112 {dimension_numbers = #tpu.dot_dimension_numbers<[1], [0], [0], [1], [0, 0, 1, 1], [], []>} : vector<64x4xf32>, vector<4x8xf32>, vector<64x8xf32> -> vector<64x8xf32>
    %144 = arith.addf %134, %143 : vector<64x8xf32>
    %c1_i32_113 = arith.constant 1 : i32
    %145 = arith.addi %0, %c1_i32_113 : i32
    %c1_i32_114 = arith.constant 1 : i32
    %146 = arith.addi %145, %c1_i32_114 : i32
    %c0_115 = arith.constant 0 : index
    %147 = arith.index_cast %146 : i32 to index
    %c1_116 = arith.constant 1 : index
    %c0_117 = arith.constant 0 : index
    %148 = vector.load %arg2[%c0_115, %147, %c1_116, %c0_117] : memref<1x10x10x4xf32, #tpu.memory_space<vmem>>, vector<1x8x8x4xf32>
    %149 = vector.shape_cast %148 : vector<1x8x8x4xf32> to vector<8x8x4xf32>
    %150 = vector.shape_cast %149 : vector<8x8x4xf32> to vector<64x4xf32>
    %c14 = arith.constant 14 : index
    %c0_118 = arith.constant 0 : index
    %c0_119 = arith.constant 0 : index
    %151 = vector.load %arg3[%c14, %c0_118, %c0_119] : memref<16x4x8xf32, #tpu.memory_space<vmem>>, vector<1x4x8xf32>
    %152 = vector.shape_cast %151 : vector<1x4x8xf32> to vector<4x8xf32>
    %cst_120 = arith.constant dense<0.000000e+00> : vector<64x8xf32>
    %153 = tpu.matmul %150, %152, %cst_120 {dimension_numbers = #tpu.dot_dimension_numbers<[1], [0], [0], [1], [0, 0, 1, 1], [], []>} : vector<64x4xf32>, vector<4x8xf32>, vector<64x8xf32> -> vector<64x8xf32>
    %154 = arith.addf %144, %153 : vector<64x8xf32>
    %c1_i32_121 = arith.constant 1 : i32
    %155 = arith.addi %0, %c1_i32_121 : i32
    %c1_i32_122 = arith.constant 1 : i32
    %156 = arith.addi %155, %c1_i32_122 : i32
    %c0_123 = arith.constant 0 : index
    %157 = arith.index_cast %156 : i32 to index
    %c2_124 = arith.constant 2 : index
    %c0_125 = arith.constant 0 : index
    %158 = vector.load %arg2[%c0_123, %157, %c2_124, %c0_125] : memref<1x10x10x4xf32, #tpu.memory_space<vmem>>, vector<1x8x8x4xf32>
    %159 = vector.shape_cast %158 : vector<1x8x8x4xf32> to vector<8x8x4xf32>
    %160 = vector.shape_cast %159 : vector<8x8x4xf32> to vector<64x4xf32>
    %c15 = arith.constant 15 : index
    %c0_126 = arith.constant 0 : index
    %c0_127 = arith.constant 0 : index
    %161 = vector.load %arg3[%c15, %c0_126, %c0_127] : memref<16x4x8xf32, #tpu.memory_space<vmem>>, vector<1x4x8xf32>
    %162 = vector.shape_cast %161 : vector<1x4x8xf32> to vector<4x8xf32>
    %cst_128 = arith.constant dense<0.000000e+00> : vector<64x8xf32>
    %163 = tpu.matmul %160, %162, %cst_128 {dimension_numbers = #tpu.dot_dimension_numbers<[1], [0], [0], [1], [0, 0, 1, 1], [], []>} : vector<64x4xf32>, vector<4x8xf32>, vector<64x8xf32> -> vector<64x8xf32>
    %164 = arith.addf %154, %163 : vector<64x8xf32>
    %cst_129 = arith.constant 0.000000e+00 : f32
    %165 = vector.broadcast %cst_129 : f32 to vector<1x8xf32>
    %cst_130 = arith.constant 0.000000e+00 : f32
    %166 = vector.broadcast %cst_130 : f32 to vector<1x8xf32>
    %cst_131 = arith.constant dense<0.000000e+00> : vector<8xf32>
    %167 = vector.multi_reduction <add>, %41, %cst_131 [0] : vector<64x8xf32> to vector<8xf32>
    %168 = vector.shape_cast %167 : vector<8xf32> to vector<1x8xf32>
    %169 = arith.addf %165, %168 : vector<1x8xf32>
    %170 = arith.mulf %41, %41 : vector<64x8xf32>
    %cst_132 = arith.constant dense<0.000000e+00> : vector<8xf32>
    %171 = vector.multi_reduction <add>, %170, %cst_132 [0] : vector<64x8xf32> to vector<8xf32>
    %172 = vector.shape_cast %171 : vector<8xf32> to vector<1x8xf32>
    %173 = arith.addf %166, %172 : vector<1x8xf32>
    %cst_133 = arith.constant dense<0.000000e+00> : vector<8xf32>
    %174 = vector.multi_reduction <add>, %82, %cst_133 [0] : vector<64x8xf32> to vector<8xf32>
    %175 = vector.shape_cast %174 : vector<8xf32> to vector<1x8xf32>
    %176 = arith.addf %169, %175 : vector<1x8xf32>
    %177 = arith.mulf %82, %82 : vector<64x8xf32>
    %cst_134 = arith.constant dense<0.000000e+00> : vector<8xf32>
    %178 = vector.multi_reduction <add>, %177, %cst_134 [0] : vector<64x8xf32> to vector<8xf32>
    %179 = vector.shape_cast %178 : vector<8xf32> to vector<1x8xf32>
    %180 = arith.addf %173, %179 : vector<1x8xf32>
    %cst_135 = arith.constant dense<0.000000e+00> : vector<8xf32>
    %181 = vector.multi_reduction <add>, %123, %cst_135 [0] : vector<64x8xf32> to vector<8xf32>
    %182 = vector.shape_cast %181 : vector<8xf32> to vector<1x8xf32>
    %183 = arith.addf %176, %182 : vector<1x8xf32>
    %184 = arith.mulf %123, %123 : vector<64x8xf32>
    %cst_136 = arith.constant dense<0.000000e+00> : vector<8xf32>
    %185 = vector.multi_reduction <add>, %184, %cst_136 [0] : vector<64x8xf32> to vector<8xf32>
    %186 = vector.shape_cast %185 : vector<8xf32> to vector<1x8xf32>
    %187 = arith.addf %180, %186 : vector<1x8xf32>
    %cst_137 = arith.constant dense<0.000000e+00> : vector<8xf32>
    %188 = vector.multi_reduction <add>, %164, %cst_137 [0] : vector<64x8xf32> to vector<8xf32>
    %189 = vector.shape_cast %188 : vector<8xf32> to vector<1x8xf32>
    %190 = arith.addf %183, %189 : vector<1x8xf32>
    %191 = arith.mulf %164, %164 : vector<64x8xf32>
    %cst_138 = arith.constant dense<0.000000e+00> : vector<8xf32>
    %192 = vector.multi_reduction <add>, %191, %cst_138 [0] : vector<64x8xf32> to vector<8xf32>
    %193 = vector.shape_cast %192 : vector<8xf32> to vector<1x8xf32>
    %194 = arith.addf %187, %193 : vector<1x8xf32>
    %195 = tpu.concatenate %190, %194 in 0 : vector<1x8xf32>, vector<1x8xf32> -> vector<2x8xf32>
    %c0_139 = arith.constant 0 : index
    %c0_140 = arith.constant 0 : index
    %c0_141 = arith.constant 0 : index
    %196 = vector.load %arg4[%c0_139, %c0_140, %c0_141] : memref<1x2x8xf32, #tpu.memory_space<vmem>>, vector<1x2x8xf32>
    %197 = vector.shape_cast %196 : vector<1x2x8xf32> to vector<2x8xf32>
    %198 = vector.shape_cast %195 : vector<2x8xf32> to vector<1x2x8xf32>
    tpu.vector_store %arg4[%c0_139, %c0_140, %c0_141], %198 {strides = array<i32>} : memref<1x2x8xf32, #tpu.memory_space<vmem>>, vector<1x2x8xf32>,
    return
  }
  func.func @transform_0(%arg0: i32, %arg1: i32) -> (i32, i32, i32, i32) {
    %c0_i32 = arith.constant 0 : i32
    %c0_i32_0 = arith.constant 0 : i32
    %c0_i32_1 = arith.constant 0 : i32
    %c0_i32_2 = arith.constant 0 : i32
    return %arg0, %c0_i32, %c0_i32_0, %c0_i32_1 : i32, i32, i32, i32
  }
  func.func @transform_1(%arg0: i32, %arg1: i32) -> (i32, i32, i32) {
    %c0_i32 = arith.constant 0 : i32
    %c0_i32_0 = arith.constant 0 : i32
    %c0_i32_1 = arith.constant 0 : i32
    %c0_i32_2 = arith.constant 0 : i32
    return %c0_i32, %c0_i32_0, %c0_i32_1 : i32, i32, i32
  }
  func.func @transform_2(%arg0: i32, %arg1: i32) -> (i32, i32, i32) {
    %c1_i32 = arith.constant 1 : i32
    %0 = arith.muli %arg0, %c1_i32 : i32
    %1 = arith.addi %0, %arg1 : i32
    %c0_i32 = arith.constant 0 : i32
    %c0_i32_0 = arith.constant 0 : i32
    %c0_i32_1 = arith.constant 0 : i32
    return %1, %c0_i32, %c0_i32_0 : i32, i32, i32
  }
}

module attributes {stable_mosaic.version = 11 : i64} {
  func.func @conv_bn_relu_kernel(%arg0: i32, %arg1: i32, %arg2: memref<1x10x10x4xf32, #tpu.memory_space<vmem>>, %arg3: memref<16x4x8xf32, #tpu.memory_space<vmem>>, %arg4: memref<1x8xf32, #tpu.memory_space<vmem>>, %arg5: memref<1x4x64x8xf32, #tpu.memory_space<vmem>>) attributes {dimension_semantics = [#tpu.dimension_semantics<parallel>, #tpu.dimension_semantics<parallel>], iteration_bounds = array<i64: 2, 1>, scalar_prefetch = 0 : i64, scratch_operands = 0 : i64, tpu.core_type = #tpu.core_type<tc>, window_params = [{transform_indices = @transform_0, window_bounds = array<i64: 1, 10, 10, 4>}, {pipeline_mode = #tpu.pipeline_mode<synchronous>, transform_indices = @transform_1, window_bounds = array<i64: 16, 4, 8>}, {pipeline_mode = #tpu.pipeline_mode<synchronous>, transform_indices = @transform_2, window_bounds = array<i64: 1, 8>}, {transform_indices = @transform_3, window_bounds = array<i64: 1, 4, 64, 8>}]} {
    %c8_i32 = arith.constant 8 : i32
    %0 = arith.muli %arg1, %c8_i32 : i32
    %cst = arith.constant 0.000000e+00 : f32
    %1 = vector.broadcast %cst : f32 to vector<64x8xf32>
    %c0_i32 = arith.constant 0 : i32
    %2 = arith.addi %0, %c0_i32 : i32
    %c0_i32_0 = arith.constant 0 : i32
    %3 = arith.addi %2, %c0_i32_0 : i32
    %c0 = arith.constant 0 : index
    %4 = arith.index_cast %3 : i32 to index
    %c0_1 = arith.constant 0 : index
    %c0_2 = arith.constant 0 : index
    %5 = vector.load %arg2[%c0, %4, %c0_1, %c0_2] : memref<1x10x10x4xf32, #tpu.memory_space<vmem>>, vector<1x8x8x4xf32>
    %6 = vector.shape_cast %5 : vector<1x8x8x4xf32> to vector<8x8x4xf32>
    %7 = vector.shape_cast %6 : vector<8x8x4xf32> to vector<64x4xf32>
    %c0_3 = arith.constant 0 : index
    %c0_4 = arith.constant 0 : index
    %c0_5 = arith.constant 0 : index
    %8 = vector.load %arg3[%c0_3, %c0_4, %c0_5] : memref<16x4x8xf32, #tpu.memory_space<vmem>>, vector<1x4x8xf32>
    %9 = vector.shape_cast %8 : vector<1x4x8xf32> to vector<4x8xf32>
    %cst_6 = arith.constant dense<0.000000e+00> : vector<64x8xf32>
    %10 = tpu.matmul %7, %9, %cst_6 {dimension_numbers = #tpu.dot_dimension_numbers<[1], [0], [0], [1], [0, 0, 1, 1], [], []>} : vector<64x4xf32>, vector<4x8xf32>, vector<64x8xf32> -> vector<64x8xf32>
    %11 = arith.addf %1, %10 : vector<64x8xf32>
    %c0_i32_7 = arith.constant 0 : i32
    %12 = arith.addi %0, %c0_i32_7 : i32
    %c0_i32_8 = arith.constant 0 : i32
    %13 = arith.addi %12, %c0_i32_8 : i32
    %c0_9 = arith.constant 0 : index
    %14 = arith.index_cast %13 : i32 to index
    %c1 = arith.constant 1 : index
    %c0_10 = arith.constant 0 : index
    %15 = vector.load %arg2[%c0_9, %14, %c1, %c0_10] : memref<1x10x10x4xf32, #tpu.memory_space<vmem>>, vector<1x8x8x4xf32>
    %16 = vector.shape_cast %15 : vector<1x8x8x4xf32> to vector<8x8x4xf32>
    %17 = vector.shape_cast %16 : vector<8x8x4xf32> to vector<64x4xf32>
    %c1_11 = arith.constant 1 : index
    %c0_12 = arith.constant 0 : index
    %c0_13 = arith.constant 0 : index
    %18 = vector.load %arg3[%c1_11, %c0_12, %c0_13] : memref<16x4x8xf32, #tpu.memory_space<vmem>>, vector<1x4x8xf32>
    %19 = vector.shape_cast %18 : vector<1x4x8xf32> to vector<4x8xf32>
    %cst_14 = arith.constant dense<0.000000e+00> : vector<64x8xf32>
    %20 = tpu.matmul %17, %19, %cst_14 {dimension_numbers = #tpu.dot_dimension_numbers<[1], [0], [0], [1], [0, 0, 1, 1], [], []>} : vector<64x4xf32>, vector<4x8xf32>, vector<64x8xf32> -> vector<64x8xf32>
    %21 = arith.addf %11, %20 : vector<64x8xf32>
    %c1_i32 = arith.constant 1 : i32
    %22 = arith.addi %0, %c1_i32 : i32
    %c0_i32_15 = arith.constant 0 : i32
    %23 = arith.addi %22, %c0_i32_15 : i32
    %c0_16 = arith.constant 0 : index
    %24 = arith.index_cast %23 : i32 to index
    %c0_17 = arith.constant 0 : index
    %c0_18 = arith.constant 0 : index
    %25 = vector.load %arg2[%c0_16, %24, %c0_17, %c0_18] : memref<1x10x10x4xf32, #tpu.memory_space<vmem>>, vector<1x8x8x4xf32>
    %26 = vector.shape_cast %25 : vector<1x8x8x4xf32> to vector<8x8x4xf32>
    %27 = vector.shape_cast %26 : vector<8x8x4xf32> to vector<64x4xf32>
    %c2 = arith.constant 2 : index
    %c0_19 = arith.constant 0 : index
    %c0_20 = arith.constant 0 : index
    %28 = vector.load %arg3[%c2, %c0_19, %c0_20] : memref<16x4x8xf32, #tpu.memory_space<vmem>>, vector<1x4x8xf32>
    %29 = vector.shape_cast %28 : vector<1x4x8xf32> to vector<4x8xf32>
    %cst_21 = arith.constant dense<0.000000e+00> : vector<64x8xf32>
    %30 = tpu.matmul %27, %29, %cst_21 {dimension_numbers = #tpu.dot_dimension_numbers<[1], [0], [0], [1], [0, 0, 1, 1], [], []>} : vector<64x4xf32>, vector<4x8xf32>, vector<64x8xf32> -> vector<64x8xf32>
    %31 = arith.addf %21, %30 : vector<64x8xf32>
    %c1_i32_22 = arith.constant 1 : i32
    %32 = arith.addi %0, %c1_i32_22 : i32
    %c0_i32_23 = arith.constant 0 : i32
    %33 = arith.addi %32, %c0_i32_23 : i32
    %c0_24 = arith.constant 0 : index
    %34 = arith.index_cast %33 : i32 to index
    %c1_25 = arith.constant 1 : index
    %c0_26 = arith.constant 0 : index
    %35 = vector.load %arg2[%c0_24, %34, %c1_25, %c0_26] : memref<1x10x10x4xf32, #tpu.memory_space<vmem>>, vector<1x8x8x4xf32>
    %36 = vector.shape_cast %35 : vector<1x8x8x4xf32> to vector<8x8x4xf32>
    %37 = vector.shape_cast %36 : vector<8x8x4xf32> to vector<64x4xf32>
    %c3 = arith.constant 3 : index
    %c0_27 = arith.constant 0 : index
    %c0_28 = arith.constant 0 : index
    %38 = vector.load %arg3[%c3, %c0_27, %c0_28] : memref<16x4x8xf32, #tpu.memory_space<vmem>>, vector<1x4x8xf32>
    %39 = vector.shape_cast %38 : vector<1x4x8xf32> to vector<4x8xf32>
    %cst_29 = arith.constant dense<0.000000e+00> : vector<64x8xf32>
    %40 = tpu.matmul %37, %39, %cst_29 {dimension_numbers = #tpu.dot_dimension_numbers<[1], [0], [0], [1], [0, 0, 1, 1], [], []>} : vector<64x4xf32>, vector<4x8xf32>, vector<64x8xf32> -> vector<64x8xf32>
    %41 = arith.addf %31, %40 : vector<64x8xf32>
    %cst_30 = arith.constant 0.000000e+00 : f32
    %42 = vector.broadcast %cst_30 : f32 to vector<64x8xf32>
    %c0_i32_31 = arith.constant 0 : i32
    %43 = arith.addi %0, %c0_i32_31 : i32
    %c0_i32_32 = arith.constant 0 : i32
    %44 = arith.addi %43, %c0_i32_32 : i32
    %c0_33 = arith.constant 0 : index
    %45 = arith.index_cast %44 : i32 to index
    %c1_34 = arith.constant 1 : index
    %c0_35 = arith.constant 0 : index
    %46 = vector.load %arg2[%c0_33, %45, %c1_34, %c0_35] : memref<1x10x10x4xf32, #tpu.memory_space<vmem>>, vector<1x8x8x4xf32>
    %47 = vector.shape_cast %46 : vector<1x8x8x4xf32> to vector<8x8x4xf32>
    %48 = vector.shape_cast %47 : vector<8x8x4xf32> to vector<64x4xf32>
    %c4 = arith.constant 4 : index
    %c0_36 = arith.constant 0 : index
    %c0_37 = arith.constant 0 : index
    %49 = vector.load %arg3[%c4, %c0_36, %c0_37] : memref<16x4x8xf32, #tpu.memory_space<vmem>>, vector<1x4x8xf32>
    %50 = vector.shape_cast %49 : vector<1x4x8xf32> to vector<4x8xf32>
    %cst_38 = arith.constant dense<0.000000e+00> : vector<64x8xf32>
    %51 = tpu.matmul %48, %50, %cst_38 {dimension_numbers = #tpu.dot_dimension_numbers<[1], [0], [0], [1], [0, 0, 1, 1], [], []>} : vector<64x4xf32>, vector<4x8xf32>, vector<64x8xf32> -> vector<64x8xf32>
    %52 = arith.addf %42, %51 : vector<64x8xf32>
    %c0_i32_39 = arith.constant 0 : i32
    %53 = arith.addi %0, %c0_i32_39 : i32
    %c0_i32_40 = arith.constant 0 : i32
    %54 = arith.addi %53, %c0_i32_40 : i32
    %c0_41 = arith.constant 0 : index
    %55 = arith.index_cast %54 : i32 to index
    %c2_42 = arith.constant 2 : index
    %c0_43 = arith.constant 0 : index
    %56 = vector.load %arg2[%c0_41, %55, %c2_42, %c0_43] : memref<1x10x10x4xf32, #tpu.memory_space<vmem>>, vector<1x8x8x4xf32>
    %57 = vector.shape_cast %56 : vector<1x8x8x4xf32> to vector<8x8x4xf32>
    %58 = vector.shape_cast %57 : vector<8x8x4xf32> to vector<64x4xf32>
    %c5 = arith.constant 5 : index
    %c0_44 = arith.constant 0 : index
    %c0_45 = arith.constant 0 : index
    %59 = vector.load %arg3[%c5, %c0_44, %c0_45] : memref<16x4x8xf32, #tpu.memory_space<vmem>>, vector<1x4x8xf32>
    %60 = vector.shape_cast %59 : vector<1x4x8xf32> to vector<4x8xf32>
    %cst_46 = arith.constant dense<0.000000e+00> : vector<64x8xf32>
    %61 = tpu.matmul %58, %60, %cst_46 {dimension_numbers = #tpu.dot_dimension_numbers<[1], [0], [0], [1], [0, 0, 1, 1], [], []>} : vector<64x4xf32>, vector<4x8xf32>, vector<64x8xf32> -> vector<64x8xf32>
    %62 = arith.addf %52, %61 : vector<64x8xf32>
    %c1_i32_47 = arith.constant 1 : i32
    %63 = arith.addi %0, %c1_i32_47 : i32
    %c0_i32_48 = arith.constant 0 : i32
    %64 = arith.addi %63, %c0_i32_48 : i32
    %c0_49 = arith.constant 0 : index
    %65 = arith.index_cast %64 : i32 to index
    %c1_50 = arith.constant 1 : index
    %c0_51 = arith.constant 0 : index
    %66 = vector.load %arg2[%c0_49, %65, %c1_50, %c0_51] : memref<1x10x10x4xf32, #tpu.memory_space<vmem>>, vector<1x8x8x4xf32>
    %67 = vector.shape_cast %66 : vector<1x8x8x4xf32> to vector<8x8x4xf32>
    %68 = vector.shape_cast %67 : vector<8x8x4xf32> to vector<64x4xf32>
    %c6 = arith.constant 6 : index
    %c0_52 = arith.constant 0 : index
    %c0_53 = arith.constant 0 : index
    %69 = vector.load %arg3[%c6, %c0_52, %c0_53] : memref<16x4x8xf32, #tpu.memory_space<vmem>>, vector<1x4x8xf32>
    %70 = vector.shape_cast %69 : vector<1x4x8xf32> to vector<4x8xf32>
    %cst_54 = arith.constant dense<0.000000e+00> : vector<64x8xf32>
    %71 = tpu.matmul %68, %70, %cst_54 {dimension_numbers = #tpu.dot_dimension_numbers<[1], [0], [0], [1], [0, 0, 1, 1], [], []>} : vector<64x4xf32>, vector<4x8xf32>, vector<64x8xf32> -> vector<64x8xf32>
    %72 = arith.addf %62, %71 : vector<64x8xf32>
    %c1_i32_55 = arith.constant 1 : i32
    %73 = arith.addi %0, %c1_i32_55 : i32
    %c0_i32_56 = arith.constant 0 : i32
    %74 = arith.addi %73, %c0_i32_56 : i32
    %c0_57 = arith.constant 0 : index
    %75 = arith.index_cast %74 : i32 to index
    %c2_58 = arith.constant 2 : index
    %c0_59 = arith.constant 0 : index
    %76 = vector.load %arg2[%c0_57, %75, %c2_58, %c0_59] : memref<1x10x10x4xf32, #tpu.memory_space<vmem>>, vector<1x8x8x4xf32>
    %77 = vector.shape_cast %76 : vector<1x8x8x4xf32> to vector<8x8x4xf32>
    %78 = vector.shape_cast %77 : vector<8x8x4xf32> to vector<64x4xf32>
    %c7 = arith.constant 7 : index
    %c0_60 = arith.constant 0 : index
    %c0_61 = arith.constant 0 : index
    %79 = vector.load %arg3[%c7, %c0_60, %c0_61] : memref<16x4x8xf32, #tpu.memory_space<vmem>>, vector<1x4x8xf32>
    %80 = vector.shape_cast %79 : vector<1x4x8xf32> to vector<4x8xf32>
    %cst_62 = arith.constant dense<0.000000e+00> : vector<64x8xf32>
    %81 = tpu.matmul %78, %80, %cst_62 {dimension_numbers = #tpu.dot_dimension_numbers<[1], [0], [0], [1], [0, 0, 1, 1], [], []>} : vector<64x4xf32>, vector<4x8xf32>, vector<64x8xf32> -> vector<64x8xf32>
    %82 = arith.addf %72, %81 : vector<64x8xf32>
    %cst_63 = arith.constant 0.000000e+00 : f32
    %83 = vector.broadcast %cst_63 : f32 to vector<64x8xf32>
    %c0_i32_64 = arith.constant 0 : i32
    %84 = arith.addi %0, %c0_i32_64 : i32
    %c1_i32_65 = arith.constant 1 : i32
    %85 = arith.addi %84, %c1_i32_65 : i32
    %c0_66 = arith.constant 0 : index
    %86 = arith.index_cast %85 : i32 to index
    %c0_67 = arith.constant 0 : index
    %c0_68 = arith.constant 0 : index
    %87 = vector.load %arg2[%c0_66, %86, %c0_67, %c0_68] : memref<1x10x10x4xf32, #tpu.memory_space<vmem>>, vector<1x8x8x4xf32>
    %88 = vector.shape_cast %87 : vector<1x8x8x4xf32> to vector<8x8x4xf32>
    %89 = vector.shape_cast %88 : vector<8x8x4xf32> to vector<64x4xf32>
    %c8 = arith.constant 8 : index
    %c0_69 = arith.constant 0 : index
    %c0_70 = arith.constant 0 : index
    %90 = vector.load %arg3[%c8, %c0_69, %c0_70] : memref<16x4x8xf32, #tpu.memory_space<vmem>>, vector<1x4x8xf32>
    %91 = vector.shape_cast %90 : vector<1x4x8xf32> to vector<4x8xf32>
    %cst_71 = arith.constant dense<0.000000e+00> : vector<64x8xf32>
    %92 = tpu.matmul %89, %91, %cst_71 {dimension_numbers = #tpu.dot_dimension_numbers<[1], [0], [0], [1], [0, 0, 1, 1], [], []>} : vector<64x4xf32>, vector<4x8xf32>, vector<64x8xf32> -> vector<64x8xf32>
    %93 = arith.addf %83, %92 : vector<64x8xf32>
    %c0_i32_72 = arith.constant 0 : i32
    %94 = arith.addi %0, %c0_i32_72 : i32
    %c1_i32_73 = arith.constant 1 : i32
    %95 = arith.addi %94, %c1_i32_73 : i32
    %c0_74 = arith.constant 0 : index
    %96 = arith.index_cast %95 : i32 to index
    %c1_75 = arith.constant 1 : index
    %c0_76 = arith.constant 0 : index
    %97 = vector.load %arg2[%c0_74, %96, %c1_75, %c0_76] : memref<1x10x10x4xf32, #tpu.memory_space<vmem>>, vector<1x8x8x4xf32>
    %98 = vector.shape_cast %97 : vector<1x8x8x4xf32> to vector<8x8x4xf32>
    %99 = vector.shape_cast %98 : vector<8x8x4xf32> to vector<64x4xf32>
    %c9 = arith.constant 9 : index
    %c0_77 = arith.constant 0 : index
    %c0_78 = arith.constant 0 : index
    %100 = vector.load %arg3[%c9, %c0_77, %c0_78] : memref<16x4x8xf32, #tpu.memory_space<vmem>>, vector<1x4x8xf32>
    %101 = vector.shape_cast %100 : vector<1x4x8xf32> to vector<4x8xf32>
    %cst_79 = arith.constant dense<0.000000e+00> : vector<64x8xf32>
    %102 = tpu.matmul %99, %101, %cst_79 {dimension_numbers = #tpu.dot_dimension_numbers<[1], [0], [0], [1], [0, 0, 1, 1], [], []>} : vector<64x4xf32>, vector<4x8xf32>, vector<64x8xf32> -> vector<64x8xf32>
    %103 = arith.addf %93, %102 : vector<64x8xf32>
    %c1_i32_80 = arith.constant 1 : i32
    %104 = arith.addi %0, %c1_i32_80 : i32
    %c1_i32_81 = arith.constant 1 : i32
    %105 = arith.addi %104, %c1_i32_81 : i32
    %c0_82 = arith.constant 0 : index
    %106 = arith.index_cast %105 : i32 to index
    %c0_83 = arith.constant 0 : index
    %c0_84 = arith.constant 0 : index
    %107 = vector.load %arg2[%c0_82, %106, %c0_83, %c0_84] : memref<1x10x10x4xf32, #tpu.memory_space<vmem>>, vector<1x8x8x4xf32>
    %108 = vector.shape_cast %107 : vector<1x8x8x4xf32> to vector<8x8x4xf32>
    %109 = vector.shape_cast %108 : vector<8x8x4xf32> to vector<64x4xf32>
    %c10 = arith.constant 10 : index
    %c0_85 = arith.constant 0 : index
    %c0_86 = arith.constant 0 : index
    %110 = vector.load %arg3[%c10, %c0_85, %c0_86] : memref<16x4x8xf32, #tpu.memory_space<vmem>>, vector<1x4x8xf32>
    %111 = vector.shape_cast %110 : vector<1x4x8xf32> to vector<4x8xf32>
    %cst_87 = arith.constant dense<0.000000e+00> : vector<64x8xf32>
    %112 = tpu.matmul %109, %111, %cst_87 {dimension_numbers = #tpu.dot_dimension_numbers<[1], [0], [0], [1], [0, 0, 1, 1], [], []>} : vector<64x4xf32>, vector<4x8xf32>, vector<64x8xf32> -> vector<64x8xf32>
    %113 = arith.addf %103, %112 : vector<64x8xf32>
    %c1_i32_88 = arith.constant 1 : i32
    %114 = arith.addi %0, %c1_i32_88 : i32
    %c1_i32_89 = arith.constant 1 : i32
    %115 = arith.addi %114, %c1_i32_89 : i32
    %c0_90 = arith.constant 0 : index
    %116 = arith.index_cast %115 : i32 to index
    %c1_91 = arith.constant 1 : index
    %c0_92 = arith.constant 0 : index
    %117 = vector.load %arg2[%c0_90, %116, %c1_91, %c0_92] : memref<1x10x10x4xf32, #tpu.memory_space<vmem>>, vector<1x8x8x4xf32>
    %118 = vector.shape_cast %117 : vector<1x8x8x4xf32> to vector<8x8x4xf32>
    %119 = vector.shape_cast %118 : vector<8x8x4xf32> to vector<64x4xf32>
    %c11 = arith.constant 11 : index
    %c0_93 = arith.constant 0 : index
    %c0_94 = arith.constant 0 : index
    %120 = vector.load %arg3[%c11, %c0_93, %c0_94] : memref<16x4x8xf32, #tpu.memory_space<vmem>>, vector<1x4x8xf32>
    %121 = vector.shape_cast %120 : vector<1x4x8xf32> to vector<4x8xf32>
    %cst_95 = arith.constant dense<0.000000e+00> : vector<64x8xf32>
    %122 = tpu.matmul %119, %121, %cst_95 {dimension_numbers = #tpu.dot_dimension_numbers<[1], [0], [0], [1], [0, 0, 1, 1], [], []>} : vector<64x4xf32>, vector<4x8xf32>, vector<64x8xf32> -> vector<64x8xf32>
    %123 = arith.addf %113, %122 : vector<64x8xf32>
    %cst_96 = arith.constant 0.000000e+00 : f32
    %124 = vector.broadcast %cst_96 : f32 to vector<64x8xf32>
    %c0_i32_97 = arith.constant 0 : i32
    %125 = arith.addi %0, %c0_i32_97 : i32
    %c1_i32_98 = arith.constant 1 : i32
    %126 = arith.addi %125, %c1_i32_98 : i32
    %c0_99 = arith.constant 0 : index
    %127 = arith.index_cast %126 : i32 to index
    %c1_100 = arith.constant 1 : index
    %c0_101 = arith.constant 0 : index
    %128 = vector.load %arg2[%c0_99, %127, %c1_100, %c0_101] : memref<1x10x10x4xf32, #tpu.memory_space<vmem>>, vector<1x8x8x4xf32>
    %129 = vector.shape_cast %128 : vector<1x8x8x4xf32> to vector<8x8x4xf32>
    %130 = vector.shape_cast %129 : vector<8x8x4xf32> to vector<64x4xf32>
    %c12 = arith.constant 12 : index
    %c0_102 = arith.constant 0 : index
    %c0_103 = arith.constant 0 : index
    %131 = vector.load %arg3[%c12, %c0_102, %c0_103] : memref<16x4x8xf32, #tpu.memory_space<vmem>>, vector<1x4x8xf32>
    %132 = vector.shape_cast %131 : vector<1x4x8xf32> to vector<4x8xf32>
    %cst_104 = arith.constant dense<0.000000e+00> : vector<64x8xf32>
    %133 = tpu.matmul %130, %132, %cst_104 {dimension_numbers = #tpu.dot_dimension_numbers<[1], [0], [0], [1], [0, 0, 1, 1], [], []>} : vector<64x4xf32>, vector<4x8xf32>, vector<64x8xf32> -> vector<64x8xf32>
    %134 = arith.addf %124, %133 : vector<64x8xf32>
    %c0_i32_105 = arith.constant 0 : i32
    %135 = arith.addi %0, %c0_i32_105 : i32
    %c1_i32_106 = arith.constant 1 : i32
    %136 = arith.addi %135, %c1_i32_106 : i32
    %c0_107 = arith.constant 0 : index
    %137 = arith.index_cast %136 : i32 to index
    %c2_108 = arith.constant 2 : index
    %c0_109 = arith.constant 0 : index
    %138 = vector.load %arg2[%c0_107, %137, %c2_108, %c0_109] : memref<1x10x10x4xf32, #tpu.memory_space<vmem>>, vector<1x8x8x4xf32>
    %139 = vector.shape_cast %138 : vector<1x8x8x4xf32> to vector<8x8x4xf32>
    %140 = vector.shape_cast %139 : vector<8x8x4xf32> to vector<64x4xf32>
    %c13 = arith.constant 13 : index
    %c0_110 = arith.constant 0 : index
    %c0_111 = arith.constant 0 : index
    %141 = vector.load %arg3[%c13, %c0_110, %c0_111] : memref<16x4x8xf32, #tpu.memory_space<vmem>>, vector<1x4x8xf32>
    %142 = vector.shape_cast %141 : vector<1x4x8xf32> to vector<4x8xf32>
    %cst_112 = arith.constant dense<0.000000e+00> : vector<64x8xf32>
    %143 = tpu.matmul %140, %142, %cst_112 {dimension_numbers = #tpu.dot_dimension_numbers<[1], [0], [0], [1], [0, 0, 1, 1], [], []>} : vector<64x4xf32>, vector<4x8xf32>, vector<64x8xf32> -> vector<64x8xf32>
    %144 = arith.addf %134, %143 : vector<64x8xf32>
    %c1_i32_113 = arith.constant 1 : i32
    %145 = arith.addi %0, %c1_i32_113 : i32
    %c1_i32_114 = arith.constant 1 : i32
    %146 = arith.addi %145, %c1_i32_114 : i32
    %c0_115 = arith.constant 0 : index
    %147 = arith.index_cast %146 : i32 to index
    %c1_116 = arith.constant 1 : index
    %c0_117 = arith.constant 0 : index
    %148 = vector.load %arg2[%c0_115, %147, %c1_116, %c0_117] : memref<1x10x10x4xf32, #tpu.memory_space<vmem>>, vector<1x8x8x4xf32>
    %149 = vector.shape_cast %148 : vector<1x8x8x4xf32> to vector<8x8x4xf32>
    %150 = vector.shape_cast %149 : vector<8x8x4xf32> to vector<64x4xf32>
    %c14 = arith.constant 14 : index
    %c0_118 = arith.constant 0 : index
    %c0_119 = arith.constant 0 : index
    %151 = vector.load %arg3[%c14, %c0_118, %c0_119] : memref<16x4x8xf32, #tpu.memory_space<vmem>>, vector<1x4x8xf32>
    %152 = vector.shape_cast %151 : vector<1x4x8xf32> to vector<4x8xf32>
    %cst_120 = arith.constant dense<0.000000e+00> : vector<64x8xf32>
    %153 = tpu.matmul %150, %152, %cst_120 {dimension_numbers = #tpu.dot_dimension_numbers<[1], [0], [0], [1], [0, 0, 1, 1], [], []>} : vector<64x4xf32>, vector<4x8xf32>, vector<64x8xf32> -> vector<64x8xf32>
    %154 = arith.addf %144, %153 : vector<64x8xf32>
    %c1_i32_121 = arith.constant 1 : i32
    %155 = arith.addi %0, %c1_i32_121 : i32
    %c1_i32_122 = arith.constant 1 : i32
    %156 = arith.addi %155, %c1_i32_122 : i32
    %c0_123 = arith.constant 0 : index
    %157 = arith.index_cast %156 : i32 to index
    %c2_124 = arith.constant 2 : index
    %c0_125 = arith.constant 0 : index
    %158 = vector.load %arg2[%c0_123, %157, %c2_124, %c0_125] : memref<1x10x10x4xf32, #tpu.memory_space<vmem>>, vector<1x8x8x4xf32>
    %159 = vector.shape_cast %158 : vector<1x8x8x4xf32> to vector<8x8x4xf32>
    %160 = vector.shape_cast %159 : vector<8x8x4xf32> to vector<64x4xf32>
    %c15 = arith.constant 15 : index
    %c0_126 = arith.constant 0 : index
    %c0_127 = arith.constant 0 : index
    %161 = vector.load %arg3[%c15, %c0_126, %c0_127] : memref<16x4x8xf32, #tpu.memory_space<vmem>>, vector<1x4x8xf32>
    %162 = vector.shape_cast %161 : vector<1x4x8xf32> to vector<4x8xf32>
    %cst_128 = arith.constant dense<0.000000e+00> : vector<64x8xf32>
    %163 = tpu.matmul %160, %162, %cst_128 {dimension_numbers = #tpu.dot_dimension_numbers<[1], [0], [0], [1], [0, 0, 1, 1], [], []>} : vector<64x4xf32>, vector<4x8xf32>, vector<64x8xf32> -> vector<64x8xf32>
    %164 = arith.addf %154, %163 : vector<64x8xf32>
    %c0_129 = arith.constant 0 : index
    %c0_130 = arith.constant 0 : index
    %165 = vector.load %arg4[%c0_129, %c0_130] : memref<1x8xf32, #tpu.memory_space<vmem>>, vector<1x8xf32>
    %166 = vector.broadcast %165 : vector<1x8xf32> to vector<64x8xf32>
    %167 = arith.addf %41, %166 : vector<64x8xf32>
    %cst_131 = arith.constant 0.000000e+00 : f32
    %168 = vector.broadcast %cst_131 : f32 to vector<64x8xf32>
    %169 = arith.maximumf %167, %168 : vector<64x8xf32>
    %c0_132 = arith.constant 0 : index
    %c0_133 = arith.constant 0 : index
    %c0_134 = arith.constant 0 : index
    %c0_135 = arith.constant 0 : index
    %170 = vector.load %arg5[%c0_132, %c0_133, %c0_134, %c0_135] : memref<1x4x64x8xf32, #tpu.memory_space<vmem>>, vector<1x1x64x8xf32>
    %171 = vector.shape_cast %170 : vector<1x1x64x8xf32> to vector<64x8xf32>
    %172 = vector.shape_cast %169 : vector<64x8xf32> to vector<1x1x64x8xf32>
    tpu.vector_store %arg5[%c0_132, %c0_133, %c0_134, %c0_135], %172 {strides = array<i32>} : memref<1x4x64x8xf32, #tpu.memory_space<vmem>>, vector<1x1x64x8xf32>,
    %c0_136 = arith.constant 0 : index
    %c0_137 = arith.constant 0 : index
    %173 = vector.load %arg4[%c0_136, %c0_137] : memref<1x8xf32, #tpu.memory_space<vmem>>, vector<1x8xf32>
    %174 = vector.broadcast %173 : vector<1x8xf32> to vector<64x8xf32>
    %175 = arith.addf %82, %174 : vector<64x8xf32>
    %cst_138 = arith.constant 0.000000e+00 : f32
    %176 = vector.broadcast %cst_138 : f32 to vector<64x8xf32>
    %177 = arith.maximumf %175, %176 : vector<64x8xf32>
    %c0_139 = arith.constant 0 : index
    %c1_140 = arith.constant 1 : index
    %c0_141 = arith.constant 0 : index
    %c0_142 = arith.constant 0 : index
    %178 = vector.load %arg5[%c0_139, %c1_140, %c0_141, %c0_142] : memref<1x4x64x8xf32, #tpu.memory_space<vmem>>, vector<1x1x64x8xf32>
    %179 = vector.shape_cast %178 : vector<1x1x64x8xf32> to vector<64x8xf32>
    %180 = vector.shape_cast %177 : vector<64x8xf32> to vector<1x1x64x8xf32>
    tpu.vector_store %arg5[%c0_139, %c1_140, %c0_141, %c0_142], %180 {strides = array<i32>} : memref<1x4x64x8xf32, #tpu.memory_space<vmem>>, vector<1x1x64x8xf32>,
    %c0_143 = arith.constant 0 : index
    %c0_144 = arith.constant 0 : index
    %181 = vector.load %arg4[%c0_143, %c0_144] : memref<1x8xf32, #tpu.memory_space<vmem>>, vector<1x8xf32>
    %182 = vector.broadcast %181 : vector<1x8xf32> to vector<64x8xf32>
    %183 = arith.addf %123, %182 : vector<64x8xf32>
    %cst_145 = arith.constant 0.000000e+00 : f32
    %184 = vector.broadcast %cst_145 : f32 to vector<64x8xf32>
    %185 = arith.maximumf %183, %184 : vector<64x8xf32>
    %c0_146 = arith.constant 0 : index
    %c2_147 = arith.constant 2 : index
    %c0_148 = arith.constant 0 : index
    %c0_149 = arith.constant 0 : index
    %186 = vector.load %arg5[%c0_146, %c2_147, %c0_148, %c0_149] : memref<1x4x64x8xf32, #tpu.memory_space<vmem>>, vector<1x1x64x8xf32>
    %187 = vector.shape_cast %186 : vector<1x1x64x8xf32> to vector<64x8xf32>
    %188 = vector.shape_cast %185 : vector<64x8xf32> to vector<1x1x64x8xf32>
    tpu.vector_store %arg5[%c0_146, %c2_147, %c0_148, %c0_149], %188 {strides = array<i32>} : memref<1x4x64x8xf32, #tpu.memory_space<vmem>>, vector<1x1x64x8xf32>,
    %c0_150 = arith.constant 0 : index
    %c0_151 = arith.constant 0 : index
    %189 = vector.load %arg4[%c0_150, %c0_151] : memref<1x8xf32, #tpu.memory_space<vmem>>, vector<1x8xf32>
    %190 = vector.broadcast %189 : vector<1x8xf32> to vector<64x8xf32>
    %191 = arith.addf %164, %190 : vector<64x8xf32>
    %cst_152 = arith.constant 0.000000e+00 : f32
    %192 = vector.broadcast %cst_152 : f32 to vector<64x8xf32>
    %193 = arith.maximumf %191, %192 : vector<64x8xf32>
    %c0_153 = arith.constant 0 : index
    %c3_154 = arith.constant 3 : index
    %c0_155 = arith.constant 0 : index
    %c0_156 = arith.constant 0 : index
    %194 = vector.load %arg5[%c0_153, %c3_154, %c0_155, %c0_156] : memref<1x4x64x8xf32, #tpu.memory_space<vmem>>, vector<1x1x64x8xf32>
    %195 = vector.shape_cast %194 : vector<1x1x64x8xf32> to vector<64x8xf32>
    %196 = vector.shape_cast %193 : vector<64x8xf32> to vector<1x1x64x8xf32>
    tpu.vector_store %arg5[%c0_153, %c3_154, %c0_155, %c0_156], %196 {strides = array<i32>} : memref<1x4x64x8xf32, #tpu.memory_space<vmem>>, vector<1x1x64x8xf32>,
    return
  }
  func.func @transform_0(%arg0: i32, %arg1: i32) -> (i32, i32, i32, i32) {
    %c0_i32 = arith.constant 0 : i32
    %c0_i32_0 = arith.constant 0 : i32
    %c0_i32_1 = arith.constant 0 : i32
    %c0_i32_2 = arith.constant 0 : i32
    return %arg0, %c0_i32, %c0_i32_0, %c0_i32_1 : i32, i32, i32, i32
  }
  func.func @transform_1(%arg0: i32, %arg1: i32) -> (i32, i32, i32) {
    %c0_i32 = arith.constant 0 : i32
    %c0_i32_0 = arith.constant 0 : i32
    %c0_i32_1 = arith.constant 0 : i32
    %c0_i32_2 = arith.constant 0 : i32
    return %c0_i32, %c0_i32_0, %c0_i32_1 : i32, i32, i32
  }
  func.func @transform_2(%arg0: i32, %arg1: i32) -> (i32, i32) {
    %c0_i32 = arith.constant 0 : i32
    %c0_i32_0 = arith.constant 0 : i32
    %c0_i32_1 = arith.constant 0 : i32
    return %c0_i32, %c0_i32_0 : i32, i32
  }
  func.func @transform_3(%arg0: i32, %arg1: i32) -> (i32, i32, i32, i32) {
    %c0_i32 = arith.constant 0 : i32
    %c0_i32_0 = arith.constant 0 : i32
    %c0_i32_1 = arith.constant 0 : i32
    return %arg0, %c0_i32, %arg1, %c0_i32_0 : i32, i32, i32, i32
  }
}

</mosaic_0001>

<llo_original>
// kernel: unet_up_forward.2
$region0: #{unet_up_forward.2}
  #allocation0 [shape = 'u32[]', space=smem, size = 0x4, offset = 0x4, fixed_abs, tag = 'smem constant byte address 0x4 - core index']
  #allocation1 [shape = 'u32[144,128]{1,0:T(1,128)}', space=vmem, size = 0x12000, scoped, tag = 'internal scratch']
  %s0 = inlined_call_operand.vmem [shape: f32[2,10,10,4], index: 0, kind: input, shape index: {}]
  %s1 = inlined_call_operand.vmem [shape: f32[16,4,8], index: 1, kind: input, shape index: {}]
  %s2 = inlined_call_operand.vmem [shape: f32[2,2,8], index: 2, kind: output, shape index: {}]
  %s3 = sld [smem:[#allocation0]]
  $region41: #{unet_up_forward.2} parent=0
    _
  %s5 = ssub.s32 1, %s3
  %s6 = scalar_select 0, %s5, %s3
  loop: start=0, step=1, limit=4
  $region2: #{unet_up_forward.2} parent=0 // loop_pre_header
    _
  $region3: #{unet_up_forward.2} parent=0 // loop_header
    %s8 = sphi 0, %s12
    %p9 = scmp.ge.s32.totalorder %s8, 4
    %s15 = sphi 0, %s27
    %s16 = sphi 0, %s23
    %s17 = sphi 0, %s15
    %s18 = sphi 0, %s16
    %s19 = sphi 0, %s17
    %s20 = sphi 0, %s18
    %s30 = sphi 0, %s32
    %s33 = sphi 0, %s30
    %s34 = sphi 0, %s33
    %s50 = sphi 0, %s34
    %s54 = sphi 0, %s54
    %s56 = sphi 0, %s54
    %s57 = sphi 0, %s56
    %s71 = sphi 0, %s57
    %s79 = sphi 0, %s81
    %s82 = sphi 0, %s79
    %s83 = sphi 0, %s82
    %s99 = sphi 0, %s83
  $region4: #{unet_up_forward.2} parent=0 // loop_header_branch
    %11 = sbr.rel (%p9) target = $region8
  $region5: #{unet_up_forward.2} parent=0 // loop_body
    %s13 = ssub.s32 %s8, 1
    %s14 = ssub.s32 %s8, 2
    %s21 = sadd.s32 1, %s16
    %p22 = scmp.ge.s32.totalorder %s21, 1
    %s23 = scalar_select %p22, 0, %s21
    %s24 = sadd.s32 1, %s15
    %s25 = scalar_select %p22, %s24, %s15
    %p26 = scmp.ge.s32.totalorder %s25, 2
    %s27 = scalar_select %p26, 0, %s25
    %s28 = ssub.s32 %s15, %s27
    %p29 = scmp.eq.s32.totalorder %s28, 0
    %s31 = sadd.s32 %s30, 1
    %s32 = scalar_select %p29, %s30, %s31
    %p35 = pneg %p29
    %p36 = scmp.eq.s32.totalorder %s8, 1
    %p37 = por %p35, %p36
    %p38 = scmp.ne.s32.totalorder %s30, %s33
    %p39 = scmp.eq.s32.totalorder %s8, 0
    %p40 = por %p38, %p39
    %p41 = scmp.ne.s32.totalorder %s30, %s33
    %p42 = scmp.eq.s32.totalorder %s13, 1
    %p43 = por %p41, %p42
    %p44 = scmp.ne.s32.totalorder %s33, %s34
    %p45 = scmp.eq.s32.totalorder %s13, 0
    %p46 = por %p44, %p45
    %p47 = scmp.ne.s32.totalorder %s33, %s34
    %p48 = scmp.eq.s32.totalorder %s14, 1
    %p49 = por %p47, %p48
    %p51 = scmp.ne.s32.totalorder %s34, %s50
    %p52 = scmp.eq.s32.totalorder %s14, 0
    %p53 = por %p51, %p52
    %s55 = sadd.s32 %s54, 1
    %p58 = scmp.eq.s32.totalorder %s8, 1
    %p59 = scmp.ne.s32.totalorder %s54, %s56
    %p60 = scmp.eq.s32.totalorder %s8, 0
    %p61 = por %p59, %p60
    %p62 = scmp.ne.s32.totalorder %s54, %s56
    %p63 = scmp.eq.s32.totalorder %s13, 1
    %p64 = por %p62, %p63
    %p65 = scmp.ne.s32.totalorder %s56, %s57
    %p66 = scmp.eq.s32.totalorder %s13, 0
    %p67 = por %p65, %p66
    %p68 = scmp.ne.s32.totalorder %s56, %s57
    %p69 = scmp.eq.s32.totalorder %s14, 1
    %p70 = por %p68, %p69
    %p72 = scmp.ne.s32.totalorder %s57, %s71
    %p73 = scmp.eq.s32.totalorder %s14, 0
    %p74 = por %p72, %p73
    %s75 = sadd.s32 %s15, %s16
    %s76 = sadd.s32 %s27, %s23
    %s77 = ssub.s32 %s75, %s76
    %p78 = scmp.eq.s32.totalorder %s77, 0
    %s80 = sadd.s32 %s79, 1
    %s81 = scalar_select %p78, %s79, %s80
    %p84 = pneg %p78
    %p85 = scmp.eq.s32.totalorder %s8, 1
    %p86 = por %p84, %p85
    %p87 = scmp.ne.s32.totalorder %s79, %s82
    %p88 = scmp.eq.s32.totalorder %s8, 0
    %p89 = por %p87, %p88
    %p90 = scmp.ne.s32.totalorder %s79, %s82
    %p91 = scmp.eq.s32.totalorder %s13, 1
    %p92 = por %p90, %p91
    %p93 = scmp.ne.s32.totalorder %s82, %s83
    %p94 = scmp.eq.s32.totalorder %s13, 0
    %p95 = por %p93, %p94
    %p96 = scmp.ne.s32.totalorder %s82, %s83
    %p97 = scmp.eq.s32.totalorder %s14, 1
    %p98 = por %p96, %p97
    %p100 = scmp.ne.s32.totalorder %s83, %s99
    %p101 = scmp.eq.s32.totalorder %s14, 0
    %p102 = por %p100, %p101
    %p103 = scmp.le.s32.totalorder 1, %s8
    %p104 = scmp.lt.s32.totalorder %s8, 3
    %p105 = pnand %p103, %p104
    %p106 = pneg %p105
    // Predicated region
    $region9: #{unet_up_forward.2} parent=5 // pred_check
      _
    $region10: #{unet_up_forward.2} parent=5 // pred_check_branch
      %108 = sbr.rel (%p105) target = $region12
    $region11: #{unet_up_forward.2} parent=5 // pred_region
      %s109 = ssub.s32 %s8, 1
      // Predicated region
      $region13: #{unet_up_forward.2} parent=11 // pred_check
        %p110 = pneg %p67
      $region14: #{unet_up_forward.2} parent=11 // pred_check_branch
        %112 = sbr.rel (%p110) target = $region16
      $region15: #{unet_up_forward.2} parent=11 // pred_region
        _
      $region16: #{unet_up_forward.2} parent=11 // pred_fallthru
        _
    $region12: #{unet_up_forward.2} parent=5 // pred_fallthru
      _
    %p113 = scmp.lt.s32.totalorder %s8, 2
    // Predicated region
    $region17: #{unet_up_forward.2} parent=5 // pred_check
      %p114 = pneg %p113
    $region18: #{unet_up_forward.2} parent=5 // pred_check_branch
      %116 = sbr.rel (%p114) target = $region20
    $region19: #{unet_up_forward.2} parent=5 // pred_region
      // Predicated region
      $region21: #{unet_up_forward.2} parent=19 // pred_check
        %p117 = pneg %p40
      $region22: #{unet_up_forward.2} parent=19 // pred_check_branch
        %119 = sbr.rel (%p117) target = $region24
      $region23: #{unet_up_forward.2} parent=19 // pred_region
        %p120 = scmp.lt.s32.totalorder %s15, 1
        %s121 = scalar_select %p120, %s15, 1
        %s122 = smul.addr %s121, 20
        %s123 = smul.addr %s122, 8
        %s124 = scalar_lea.vmem %s0, %s123
      $region24: #{unet_up_forward.2} parent=19 // pred_fallthru
        _
    $region20: #{unet_up_forward.2} parent=5 // pred_fallthru
      _
    %p125 = scmp.le.s32.totalorder 1, %s8
    %p126 = scmp.lt.s32.totalorder %s8, 3
    %p127 = pnand %p125, %p126
    %p128 = pneg %p127
    // Predicated region
    $region25: #{unet_up_forward.2} parent=5 // pred_check
      _
    $region26: #{unet_up_forward.2} parent=5 // pred_check_branch
      %130 = sbr.rel (%p127) target = $region28
    $region27: #{unet_up_forward.2} parent=5 // pred_region
      %s131 = ssub.s32 %s8, 1
      %p132 = scmp.lt.s32.totalorder %s17, 1
      %s133 = scalar_select %p132, %s17, 1
      %s134 = smul.addr %s133, 20
      %s135 = smul.addr %s134, 8
      %s136 = scalar_lea.vmem %s0, %s135
      %p137 = pneg %p46
      %p138 = pneg %p43
      %p139 = pneg %p67
      %p140 = pneg %p64
      %p141 = pneg %p95
      %p142 = pneg %p92
      %s143 = sadd.s32 %s17, %s18
      %p144 = scmp.lt.s32.totalorder %s143, 1
      %s145 = scalar_select %p144, %s143, 1
      %s146 = smul.addr %s145, 2
      %s147 = scalar_lea.vmem %s2, %s146
      %p148 = scmp.lt.s32.totalorder %s17, 1
      %s149 = scalar_select %p148, %s17, 1
      %s150 = smul.addr %s149, 20
      %s151 = smul.addr %s150, 8
      %s152 = scalar_lea.vmem %s0, %s151
      %s153 = sadd.s32 %s17, %s18
      %p154 = scmp.lt.s32.totalorder %s153, 1
      %s155 = scalar_select %p154, %s153, 1
      %s156 = smul.addr %s155, 2
      %s157 = scalar_lea.vmem %s2, %s156
      %s158 = sadd.s32 %s17, %s18
      %s159 = smul.u32 %s18, 8
      %s160 = smul.u32 %s159, 16
      %s161 = scalar_lea.vmem %s152, %s160
      %v162 = vld [vmem:[%s161] sm:$0xff]
      %v163 = vld [vmem:[%s161 + $0x10] sm:$0xff]
      %v164 = vld [vmem:[%s161 + $0x20] sm:$0xff]
      %v165 = vld [vmem:[%s161 + $0x30] sm:$0xff]
      %v166 = vld [vmem:[%s161 + $0x40] sm:$0xff]
      %v167 = vld [vmem:[%s161 + $0x50] sm:$0xff]
      %v168 = vld [vmem:[%s161 + $0x60] sm:$0xff]
      %v169 = vld [vmem:[%s161 + $0x70] sm:$0xff]
      %v170 = vld [vmem:[%s1] sm:$0xf]
      %v171 = vld [vmem:[%s161 + $0x1] sm:$0xff]
      %v172 = vld [vmem:[%s161 + $0x11] sm:$0xff]
      %v173 = vld [vmem:[%s161 + $0x21] sm:$0xff]
      %v174 = vld [vmem:[%s161 + $0x31] sm:$0xff]
      %v175 = vld [vmem:[%s161 + $0x41] sm:$0xff]
      %v176 = vld [vmem:[%s161 + $0x51] sm:$0xff]
      %v177 = vld [vmem:[%s161 + $0x61] sm:$0xff]
      %v178 = vld [vmem:[%s161 + $0x71] sm:$0xff]
      %s179 = scalar_lea.vmem %s1, 4
      %v180 = vld [vmem:[%s179] sm:$0xf]
      %vm181 = vcmask 31744
      %v183 = vsel %vm181, %v171, 0
      %v186 = vsel %vm181, %v172, 0
      %v189 = vsel %vm181, %v173, 0
      %v192 = vsel %vm181, %v174, 0
      %v195 = vsel %vm181, %v175, 0
      %v198 = vsel %vm181, %v176, 0
      %v201 = vsel %vm181, %v177, 0
      %v204 = vsel %vm181, %v178, 0
      %vm206 = vcmask 1043456
      %v208 = vsel %vm206, %v180, 0
      %210 = vmatprep.subr.mxu0 0.0
      %211 = vmatpush1.msra.mxu0 0.0
      %212 = vmatprep.subr.mxu0 0.0
      %213 = vmatpush1.msra.mxu0 0.0
      %214 = vmatprep.subr.mxu0 0.0
      %215 = vmatpush1.msra.mxu0 0.0
      %216 = vmatprep.subr.mxu0 0.0
      %217 = vmatpush1.msra.mxu0 0.0
      %218 = vmatprep.subr.mxu0 0.0
      %219 = vmatpush1.msra.mxu0 0.0
      %220 = vmatprep.subr.mxu0 0.0
      %221 = vmatpush1.msra.mxu0 0.0
      %222 = vmatprep.subr.mxu0 0.0
      %223 = vmatpush1.msra.mxu0 0.0
      %224 = vmatprep.subr.mxu0 0.0
      %225 = vmatpush1.msra.mxu0 0.0
      %226 = vmatprep.subr.mxu0 0.0
      %227 = vmatpush1.msra.mxu0 0.0
      %228 = vmatprep.subr.mxu0 0.0
      %229 = vmatpush1.msra.mxu0 0.0
      %230 = vmatprep.subr.mxu0 0.0
      %231 = vmatpush1.msra.mxu0 0.0
      %232 = vmatprep.subr.mxu0 0.0
      %233 = vmatpush1.msra.mxu0 0.0
      %234 = vmatprep.subr.mxu0 0.0
      %235 = vmatpush1.msra.mxu0 0.0
      %236 = vmatprep.subr.mxu0 0.0
      %237 = vmatpush1.msra.mxu0 0.0
      %238 = vmatprep.subr.mxu0 0.0
      %239 = vmatpush1.msra.mxu0 0.0
      %240 = vmatprep.subr.mxu0 0.0
      %241 = vmatpush1.msra.mxu0 %v208
      %242 = vmatprep.subr.mxu0 0.0
      %243 = vmatpush2.msra.mxu0 0.0
      %244 = vmatprep.subr.mxu0 0.0
      %245 = vmatpush2.msra.mxu0 0.0
      %246 = vmatprep.subr.mxu0 0.0
      %247 = vmatpush2.msra.mxu0 0.0
      %248 = vmatprep.subr.mxu0 0.0
      %249 = vmatpush2.msra.mxu0 0.0
      %250 = vmatprep.subr.mxu0 0.0
      %251 = vmatpush2.msra.mxu0 0.0
      %252 = vmatprep.subr.mxu0 0.0
      %253 = vmatpush2.msra.mxu0 0.0
      %254 = vmatprep.subr.mxu0 0.0
      %255 = vmatpush2.msra.mxu0 0.0
      %256 = vmatprep.subr.mxu0 0.0
      %257 = vmatpush2.msra.mxu0 0.0
      %258 = vmatprep.subr.mxu0 0.0
      %259 = vmatpush2.msra.mxu0 0.0
      %260 = vmatprep.subr.mxu0 0.0
      %261 = vmatpush2.msra.mxu0 0.0
      %262 = vmatprep.subr.mxu0 0.0
      %263 = vmatpush2.msra.mxu0 0.0
      %264 = vmatprep.subr.mxu0 0.0
      %265 = vmatpush2.msra.mxu0 0.0
      %266 = vmatprep.subr.mxu0 0.0
      %267 = vmatpush2.msra.mxu0 0.0
      %268 = vmatprep.subr.mxu0 0.0
      %269 = vmatpush2.msra.mxu0 0.0
      %270 = vmatprep.subr.mxu0 0.0
      %271 = vmatpush2.msra.mxu0 0.0
      %272 = vmatprep.subr.mxu0 0.0
      %273 = vmatpush2.msra.mxu0 0.0
      %274 = vmatprep.mubr.f32.mxu0 0.0
      %275 = vmatmul.mubr.f32.gmra.mxu0 %v183
      %v276 = vpop.f32.mrf.mxu0
      %v277 = vadd.f32 0.0, %v276
      %v278 = vpop.f32.mrf.mxu0
      %279 = vmatprep.mubr.f32.mxu0 0.0
      %280 = vmatmul.mubr.f32.gmra.mxu0 %v186
      %v281 = vpop.f32.mrf.mxu0
      %v282 = vadd.f32 0.0, %v281
      %v283 = vpop.f32.mrf.mxu0
      %284 = vmatprep.mubr.f32.mxu0 0.0
      %285 = vmatmul.mubr.f32.gmra.mxu0 %v189
      %v286 = vpop.f32.mrf.mxu0
      %v287 = vadd.f32 0.0, %v286
      %v288 = vpop.f32.mrf.mxu0
      %289 = vmatprep.mubr.f32.mxu0 0.0
      %290 = vmatmul.mubr.f32.gmra.mxu0 %v192
      %v291 = vpop.f32.mrf.mxu0
      %v292 = vadd.f32 0.0, %v291
      %v293 = vpop.f32.mrf.mxu0
      %294 = vmatprep.mubr.f32.mxu0 0.0
      %295 = vmatmul.mubr.f32.gmra.mxu0 %v195
      %v296 = vpop.f32.mrf.mxu0
      %v297 = vadd.f32 0.0, %v296
      %v298 = vpop.f32.mrf.mxu0
      %299 = vmatprep.mubr.f32.mxu0 0.0
      %300 = vmatmul.mubr.f32.gmra.mxu0 %v198
      %v301 = vpop.f32.mrf.mxu0
      %v302 = vadd.f32 0.0, %v301
      %v303 = vpop.f32.mrf.mxu0
      %304 = vmatprep.mubr.f32.mxu0 0.0
      %305 = vmatmul.mubr.f32.gmra.mxu0 %v201
      %v306 = vpop.f32.mrf.mxu0
      %v307 = vadd.f32 0.0, %v306
      %v308 = vpop.f32.mrf.mxu0
      %309 = vmatprep.mubr.f32.mxu0 0.0
      %310 = vmatmul.mubr.f32.gmra.mxu0 %v204
      %v311 = vpop.f32.mrf.mxu0
      %v312 = vadd.f32 0.0, %v311
      %v313 = vpop.f32.mrf.mxu0
      %314 = vdwg.mxu0
      %v316 = vsel %vm181, %v162, 0
      %v319 = vsel %vm181, %v163, 0
      %v322 = vsel %vm181, %v164, 0
      %v325 = vsel %vm181, %v165, 0
      %v328 = vsel %vm181, %v166, 0
      %v331 = vsel %vm181, %v167, 0
      %v334 = vsel %vm181, %v168, 0
      %v337 = vsel %vm181, %v169, 0
      %v340 = vsel %vm206, %v170, 0
      %342 = vmatprep.subr.mxu0 0.0
      %343 = vmatpush1.msra.mxu0 0.0
      %344 = vmatprep.subr.mxu0 0.0
      %345 = vmatpush1.msra.mxu0 0.0
      %346 = vmatprep.subr.mxu0 0.0
      %347 = vmatpush1.msra.mxu0 0.0
      %348 = vmatprep.subr.mxu0 0.0
      %349 = vmatpush1.msra.mxu0 0.0
      %350 = vmatprep.subr.mxu0 0.0
      %351 = vmatpush1.msra.mxu0 0.0
      %352 = vmatprep.subr.mxu0 0.0
      %353 = vmatpush1.msra.mxu0 0.0
      %354 = vmatprep.subr.mxu0 0.0
      %355 = vmatpush1.msra.mxu0 0.0
      %356 = vmatprep.subr.mxu0 0.0
      %357 = vmatpush1.msra.mxu0 0.0
      %358 = vmatprep.subr.mxu0 0.0
      %359 = vmatpush1.msra.mxu0 0.0
      %360 = vmatprep.subr.mxu0 0.0
      %361 = vmatpush1.msra.mxu0 0.0
      %362 = vmatprep.subr.mxu0 0.0
      %363 = vmatpush1.msra.mxu0 0.0
      %364 = vmatprep.subr.mxu0 0.0
      %365 = vmatpush1.msra.mxu0 0.0
      %366 = vmatprep.subr.mxu0 0.0
      %367 = vmatpush1.msra.mxu0 0.0
      %368 = vmatprep.subr.mxu0 0.0
      %369 = vmatpush1.msra.mxu0 0.0
      %370 = vmatprep.subr.mxu0 0.0
      %371 = vmatpush1.msra.mxu0 0.0
      %372 = vmatprep.subr.mxu0 0.0
      %373 = vmatpush1.msra.mxu0 %v340
      %374 = vmatprep.subr.mxu0 0.0
      %375 = vmatpush2.msra.mxu0 0.0
      %376 = vmatprep.subr.mxu0 0.0
      %377 = vmatpush2.msra.mxu0 0.0
      %378 = vmatprep.subr.mxu0 0.0
      %379 = vmatpush2.msra.mxu0 0.0
      %380 = vmatprep.subr.mxu0 0.0
      %381 = vmatpush2.msra.mxu0 0.0
      %382 = vmatprep.subr.mxu0 0.0
      %383 = vmatpush2.msra.mxu0 0.0
      %384 = vmatprep.subr.mxu0 0.0
      %385 = vmatpush2.msra.mxu0 0.0
      %386 = vmatprep.subr.mxu0 0.0
      %387 = vmatpush2.msra.mxu0 0.0
      %388 = vmatprep.subr.mxu0 0.0
      %389 = vmatpush2.msra.mxu0 0.0
      %390 = vmatprep.subr.mxu0 0.0
      %391 = vmatpush2.msra.mxu0 0.0
      %392 = vmatprep.subr.mxu0 0.0
      %393 = vmatpush2.msra.mxu0 0.0
      %394 = vmatprep.subr.mxu0 0.0
      %395 = vmatpush2.msra.mxu0 0.0
      %396 = vmatprep.subr.mxu0 0.0
      %397 = vmatpush2.msra.mxu0 0.0
      %398 = vmatprep.subr.mxu0 0.0
      %399 = vmatpush2.msra.mxu0 0.0
      %400 = vmatprep.subr.mxu0 0.0
      %401 = vmatpush2.msra.mxu0 0.0
      %402 = vmatprep.subr.mxu0 0.0
      %403 = vmatpush2.msra.mxu0 0.0
      %404 = vmatprep.subr.mxu0 0.0
      %405 = vmatpush2.msra.mxu0 0.0
      %406 = vmatprep.mubr.f32.mxu0 0.0
      %407 = vmatmul.mubr.f32.gmra.mxu0 %v316
      %v408 = vpop.f32.mrf.mxu0
      %v409 = vadd.f32 %v277, %v408
      %v410 = vpop.f32.mrf.mxu0
      %411 = vmatprep.mubr.f32.mxu0 0.0
      %412 = vmatmul.mubr.f32.gmra.mxu0 %v319
      %v413 = vpop.f32.mrf.mxu0
      %v414 = vadd.f32 %v282, %v413
      %v415 = vpop.f32.mrf.mxu0
      %416 = vmatprep.mubr.f32.mxu0 0.0
      %417 = vmatmul.mubr.f32.gmra.mxu0 %v322
      %v418 = vpop.f32.mrf.mxu0
      %v419 = vadd.f32 %v287, %v418
      %v420 = vpop.f32.mrf.mxu0
      %421 = vmatprep.mubr.f32.mxu0 0.0
      %422 = vmatmul.mubr.f32.gmra.mxu0 %v325
      %v423 = vpop.f32.mrf.mxu0
      %v424 = vadd.f32 %v292, %v423
      %v425 = vpop.f32.mrf.mxu0
      %426 = vmatprep.mubr.f32.mxu0 0.0
      %427 = vmatmul.mubr.f32.gmra.mxu0 %v328
      %v428 = vpop.f32.mrf.mxu0
      %v429 = vadd.f32 %v297, %v428
      %v430 = vpop.f32.mrf.mxu0
      %431 = vmatprep.mubr.f32.mxu0 0.0
      %432 = vmatmul.mubr.f32.gmra.mxu0 %v331
      %v433 = vpop.f32.mrf.mxu0
      %v434 = vadd.f32 %v302, %v433
      %v435 = vpop.f32.mrf.mxu0
      %436 = vmatprep.mubr.f32.mxu0 0.0
      %437 = vmatmul.mubr.f32.gmra.mxu0 %v334
      %v438 = vpop.f32.mrf.mxu0
      %v439 = vadd.f32 %v307, %v438
      %v440 = vpop.f32.mrf.mxu0
      %441 = vmatprep.mubr.f32.mxu0 0.0
      %442 = vmatmul.mubr.f32.gmra.mxu0 %v337
      %v443 = vpop.f32.mrf.mxu0
      %v444 = vadd.f32 %v312, %v443
      %v445 = vpop.f32.mrf.mxu0
      %446 = vdwg.mxu0
      %s447 = sadd.s32 %s159, 1
      %s448 = smul.u32 %s447, 16
      %s449 = scalar_lea.vmem %s152, %s448
      %v450 = vld [vmem:[%s449] sm:$0xff]
      %v451 = vld [vmem:[%s449 + $0x10] sm:$0xff]
      %v452 = vld [vmem:[%s449 + $0x20] sm:$0xff]
      %v453 = vld [vmem:[%s449 + $0x30] sm:$0xff]
      %v454 = vld [vmem:[%s449 + $0x40] sm:$0xff]
      %v455 = vld [vmem:[%s449 + $0x50] sm:$0xff]
      %v456 = vld [vmem:[%s449 + $0x60] sm:$0xff]
      %v457 = vld [vmem:[%s449 + $0x70] sm:$0xff]
      %s458 = scalar_lea.vmem %s1, 8
      %v459 = vld [vmem:[%s458] sm:$0xf]
      %v461 = vsel %vm181, %v450, 0
      %v464 = vsel %vm181, %v451, 0
      %v467 = vsel %vm181, %v452, 0
      %v470 = vsel %vm181, %v453, 0
      %v473 = vsel %vm181, %v454, 0
      %v476 = vsel %vm181, %v455, 0
      %v479 = vsel %vm181, %v456, 0
      %v482 = vsel %vm181, %v457, 0
      %v485 = vsel %vm206, %v459, 0
      %487 = vmatprep.subr.mxu0 0.0
      %488 = vmatpush1.msra.mxu0 0.0
      %489 = vmatprep.subr.mxu0 0.0
      %490 = vmatpush1.msra.mxu0 0.0
      %491 = vmatprep.subr.mxu0 0.0
      %492 = vmatpush1.msra.mxu0 0.0
      %493 = vmatprep.subr.mxu0 0.0
      %494 = vmatpush1.msra.mxu0 0.0
      %495 = vmatprep.subr.mxu0 0.0
      %496 = vmatpush1.msra.mxu0 0.0
      %497 = vmatprep.subr.mxu0 0.0
      %498 = vmatpush1.msra.mxu0 0.0
      %499 = vmatprep.subr.mxu0 0.0
      %500 = vmatpush1.msra.mxu0 0.0
      %501 = vmatprep.subr.mxu0 0.0
      %502 = vmatpush1.msra.mxu0 0.0
      %503 = vmatprep.subr.mxu0 0.0
      %504 = vmatpush1.msra.mxu0 0.0
      %505 = vmatprep.subr.mxu0 0.0
      %506 = vmatpush1.msra.mxu0 0.0
      %507 = vmatprep.subr.mxu0 0.0
      %508 = vmatpush1.msra.mxu0 0.0
      %509 = vmatprep.subr.mxu0 0.0
      %510 = vmatpush1.msra.mxu0 0.0
      %511 = vmatprep.subr.mxu0 0.0
      %512 = vmatpush1.msra.mxu0 0.0
      %513 = vmatprep.subr.mxu0 0.0
      %514 = vmatpush1.msra.mxu0 0.0
      %515 = vmatprep.subr.mxu0 0.0
      %516 = vmatpush1.msra.mxu0 0.0
      %517 = vmatprep.subr.mxu0 0.0
      %518 = vmatpush1.msra.mxu0 %v485
      %519 = vmatprep.subr.mxu0 0.0
      %520 = vmatpush2.msra.mxu0 0.0
      %521 = vmatprep.subr.mxu0 0.0
      %522 = vmatpush2.msra.mxu0 0.0
      %523 = vmatprep.subr.mxu0 0.0
      %524 = vmatpush2.msra.mxu0 0.0
      %525 = vmatprep.subr.mxu0 0.0
      %526 = vmatpush2.msra.mxu0 0.0
      %527 = vmatprep.subr.mxu0 0.0
      %528 = vmatpush2.msra.mxu0 0.0
      %529 = vmatprep.subr.mxu0 0.0
      %530 = vmatpush2.msra.mxu0 0.0
      %531 = vmatprep.subr.mxu0 0.0
      %532 = vmatpush2.msra.mxu0 0.0
      %533 = vmatprep.subr.mxu0 0.0
      %534 = vmatpush2.msra.mxu0 0.0
      %535 = vmatprep.subr.mxu0 0.0
      %536 = vmatpush2.msra.mxu0 0.0
      %537 = vmatprep.subr.mxu0 0.0
      %538 = vmatpush2.msra.mxu0 0.0
      %539 = vmatprep.subr.mxu0 0.0
      %540 = vmatpush2.msra.mxu0 0.0
      %541 = vmatprep.subr.mxu0 0.0
      %542 = vmatpush2.msra.mxu0 0.0
      %543 = vmatprep.subr.mxu0 0.0
      %544 = vmatpush2.msra.mxu0 0.0
      %545 = vmatprep.subr.mxu0 0.0
      %546 = vmatpush2.msra.mxu0 0.0
      %547 = vmatprep.subr.mxu0 0.0
      %548 = vmatpush2.msra.mxu0 0.0
      %549 = vmatprep.subr.mxu0 0.0
      %550 = vmatpush2.msra.mxu0 0.0
      %551 = vmatprep.mubr.f32.mxu0 0.0
      %552 = vmatmul.mubr.f32.gmra.mxu0 %v461
      %v553 = vpop.f32.mrf.mxu0
      %v554 = vadd.f32 0.0, %v553
      %v555 = vpop.f32.mrf.mxu0
      %556 = vmatprep.mubr.f32.mxu0 0.0
      %557 = vmatmul.mubr.f32.gmra.mxu0 %v464
      %v558 = vpop.f32.mrf.mxu0
      %v559 = vadd.f32 0.0, %v558
      %v560 = vpop.f32.mrf.mxu0
      %561 = vmatprep.mubr.f32.mxu0 0.0
      %562 = vmatmul.mubr.f32.gmra.mxu0 %v467
      %v563 = vpop.f32.mrf.mxu0
      %v564 = vadd.f32 0.0, %v563
      %v565 = vpop.f32.mrf.mxu0
      %566 = vmatprep.mubr.f32.mxu0 0.0
      %567 = vmatmul.mubr.f32.gmra.mxu0 %v470
      %v568 = vpop.f32.mrf.mxu0
      %v569 = vadd.f32 0.0, %v568
      %v570 = vpop.f32.mrf.mxu0
      %571 = vmatprep.mubr.f32.mxu0 0.0
      %572 = vmatmul.mubr.f32.gmra.mxu0 %v473
      %v573 = vpop.f32.mrf.mxu0
      %v574 = vadd.f32 0.0, %v573
      %v575 = vpop.f32.mrf.mxu0
      %576 = vmatprep.mubr.f32.mxu0 0.0
      %577 = vmatmul.mubr.f32.gmra.mxu0 %v476
      %v578 = vpop.f32.mrf.mxu0
      %v579 = vadd.f32 0.0, %v578
      %v580 = vpop.f32.mrf.mxu0
      %581 = vmatprep.mubr.f32.mxu0 0.0
      %582 = vmatmul.mubr.f32.gmra.mxu0 %v479
      %v583 = vpop.f32.mrf.mxu0
      %v584 = vadd.f32 0.0, %v583
      %v585 = vpop.f32.mrf.mxu0
      %586 = vmatprep.mubr.f32.mxu0 0.0
      %587 = vmatmul.mubr.f32.gmra.mxu0 %v482
      %v588 = vpop.f32.mrf.mxu0
      %v589 = vadd.f32 0.0, %v588
      %v590 = vpop.f32.mrf.mxu0
      %591 = vdwg.mxu0
      %v592 = vadd.f32 %v409, %v554
      %v593 = vadd.f32 %v414, %v559
      %v594 = vadd.f32 %v419, %v564
      %v595 = vadd.f32 %v424, %v569
      %v596 = vadd.f32 %v429, %v574
      %v597 = vadd.f32 %v434, %v579
      %v598 = vadd.f32 %v439, %v584
      %v599 = vadd.f32 %v444, %v589
      %v600 = vld [vmem:[%s449 + $0x1] sm:$0xff]
      %v601 = vld [vmem:[%s449 + $0x11] sm:$0xff]
      %v602 = vld [vmem:[%s449 + $0x21] sm:$0xff]
      %v603 = vld [vmem:[%s449 + $0x31] sm:$0xff]
      %v604 = vld [vmem:[%s449 + $0x41] sm:$0xff]
      %v605 = vld [vmem:[%s449 + $0x51] sm:$0xff]
      %v606 = vld [vmem:[%s449 + $0x61] sm:$0xff]
      %v607 = vld [vmem:[%s449 + $0x71] sm:$0xff]
      %s608 = scalar_lea.vmem %s1, 12
      %v609 = vld [vmem:[%s608] sm:$0xf]
      %v611 = vsel %vm181, %v600, 0
      %v614 = vsel %vm181, %v601, 0
      %v617 = vsel %vm181, %v602, 0
      %v620 = vsel %vm181, %v603, 0
      %v623 = vsel %vm181, %v604, 0
      %v626 = vsel %vm181, %v605, 0
      %v629 = vsel %vm181, %v606, 0
      %v632 = vsel %vm181, %v607, 0
      %v635 = vsel %vm206, %v609, 0
      %637 = vmatprep.subr.mxu0 0.0
      %638 = vmatpush1.msra.mxu0 0.0
      %639 = vmatprep.subr.mxu0 0.0
      %640 = vmatpush1.msra.mxu0 0.0
      %641 = vmatprep.subr.mxu0 0.0
      %642 = vmatpush1.msra.mxu0 0.0
      %643 = vmatprep.subr.mxu0 0.0
      %644 = vmatpush1.msra.mxu0 0.0
      %645 = vmatprep.subr.mxu0 0.0
      %646 = vmatpush1.msra.mxu0 0.0
      %647 = vmatprep.subr.mxu0 0.0
      %648 = vmatpush1.msra.mxu0 0.0
      %649 = vmatprep.subr.mxu0 0.0
      %650 = vmatpush1.msra.mxu0 0.0
      %651 = vmatprep.subr.mxu0 0.0
      %652 = vmatpush1.msra.mxu0 0.0
      %653 = vmatprep.subr.mxu0 0.0
      %654 = vmatpush1.msra.mxu0 0.0
      %655 = vmatprep.subr.mxu0 0.0
      %656 = vmatpush1.msra.mxu0 0.0
      %657 = vmatprep.subr.mxu0 0.0
      %658 = vmatpush1.msra.mxu0 0.0
      %659 = vmatprep.subr.mxu0 0.0
      %660 = vmatpush1.msra.mxu0 0.0
      %661 = vmatprep.subr.mxu0 0.0
      %662 = vmatpush1.msra.mxu0 0.0
      %663 = vmatprep.subr.mxu0 0.0
      %664 = vmatpush1.msra.mxu0 0.0
      %665 = vmatprep.subr.mxu0 0.0
      %666 = vmatpush1.msra.mxu0 0.0
      %667 = vmatprep.subr.mxu0 0.0
      %668 = vmatpush1.msra.mxu0 %v635
      %669 = vmatprep.subr.mxu0 0.0
      %670 = vmatpush2.msra.mxu0 0.0
      %671 = vmatprep.subr.mxu0 0.0
      %672 = vmatpush2.msra.mxu0 0.0
      %673 = vmatprep.subr.mxu0 0.0
      %674 = vmatpush2.msra.mxu0 0.0
      %675 = vmatprep.subr.mxu0 0.0
      %676 = vmatpush2.msra.mxu0 0.0
      %677 = vmatprep.subr.mxu0 0.0
      %678 = vmatpush2.msra.mxu0 0.0
      %679 = vmatprep.subr.mxu0 0.0
      %680 = vmatpush2.msra.mxu0 0.0
      %681 = vmatprep.subr.mxu0 0.0
      %682 = vmatpush2.msra.mxu0 0.0
      %683 = vmatprep.subr.mxu0 0.0
      %684 = vmatpush2.msra.mxu0 0.0
      %685 = vmatprep.subr.mxu0 0.0
      %686 = vmatpush2.msra.mxu0 0.0
      %687 = vmatprep.subr.mxu0 0.0
      %688 = vmatpush2.msra.mxu0 0.0
      %689 = vmatprep.subr.mxu0 0.0
      %690 = vmatpush2.msra.mxu0 0.0
      %691 = vmatprep.subr.mxu0 0.0
      %692 = vmatpush2.msra.mxu0 0.0
      %693 = vmatprep.subr.mxu0 0.0
      %694 = vmatpush2.msra.mxu0 0.0
      %695 = vmatprep.subr.mxu0 0.0
      %696 = vmatpush2.msra.mxu0 0.0
      %697 = vmatprep.subr.mxu0 0.0
      %698 = vmatpush2.msra.mxu0 0.0
      %699 = vmatprep.subr.mxu0 0.0
      %700 = vmatpush2.msra.mxu0 0.0
      %701 = vmatprep.mubr.f32.mxu0 0.0
      %702 = vmatmul.mubr.f32.gmra.mxu0 %v611
      %v703 = vpop.f32.mrf.mxu0
      %v704 = vadd.f32 0.0, %v703
      %v705 = vpop.f32.mrf.mxu0
      %706 = vmatprep.mubr.f32.mxu0 0.0
      %707 = vmatmul.mubr.f32.gmra.mxu0 %v614
      %v708 = vpop.f32.mrf.mxu0
      %v709 = vadd.f32 0.0, %v708
      %v710 = vpop.f32.mrf.mxu0
      %711 = vmatprep.mubr.f32.mxu0 0.0
      %712 = vmatmul.mubr.f32.gmra.mxu0 %v617
      %v713 = vpop.f32.mrf.mxu0
      %v714 = vadd.f32 0.0, %v713
      %v715 = vpop.f32.mrf.mxu0
      %716 = vmatprep.mubr.f32.mxu0 0.0
      %717 = vmatmul.mubr.f32.gmra.mxu0 %v620
      %v718 = vpop.f32.mrf.mxu0
      %v719 = vadd.f32 0.0, %v718
      %v720 = vpop.f32.mrf.mxu0
      %721 = vmatprep.mubr.f32.mxu0 0.0
      %722 = vmatmul.mubr.f32.gmra.mxu0 %v623
      %v723 = vpop.f32.mrf.mxu0
      %v724 = vadd.f32 0.0, %v723
      %v725 = vpop.f32.mrf.mxu0
      %726 = vmatprep.mubr.f32.mxu0 0.0
      %727 = vmatmul.mubr.f32.gmra.mxu0 %v626
      %v728 = vpop.f32.mrf.mxu0
      %v729 = vadd.f32 0.0, %v728
      %v730 = vpop.f32.mrf.mxu0
      %731 = vmatprep.mubr.f32.mxu0 0.0
      %732 = vmatmul.mubr.f32.gmra.mxu0 %v629
      %v733 = vpop.f32.mrf.mxu0
      %v734 = vadd.f32 0.0, %v733
      %v735 = vpop.f32.mrf.mxu0
      %736 = vmatprep.mubr.f32.mxu0 0.0
      %737 = vmatmul.mubr.f32.gmra.mxu0 %v632
      %v738 = vpop.f32.mrf.mxu0
      %v739 = vadd.f32 0.0, %v738
      %v740 = vpop.f32.mrf.mxu0
      %741 = vdwg.mxu0
      %v742 = vadd.f32 %v592, %v704
      %v743 = vadd.f32 %v593, %v709
      %v744 = vadd.f32 %v594, %v714
      %v745 = vadd.f32 %v595, %v719
      %v746 = vadd.f32 %v596, %v724
      %v747 = vadd.f32 %v597, %v729
      %v748 = vadd.f32 %v598, %v734
      %v749 = vadd.f32 %v599, %v739
      %s750 = scalar_lea.vmem %s1, 16
      %v751 = vld [vmem:[%s750] sm:$0xf]
      %v752 = vld [vmem:[%s161 + $0x2] sm:$0xff]
      %v753 = vld [vmem:[%s161 + $0x12] sm:$0xff]
      %v754 = vld [vmem:[%s161 + $0x22] sm:$0xff]
      %v755 = vld [vmem:[%s161 + $0x32] sm:$0xff]
      %v756 = vld [vmem:[%s161 + $0x42] sm:$0xff]
      %v757 = vld [vmem:[%s161 + $0x52] sm:$0xff]
      %v758 = vld [vmem:[%s161 + $0x62] sm:$0xff]
      %v759 = vld [vmem:[%s161 + $0x72] sm:$0xff]
      %s760 = scalar_lea.vmem %s1, 20
      %v761 = vld [vmem:[%s760] sm:$0xf]
      %v763 = vsel %vm181, %v752, 0
      %v766 = vsel %vm181, %v753, 0
      %v769 = vsel %vm181, %v754, 0
      %v772 = vsel %vm181, %v755, 0
      %v775 = vsel %vm181, %v756, 0
      %v778 = vsel %vm181, %v757, 0
      %v781 = vsel %vm181, %v758, 0
      %v784 = vsel %vm181, %v759, 0
      %v787 = vsel %vm206, %v761, 0
      %789 = vmatprep.subr.mxu0 0.0
      %790 = vmatpush1.msra.mxu0 0.0
      %791 = vmatprep.subr.mxu0 0.0
      %792 = vmatpush1.msra.mxu0 0.0
      %793 = vmatprep.subr.mxu0 0.0
      %794 = vmatpush1.msra.mxu0 0.0
      %795 = vmatprep.subr.mxu0 0.0
      %796 = vmatpush1.msra.mxu0 0.0
      %797 = vmatprep.subr.mxu0 0.0
      %798 = vmatpush1.msra.mxu0 0.0
      %799 = vmatprep.subr.mxu0 0.0
      %800 = vmatpush1.msra.mxu0 0.0
      %801 = vmatprep.subr.mxu0 0.0
      %802 = vmatpush1.msra.mxu0 0.0
      %803 = vmatprep.subr.mxu0 0.0
      %804 = vmatpush1.msra.mxu0 0.0
      %805 = vmatprep.subr.mxu0 0.0
      %806 = vmatpush1.msra.mxu0 0.0
      %807 = vmatprep.subr.mxu0 0.0
      %808 = vmatpush1.msra.mxu0 0.0
      %809 = vmatprep.subr.mxu0 0.0
      %810 = vmatpush1.msra.mxu0 0.0
      %811 = vmatprep.subr.mxu0 0.0
      %812 = vmatpush1.msra.mxu0 0.0
      %813 = vmatprep.subr.mxu0 0.0
      %814 = vmatpush1.msra.mxu0 0.0
      %815 = vmatprep.subr.mxu0 0.0
      %816 = vmatpush1.msra.mxu0 0.0
      %817 = vmatprep.subr.mxu0 0.0
      %818 = vmatpush1.msra.mxu0 0.0
      %819 = vmatprep.subr.mxu0 0.0
      %820 = vmatpush1.msra.mxu0 %v787
      %821 = vmatprep.subr.mxu0 0.0
      %822 = vmatpush2.msra.mxu0 0.0
      %823 = vmatprep.subr.mxu0 0.0
      %824 = vmatpush2.msra.mxu0 0.0
      %825 = vmatprep.subr.mxu0 0.0
      %826 = vmatpush2.msra.mxu0 0.0
      %827 = vmatprep.subr.mxu0 0.0
      %828 = vmatpush2.msra.mxu0 0.0
      %829 = vmatprep.subr.mxu0 0.0
      %830 = vmatpush2.msra.mxu0 0.0
      %831 = vmatprep.subr.mxu0 0.0
      %832 = vmatpush2.msra.mxu0 0.0
      %833 = vmatprep.subr.mxu0 0.0
      %834 = vmatpush2.msra.mxu0 0.0
      %835 = vmatprep.subr.mxu0 0.0
      %836 = vmatpush2.msra.mxu0 0.0
      %837 = vmatprep.subr.mxu0 0.0
      %838 = vmatpush2.msra.mxu0 0.0
      %839 = vmatprep.subr.mxu0 0.0
      %840 = vmatpush2.msra.mxu0 0.0
      %841 = vmatprep.subr.mxu0 0.0
      %842 = vmatpush2.msra.mxu0 0.0
      %843 = vmatprep.subr.mxu0 0.0
      %844 = vmatpush2.msra.mxu0 0.0
      %845 = vmatprep.subr.mxu0 0.0
      %846 = vmatpush2.msra.mxu0 0.0
      %847 = vmatprep.subr.mxu0 0.0
      %848 = vmatpush2.msra.mxu0 0.0
      %849 = vmatprep.subr.mxu0 0.0
      %850 = vmatpush2.msra.mxu0 0.0
      %851 = vmatprep.subr.mxu0 0.0
      %852 = vmatpush2.msra.mxu0 0.0
      %853 = vmatprep.mubr.f32.mxu0 0.0
      %854 = vmatmul.mubr.f32.gmra.mxu0 %v763
      %v855 = vpop.f32.mrf.mxu0
      %v856 = vadd.f32 0.0, %v855
      %v857 = vpop.f32.mrf.mxu0
      %858 = vmatprep.mubr.f32.mxu0 0.0
      %859 = vmatmul.mubr.f32.gmra.mxu0 %v766
      %v860 = vpop.f32.mrf.mxu0
      %v861 = vadd.f32 0.0, %v860
      %v862 = vpop.f32.mrf.mxu0
      %863 = vmatprep.mubr.f32.mxu0 0.0
      %864 = vmatmul.mubr.f32.gmra.mxu0 %v769
      %v865 = vpop.f32.mrf.mxu0
      %v866 = vadd.f32 0.0, %v865
      %v867 = vpop.f32.mrf.mxu0
      %868 = vmatprep.mubr.f32.mxu0 0.0
      %869 = vmatmul.mubr.f32.gmra.mxu0 %v772
      %v870 = vpop.f32.mrf.mxu0
      %v871 = vadd.f32 0.0, %v870
      %v872 = vpop.f32.mrf.mxu0
      %873 = vmatprep.mubr.f32.mxu0 0.0
      %874 = vmatmul.mubr.f32.gmra.mxu0 %v775
      %v875 = vpop.f32.mrf.mxu0
      %v876 = vadd.f32 0.0, %v875
      %v877 = vpop.f32.mrf.mxu0
      %878 = vmatprep.mubr.f32.mxu0 0.0
      %879 = vmatmul.mubr.f32.gmra.mxu0 %v778
      %v880 = vpop.f32.mrf.mxu0
      %v881 = vadd.f32 0.0, %v880
      %v882 = vpop.f32.mrf.mxu0
      %883 = vmatprep.mubr.f32.mxu0 0.0
      %884 = vmatmul.mubr.f32.gmra.mxu0 %v781
      %v885 = vpop.f32.mrf.mxu0
      %v886 = vadd.f32 0.0, %v885
      %v887 = vpop.f32.mrf.mxu0
      %888 = vmatprep.mubr.f32.mxu0 0.0
      %889 = vmatmul.mubr.f32.gmra.mxu0 %v784
      %v890 = vpop.f32.mrf.mxu0
      %v891 = vadd.f32 0.0, %v890
      %v892 = vpop.f32.mrf.mxu0
      %893 = vdwg.mxu0
      %v895 = vsel %vm206, %v751, 0
      %897 = vmatprep.subr.mxu0 0.0
      %898 = vmatpush1.msra.mxu0 0.0
      %899 = vmatprep.subr.mxu0 0.0
      %900 = vmatpush1.msra.mxu0 0.0
      %901 = vmatprep.subr.mxu0 0.0
      %902 = vmatpush1.msra.mxu0 0.0
      %903 = vmatprep.subr.mxu0 0.0
      %904 = vmatpush1.msra.mxu0 0.0
      %905 = vmatprep.subr.mxu0 0.0
      %906 = vmatpush1.msra.mxu0 0.0
      %907 = vmatprep.subr.mxu0 0.0
      %908 = vmatpush1.msra.mxu0 0.0
      %909 = vmatprep.subr.mxu0 0.0
      %910 = vmatpush1.msra.mxu0 0.0
      %911 = vmatprep.subr.mxu0 0.0
      %912 = vmatpush1.msra.mxu0 0.0
      %913 = vmatprep.subr.mxu0 0.0
      %914 = vmatpush1.msra.mxu0 0.0
      %915 = vmatprep.subr.mxu0 0.0
      %916 = vmatpush1.msra.mxu0 0.0
      %917 = vmatprep.subr.mxu0 0.0
      %918 = vmatpush1.msra.mxu0 0.0
      %919 = vmatprep.subr.mxu0 0.0
      %920 = vmatpush1.msra.mxu0 0.0
      %921 = vmatprep.subr.mxu0 0.0
      %922 = vmatpush1.msra.mxu0 0.0
      %923 = vmatprep.subr.mxu0 0.0
      %924 = vmatpush1.msra.mxu0 0.0
      %925 = vmatprep.subr.mxu0 0.0
      %926 = vmatpush1.msra.mxu0 0.0
      %927 = vmatprep.subr.mxu0 0.0
      %928 = vmatpush1.msra.mxu0 %v895
      %929 = vmatprep.subr.mxu0 0.0
      %930 = vmatpush2.msra.mxu0 0.0
      %931 = vmatprep.subr.mxu0 0.0
      %932 = vmatpush2.msra.mxu0 0.0
      %933 = vmatprep.subr.mxu0 0.0
      %934 = vmatpush2.msra.mxu0 0.0
      %935 = vmatprep.subr.mxu0 0.0
      %936 = vmatpush2.msra.mxu0 0.0
      %937 = vmatprep.subr.mxu0 0.0
      %938 = vmatpush2.msra.mxu0 0.0
      %939 = vmatprep.subr.mxu0 0.0
      %940 = vmatpush2.msra.mxu0 0.0
      %941 = vmatprep.subr.mxu0 0.0
      %942 = vmatpush2.msra.mxu0 0.0
      %943 = vmatprep.subr.mxu0 0.0
      %944 = vmatpush2.msra.mxu0 0.0
      %945 = vmatprep.subr.mxu0 0.0
      %946 = vmatpush2.msra.mxu0 0.0
      %947 = vmatprep.subr.mxu0 0.0
      %948 = vmatpush2.msra.mxu0 0.0
      %949 = vmatprep.subr.mxu0 0.0
      %950 = vmatpush2.msra.mxu0 0.0
      %951 = vmatprep.subr.mxu0 0.0
      %952 = vmatpush2.msra.mxu0 0.0
      %953 = vmatprep.subr.mxu0 0.0
      %954 = vmatpush2.msra.mxu0 0.0
      %955 = vmatprep.subr.mxu0 0.0
      %956 = vmatpush2.msra.mxu0 0.0
      %957 = vmatprep.subr.mxu0 0.0
      %958 = vmatpush2.msra.mxu0 0.0
      %959 = vmatprep.subr.mxu0 0.0
      %960 = vmatpush2.msra.mxu0 0.0
      %961 = vmatprep.mubr.f32.mxu0 0.0
      %962 = vmatmul.mubr.f32.gmra.mxu0 %v183
      %v963 = vpop.f32.mrf.mxu0
      %v964 = vadd.f32 %v856, %v963
      %v965 = vpop.f32.mrf.mxu0
      %966 = vmatprep.mubr.f32.mxu0 0.0
      %967 = vmatmul.mubr.f32.gmra.mxu0 %v186
      %v968 = vpop.f32.mrf.mxu0
      %v969 = vadd.f32 %v861, %v968
      %v970 = vpop.f32.mrf.mxu0
      %971 = vmatprep.mubr.f32.mxu0 0.0
      %972 = vmatmul.mubr.f32.gmra.mxu0 %v189
      %v973 = vpop.f32.mrf.mxu0
      %v974 = vadd.f32 %v866, %v973
      %v975 = vpop.f32.mrf.mxu0
      %976 = vmatprep.mubr.f32.mxu0 0.0
      %977 = vmatmul.mubr.f32.gmra.mxu0 %v192
      %v978 = vpop.f32.mrf.mxu0
      %v979 = vadd.f32 %v871, %v978
      %v980 = vpop.f32.mrf.mxu0
      %981 = vmatprep.mubr.f32.mxu0 0.0
      %982 = vmatmul.mubr.f32.gmra.mxu0 %v195
      %v983 = vpop.f32.mrf.mxu0
      %v984 = vadd.f32 %v876, %v983
      %v985 = vpop.f32.mrf.mxu0
      %986 = vmatprep.mubr.f32.mxu0 0.0
      %987 = vmatmul.mubr.f32.gmra.mxu0 %v198
      %v988 = vpop.f32.mrf.mxu0
      %v989 = vadd.f32 %v881, %v988
      %v990 = vpop.f32.mrf.mxu0
      %991 = vmatprep.mubr.f32.mxu0 0.0
      %992 = vmatmul.mubr.f32.gmra.mxu0 %v201
      %v993 = vpop.f32.mrf.mxu0
      %v994 = vadd.f32 %v886, %v993
      %v995 = vpop.f32.mrf.mxu0
      %996 = vmatprep.mubr.f32.mxu0 0.0
      %997 = vmatmul.mubr.f32.gmra.mxu0 %v204
      %v998 = vpop.f32.mrf.mxu0
      %v999 = vadd.f32 %v891, %v998
      %v1000 = vpop.f32.mrf.mxu0
      %1001 = vdwg.mxu0
      %s1002 = scalar_lea.vmem %s1, 24
      %v1003 = vld [vmem:[%s1002] sm:$0xf]
      %v1005 = vsel %vm206, %v1003, 0
      %1007 = vmatprep.subr.mxu0 0.0
      %1008 = vmatpush1.msra.mxu0 0.0
      %1009 = vmatprep.subr.mxu0 0.0
      %1010 = vmatpush1.msra.mxu0 0.0
      %1011 = vmatprep.subr.mxu0 0.0
      %1012 = vmatpush1.msra.mxu0 0.0
      %1013 = vmatprep.subr.mxu0 0.0
      %1014 = vmatpush1.msra.mxu0 0.0
      %1015 = vmatprep.subr.mxu0 0.0
      %1016 = vmatpush1.msra.mxu0 0.0
      %1017 = vmatprep.subr.mxu0 0.0
      %1018 = vmatpush1.msra.mxu0 0.0
      %1019 = vmatprep.subr.mxu0 0.0
      %1020 = vmatpush1.msra.mxu0 0.0
      %1021 = vmatprep.subr.mxu0 0.0
      %1022 = vmatpush1.msra.mxu0 0.0
      %1023 = vmatprep.subr.mxu0 0.0
      %1024 = vmatpush1.msra.mxu0 0.0
      %1025 = vmatprep.subr.mxu0 0.0
      %1026 = vmatpush1.msra.mxu0 0.0
      %1027 = vmatprep.subr.mxu0 0.0
      %1028 = vmatpush1.msra.mxu0 0.0
      %1029 = vmatprep.subr.mxu0 0.0
      %1030 = vmatpush1.msra.mxu0 0.0
      %1031 = vmatprep.subr.mxu0 0.0
      %1032 = vmatpush1.msra.mxu0 0.0
      %1033 = vmatprep.subr.mxu0 0.0
      %1034 = vmatpush1.msra.mxu0 0.0
      %1035 = vmatprep.subr.mxu0 0.0
      %1036 = vmatpush1.msra.mxu0 0.0
      %1037 = vmatprep.subr.mxu0 0.0
      %1038 = vmatpush1.msra.mxu0 %v1005
      %1039 = vmatprep.subr.mxu0 0.0
      %1040 = vmatpush2.msra.mxu0 0.0
      %1041 = vmatprep.subr.mxu0 0.0
      %1042 = vmatpush2.msra.mxu0 0.0
      %1043 = vmatprep.subr.mxu0 0.0
      %1044 = vmatpush2.msra.mxu0 0.0
      %1045 = vmatprep.subr.mxu0 0.0
      %1046 = vmatpush2.msra.mxu0 0.0
      %1047 = vmatprep.subr.mxu0 0.0
      %1048 = vmatpush2.msra.mxu0 0.0
      %1049 = vmatprep.subr.mxu0 0.0
      %1050 = vmatpush2.msra.mxu0 0.0
      %1051 = vmatprep.subr.mxu0 0.0
      %1052 = vmatpush2.msra.mxu0 0.0
      %1053 = vmatprep.subr.mxu0 0.0
      %1054 = vmatpush2.msra.mxu0 0.0
      %1055 = vmatprep.subr.mxu0 0.0
      %1056 = vmatpush2.msra.mxu0 0.0
      %1057 = vmatprep.subr.mxu0 0.0
      %1058 = vmatpush2.msra.mxu0 0.0
      %1059 = vmatprep.subr.mxu0 0.0
      %1060 = vmatpush2.msra.mxu0 0.0
      %1061 = vmatprep.subr.mxu0 0.0
      %1062 = vmatpush2.msra.mxu0 0.0
      %1063 = vmatprep.subr.mxu0 0.0
      %1064 = vmatpush2.msra.mxu0 0.0
      %1065 = vmatprep.subr.mxu0 0.0
      %1066 = vmatpush2.msra.mxu0 0.0
      %1067 = vmatprep.subr.mxu0 0.0
      %1068 = vmatpush2.msra.mxu0 0.0
      %1069 = vmatprep.subr.mxu0 0.0
      %1070 = vmatpush2.msra.mxu0 0.0
      %1071 = vmatprep.mubr.f32.mxu0 0.0
      %1072 = vmatmul.mubr.f32.gmra.mxu0 %v611
      %v1073 = vpop.f32.mrf.mxu0
      %v1074 = vadd.f32 0.0, %v1073
      %v1075 = vpop.f32.mrf.mxu0
      %1076 = vmatprep.mubr.f32.mxu0 0.0
      %1077 = vmatmul.mubr.f32.gmra.mxu0 %v614
      %v1078 = vpop.f32.mrf.mxu0
      %v1079 = vadd.f32 0.0, %v1078
      %v1080 = vpop.f32.mrf.mxu0
      %1081 = vmatprep.mubr.f32.mxu0 0.0
      %1082 = vmatmul.mubr.f32.gmra.mxu0 %v617
      %v1083 = vpop.f32.mrf.mxu0
      %v1084 = vadd.f32 0.0, %v1083
      %v1085 = vpop.f32.mrf.mxu0
      %1086 = vmatprep.mubr.f32.mxu0 0.0
      %1087 = vmatmul.mubr.f32.gmra.mxu0 %v620
      %v1088 = vpop.f32.mrf.mxu0
      %v1089 = vadd.f32 0.0, %v1088
      %v1090 = vpop.f32.mrf.mxu0
      %1091 = vmatprep.mubr.f32.mxu0 0.0
      %1092 = vmatmul.mubr.f32.gmra.mxu0 %v623
      %v1093 = vpop.f32.mrf.mxu0
      %v1094 = vadd.f32 0.0, %v1093
      %v1095 = vpop.f32.mrf.mxu0
      %1096 = vmatprep.mubr.f32.mxu0 0.0
      %1097 = vmatmul.mubr.f32.gmra.mxu0 %v626
      %v1098 = vpop.f32.mrf.mxu0
      %v1099 = vadd.f32 0.0, %v1098
      %v1100 = vpop.f32.mrf.mxu0
      %1101 = vmatprep.mubr.f32.mxu0 0.0
      %1102 = vmatmul.mubr.f32.gmra.mxu0 %v629
      %v1103 = vpop.f32.mrf.mxu0
      %v1104 = vadd.f32 0.0, %v1103
      %v1105 = vpop.f32.mrf.mxu0
      %1106 = vmatprep.mubr.f32.mxu0 0.0
      %1107 = vmatmul.mubr.f32.gmra.mxu0 %v632
      %v1108 = vpop.f32.mrf.mxu0
      %v1109 = vadd.f32 0.0, %v1108
      %v1110 = vpop.f32.mrf.mxu0
      %1111 = vdwg.mxu0
      %v1112 = vadd.f32 %v964, %v1074
      %v1113 = vadd.f32 %v969, %v1079
      %v1114 = vadd.f32 %v974, %v1084
      %v1115 = vadd.f32 %v979, %v1089
      %v1116 = vadd.f32 %v984, %v1094
      %v1117 = vadd.f32 %v989, %v1099
      %v1118 = vadd.f32 %v994, %v1104
      %v1119 = vadd.f32 %v999, %v1109
      %v1120 = vld [vmem:[%s449 + $0x2] sm:$0xff]
      %v1121 = vld [vmem:[%s449 + $0x12] sm:$0xff]
      %v1122 = vld [vmem:[%s449 + $0x22] sm:$0xff]
      %v1123 = vld [vmem:[%s449 + $0x32] sm:$0xff]
      %v1124 = vld [vmem:[%s449 + $0x42] sm:$0xff]
      %v1125 = vld [vmem:[%s449 + $0x52] sm:$0xff]
      %v1126 = vld [vmem:[%s449 + $0x62] sm:$0xff]
      %v1127 = vld [vmem:[%s449 + $0x72] sm:$0xff]
      %s1128 = scalar_lea.vmem %s1, 28
      %v1129 = vld [vmem:[%s1128] sm:$0xf]
      %v1131 = vsel %vm181, %v1120, 0
      %v1134 = vsel %vm181, %v1121, 0
      %v1137 = vsel %vm181, %v1122, 0
      %v1140 = vsel %vm181, %v1123, 0
      %v1143 = vsel %vm181, %v1124, 0
      %v1146 = vsel %vm181, %v1125, 0
      %v1149 = vsel %vm181, %v1126, 0
      %v1152 = vsel %vm181, %v1127, 0
      %v1155 = vsel %vm206, %v1129, 0
      %1157 = vmatprep.subr.mxu0 0.0
      %1158 = vmatpush1.msra.mxu0 0.0
      %1159 = vmatprep.subr.mxu0 0.0
      %1160 = vmatpush1.msra.mxu0 0.0
      %1161 = vmatprep.subr.mxu0 0.0
      %1162 = vmatpush1.msra.mxu0 0.0
      %1163 = vmatprep.subr.mxu0 0.0
      %1164 = vmatpush1.msra.mxu0 0.0
      %1165 = vmatprep.subr.mxu0 0.0
      %1166 = vmatpush1.msra.mxu0 0.0
      %1167 = vmatprep.subr.mxu0 0.0
      %1168 = vmatpush1.msra.mxu0 0.0
      %1169 = vmatprep.subr.mxu0 0.0
      %1170 = vmatpush1.msra.mxu0 0.0
      %1171 = vmatprep.subr.mxu0 0.0
      %1172 = vmatpush1.msra.mxu0 0.0
      %1173 = vmatprep.subr.mxu0 0.0
      %1174 = vmatpush1.msra.mxu0 0.0
      %1175 = vmatprep.subr.mxu0 0.0
      %1176 = vmatpush1.msra.mxu0 0.0
      %1177 = vmatprep.subr.mxu0 0.0
      %1178 = vmatpush1.msra.mxu0 0.0
      %1179 = vmatprep.subr.mxu0 0.0
      %1180 = vmatpush1.msra.mxu0 0.0
      %1181 = vmatprep.subr.mxu0 0.0
      %1182 = vmatpush1.msra.mxu0 0.0
      %1183 = vmatprep.subr.mxu0 0.0
      %1184 = vmatpush1.msra.mxu0 0.0
      %1185 = vmatprep.subr.mxu0 0.0
      %1186 = vmatpush1.msra.mxu0 0.0
      %1187 = vmatprep.subr.mxu0 0.0
      %1188 = vmatpush1.msra.mxu0 %v1155
      %1189 = vmatprep.subr.mxu0 0.0
      %1190 = vmatpush2.msra.mxu0 0.0
      %1191 = vmatprep.subr.mxu0 0.0
      %1192 = vmatpush2.msra.mxu0 0.0
      %1193 = vmatprep.subr.mxu0 0.0
      %1194 = vmatpush2.msra.mxu0 0.0
      %1195 = vmatprep.subr.mxu0 0.0
      %1196 = vmatpush2.msra.mxu0 0.0
      %1197 = vmatprep.subr.mxu0 0.0
      %1198 = vmatpush2.msra.mxu0 0.0
      %1199 = vmatprep.subr.mxu0 0.0
      %1200 = vmatpush2.msra.mxu0 0.0
      %1201 = vmatprep.subr.mxu0 0.0
      %1202 = vmatpush2.msra.mxu0 0.0
      %1203 = vmatprep.subr.mxu0 0.0
      %1204 = vmatpush2.msra.mxu0 0.0
      %1205 = vmatprep.subr.mxu0 0.0
      %1206 = vmatpush2.msra.mxu0 0.0
      %1207 = vmatprep.subr.mxu0 0.0
      %1208 = vmatpush2.msra.mxu0 0.0
      %1209 = vmatprep.subr.mxu0 0.0
      %1210 = vmatpush2.msra.mxu0 0.0
      %1211 = vmatprep.subr.mxu0 0.0
      %1212 = vmatpush2.msra.mxu0 0.0
      %1213 = vmatprep.subr.mxu0 0.0
      %1214 = vmatpush2.msra.mxu0 0.0
      %1215 = vmatprep.subr.mxu0 0.0
      %1216 = vmatpush2.msra.mxu0 0.0
      %1217 = vmatprep.subr.mxu0 0.0
      %1218 = vmatpush2.msra.mxu0 0.0
      %1219 = vmatprep.subr.mxu0 0.0
      %1220 = vmatpush2.msra.mxu0 0.0
      %1221 = vmatprep.mubr.f32.mxu0 0.0
      %1222 = vmatmul.mubr.f32.gmra.mxu0 %v1131
      %v1223 = vpop.f32.mrf.mxu0
      %v1224 = vadd.f32 0.0, %v1223
      %v1225 = vpop.f32.mrf.mxu0
      %1226 = vmatprep.mubr.f32.mxu0 0.0
      %1227 = vmatmul.mubr.f32.gmra.mxu0 %v1134
      %v1228 = vpop.f32.mrf.mxu0
      %v1229 = vadd.f32 0.0, %v1228
      %v1230 = vpop.f32.mrf.mxu0
      %1231 = vmatprep.mubr.f32.mxu0 0.0
      %1232 = vmatmul.mubr.f32.gmra.mxu0 %v1137
      %v1233 = vpop.f32.mrf.mxu0
      %v1234 = vadd.f32 0.0, %v1233
      %v1235 = vpop.f32.mrf.mxu0
      %1236 = vmatprep.mubr.f32.mxu0 0.0
      %1237 = vmatmul.mubr.f32.gmra.mxu0 %v1140
      %v1238 = vpop.f32.mrf.mxu0
      %v1239 = vadd.f32 0.0, %v1238
      %v1240 = vpop.f32.mrf.mxu0
      %1241 = vmatprep.mubr.f32.mxu0 0.0
      %1242 = vmatmul.mubr.f32.gmra.mxu0 %v1143
      %v1243 = vpop.f32.mrf.mxu0
      %v1244 = vadd.f32 0.0, %v1243
      %v1245 = vpop.f32.mrf.mxu0
      %1246 = vmatprep.mubr.f32.mxu0 0.0
      %1247 = vmatmul.mubr.f32.gmra.mxu0 %v1146
      %v1248 = vpop.f32.mrf.mxu0
      %v1249 = vadd.f32 0.0, %v1248
      %v1250 = vpop.f32.mrf.mxu0
      %1251 = vmatprep.mubr.f32.mxu0 0.0
      %1252 = vmatmul.mubr.f32.gmra.mxu0 %v1149
      %v1253 = vpop.f32.mrf.mxu0
      %v1254 = vadd.f32 0.0, %v1253
      %v1255 = vpop.f32.mrf.mxu0
      %1256 = vmatprep.mubr.f32.mxu0 0.0
      %1257 = vmatmul.mubr.f32.gmra.mxu0 %v1152
      %v1258 = vpop.f32.mrf.mxu0
      %v1259 = vadd.f32 0.0, %v1258
      %v1260 = vpop.f32.mrf.mxu0
      %1261 = vdwg.mxu0
      %v1262 = vadd.f32 %v1112, %v1224
      %v1263 = vadd.f32 %v1113, %v1229
      %v1264 = vadd.f32 %v1114, %v1234
      %v1265 = vadd.f32 %v1115, %v1239
      %v1266 = vadd.f32 %v1116, %v1244
      %v1267 = vadd.f32 %v1117, %v1249
      %v1268 = vadd.f32 %v1118, %v1254
      %v1269 = vadd.f32 %v1119, %v1259
      %s1270 = scalar_lea.vmem %s1, 32
      %v1271 = vld [vmem:[%s1270] sm:$0xf]
      %s1272 = scalar_lea.vmem %s1, 36
      %v1273 = vld [vmem:[%s1272] sm:$0xf]
      %v1275 = vsel %vm206, %v1273, 0
      %1277 = vmatprep.subr.mxu0 0.0
      %1278 = vmatpush1.msra.mxu0 0.0
      %1279 = vmatprep.subr.mxu0 0.0
      %1280 = vmatpush1.msra.mxu0 0.0
      %1281 = vmatprep.subr.mxu0 0.0
      %1282 = vmatpush1.msra.mxu0 0.0
      %1283 = vmatprep.subr.mxu0 0.0
      %1284 = vmatpush1.msra.mxu0 0.0
      %1285 = vmatprep.subr.mxu0 0.0
      %1286 = vmatpush1.msra.mxu0 0.0
      %1287 = vmatprep.subr.mxu0 0.0
      %1288 = vmatpush1.msra.mxu0 0.0
      %1289 = vmatprep.subr.mxu0 0.0
      %1290 = vmatpush1.msra.mxu0 0.0
      %1291 = vmatprep.subr.mxu0 0.0
      %1292 = vmatpush1.msra.mxu0 0.0
      %1293 = vmatprep.subr.mxu0 0.0
      %1294 = vmatpush1.msra.mxu0 0.0
      %1295 = vmatprep.subr.mxu0 0.0
      %1296 = vmatpush1.msra.mxu0 0.0
      %1297 = vmatprep.subr.mxu0 0.0
      %1298 = vmatpush1.msra.mxu0 0.0
      %1299 = vmatprep.subr.mxu0 0.0
      %1300 = vmatpush1.msra.mxu0 0.0
      %1301 = vmatprep.subr.mxu0 0.0
      %1302 = vmatpush1.msra.mxu0 0.0
      %1303 = vmatprep.subr.mxu0 0.0
      %1304 = vmatpush1.msra.mxu0 0.0
      %1305 = vmatprep.subr.mxu0 0.0
      %1306 = vmatpush1.msra.mxu0 0.0
      %1307 = vmatprep.subr.mxu0 0.0
      %1308 = vmatpush1.msra.mxu0 %v1275
      %1309 = vmatprep.subr.mxu0 0.0
      %1310 = vmatpush2.msra.mxu0 0.0
      %1311 = vmatprep.subr.mxu0 0.0
      %1312 = vmatpush2.msra.mxu0 0.0
      %1313 = vmatprep.subr.mxu0 0.0
      %1314 = vmatpush2.msra.mxu0 0.0
      %1315 = vmatprep.subr.mxu0 0.0
      %1316 = vmatpush2.msra.mxu0 0.0
      %1317 = vmatprep.subr.mxu0 0.0
      %1318 = vmatpush2.msra.mxu0 0.0
      %1319 = vmatprep.subr.mxu0 0.0
      %1320 = vmatpush2.msra.mxu0 0.0
      %1321 = vmatprep.subr.mxu0 0.0
      %1322 = vmatpush2.msra.mxu0 0.0
      %1323 = vmatprep.subr.mxu0 0.0
      %1324 = vmatpush2.msra.mxu0 0.0
      %1325 = vmatprep.subr.mxu0 0.0
      %1326 = vmatpush2.msra.mxu0 0.0
      %1327 = vmatprep.subr.mxu0 0.0
      %1328 = vmatpush2.msra.mxu0 0.0
      %1329 = vmatprep.subr.mxu0 0.0
      %1330 = vmatpush2.msra.mxu0 0.0
      %1331 = vmatprep.subr.mxu0 0.0
      %1332 = vmatpush2.msra.mxu0 0.0
      %1333 = vmatprep.subr.mxu0 0.0
      %1334 = vmatpush2.msra.mxu0 0.0
      %1335 = vmatprep.subr.mxu0 0.0
      %1336 = vmatpush2.msra.mxu0 0.0
      %1337 = vmatprep.subr.mxu0 0.0
      %1338 = vmatpush2.msra.mxu0 0.0
      %1339 = vmatprep.subr.mxu0 0.0
      %1340 = vmatpush2.msra.mxu0 0.0
      %1341 = vmatprep.mubr.f32.mxu0 0.0
      %1342 = vmatmul.mubr.f32.gmra.mxu0 %v611
      %v1343 = vpop.f32.mrf.mxu0
      %v1344 = vadd.f32 0.0, %v1343
      %v1345 = vpop.f32.mrf.mxu0
      %1346 = vmatprep.mubr.f32.mxu0 0.0
      %1347 = vmatmul.mubr.f32.gmra.mxu0 %v614
      %v1348 = vpop.f32.mrf.mxu0
      %v1349 = vadd.f32 0.0, %v1348
      %v1350 = vpop.f32.mrf.mxu0
      %1351 = vmatprep.mubr.f32.mxu0 0.0
      %1352 = vmatmul.mubr.f32.gmra.mxu0 %v617
      %v1353 = vpop.f32.mrf.mxu0
      %v1354 = vadd.f32 0.0, %v1353
      %v1355 = vpop.f32.mrf.mxu0
      %1356 = vmatprep.mubr.f32.mxu0 0.0
      %1357 = vmatmul.mubr.f32.gmra.mxu0 %v620
      %v1358 = vpop.f32.mrf.mxu0
      %v1359 = vadd.f32 0.0, %v1358
      %v1360 = vpop.f32.mrf.mxu0
      %1361 = vmatprep.mubr.f32.mxu0 0.0
      %1362 = vmatmul.mubr.f32.gmra.mxu0 %v623
      %v1363 = vpop.f32.mrf.mxu0
      %v1364 = vadd.f32 0.0, %v1363
      %v1365 = vpop.f32.mrf.mxu0
      %1366 = vmatprep.mubr.f32.mxu0 0.0
      %1367 = vmatmul.mubr.f32.gmra.mxu0 %v626
      %v1368 = vpop.f32.mrf.mxu0
      %v1369 = vadd.f32 0.0, %v1368
      %v1370 = vpop.f32.mrf.mxu0
      %1371 = vmatprep.mubr.f32.mxu0 0.0
      %1372 = vmatmul.mubr.f32.gmra.mxu0 %v629
      %v1373 = vpop.f32.mrf.mxu0
      %v1374 = vadd.f32 0.0, %v1373
      %v1375 = vpop.f32.mrf.mxu0
      %1376 = vmatprep.mubr.f32.mxu0 0.0
      %1377 = vmatmul.mubr.f32.gmra.mxu0 %v632
      %v1378 = vpop.f32.mrf.mxu0
      %v1379 = vadd.f32 0.0, %v1378
      %v1380 = vpop.f32.mrf.mxu0
      %1381 = vdwg.mxu0
      %v1383 = vsel %vm206, %v1271, 0
      %1385 = vmatprep.subr.mxu0 0.0
      %1386 = vmatpush1.msra.mxu0 0.0
      %1387 = vmatprep.subr.mxu0 0.0
      %1388 = vmatpush1.msra.mxu0 0.0
      %1389 = vmatprep.subr.mxu0 0.0
      %1390 = vmatpush1.msra.mxu0 0.0
      %1391 = vmatprep.subr.mxu0 0.0
      %1392 = vmatpush1.msra.mxu0 0.0
      %1393 = vmatprep.subr.mxu0 0.0
      %1394 = vmatpush1.msra.mxu0 0.0
      %1395 = vmatprep.subr.mxu0 0.0
      %1396 = vmatpush1.msra.mxu0 0.0
      %1397 = vmatprep.subr.mxu0 0.0
      %1398 = vmatpush1.msra.mxu0 0.0
      %1399 = vmatprep.subr.mxu0 0.0
      %1400 = vmatpush1.msra.mxu0 0.0
      %1401 = vmatprep.subr.mxu0 0.0
      %1402 = vmatpush1.msra.mxu0 0.0
      %1403 = vmatprep.subr.mxu0 0.0
      %1404 = vmatpush1.msra.mxu0 0.0
      %1405 = vmatprep.subr.mxu0 0.0
      %1406 = vmatpush1.msra.mxu0 0.0
      %1407 = vmatprep.subr.mxu0 0.0
      %1408 = vmatpush1.msra.mxu0 0.0
      %1409 = vmatprep.subr.mxu0 0.0
      %1410 = vmatpush1.msra.mxu0 0.0
      %1411 = vmatprep.subr.mxu0 0.0
      %1412 = vmatpush1.msra.mxu0 0.0
      %1413 = vmatprep.subr.mxu0 0.0
      %1414 = vmatpush1.msra.mxu0 0.0
      %1415 = vmatprep.subr.mxu0 0.0
      %1416 = vmatpush1.msra.mxu0 %v1383
      %1417 = vmatprep.subr.mxu0 0.0
      %1418 = vmatpush2.msra.mxu0 0.0
      %1419 = vmatprep.subr.mxu0 0.0
      %1420 = vmatpush2.msra.mxu0 0.0
      %1421 = vmatprep.subr.mxu0 0.0
      %1422 = vmatpush2.msra.mxu0 0.0
      %1423 = vmatprep.subr.mxu0 0.0
      %1424 = vmatpush2.msra.mxu0 0.0
      %1425 = vmatprep.subr.mxu0 0.0
      %1426 = vmatpush2.msra.mxu0 0.0
      %1427 = vmatprep.subr.mxu0 0.0
      %1428 = vmatpush2.msra.mxu0 0.0
      %1429 = vmatprep.subr.mxu0 0.0
      %1430 = vmatpush2.msra.mxu0 0.0
      %1431 = vmatprep.subr.mxu0 0.0
      %1432 = vmatpush2.msra.mxu0 0.0
      %1433 = vmatprep.subr.mxu0 0.0
      %1434 = vmatpush2.msra.mxu0 0.0
      %1435 = vmatprep.subr.mxu0 0.0
      %1436 = vmatpush2.msra.mxu0 0.0
      %1437 = vmatprep.subr.mxu0 0.0
      %1438 = vmatpush2.msra.mxu0 0.0
      %1439 = vmatprep.subr.mxu0 0.0
      %1440 = vmatpush2.msra.mxu0 0.0
      %1441 = vmatprep.subr.mxu0 0.0
      %1442 = vmatpush2.msra.mxu0 0.0
      %1443 = vmatprep.subr.mxu0 0.0
      %1444 = vmatpush2.msra.mxu0 0.0
      %1445 = vmatprep.subr.mxu0 0.0
      %1446 = vmatpush2.msra.mxu0 0.0
      %1447 = vmatprep.subr.mxu0 0.0
      %1448 = vmatpush2.msra.mxu0 0.0
      %1449 = vmatprep.mubr.f32.mxu0 0.0
      %1450 = vmatmul.mubr.f32.gmra.mxu0 %v461
      %v1451 = vpop.f32.mrf.mxu0
      %v1452 = vadd.f32 %v1344, %v1451
      %v1453 = vpop.f32.mrf.mxu0
      %1454 = vmatprep.mubr.f32.mxu0 0.0
      %1455 = vmatmul.mubr.f32.gmra.mxu0 %v464
      %v1456 = vpop.f32.mrf.mxu0
      %v1457 = vadd.f32 %v1349, %v1456
      %v1458 = vpop.f32.mrf.mxu0
      %1459 = vmatprep.mubr.f32.mxu0 0.0
      %1460 = vmatmul.mubr.f32.gmra.mxu0 %v467
      %v1461 = vpop.f32.mrf.mxu0
      %v1462 = vadd.f32 %v1354, %v1461
      %v1463 = vpop.f32.mrf.mxu0
      %1464 = vmatprep.mubr.f32.mxu0 0.0
      %1465 = vmatmul.mubr.f32.gmra.mxu0 %v470
      %v1466 = vpop.f32.mrf.mxu0
      %v1467 = vadd.f32 %v1359, %v1466
      %v1468 = vpop.f32.mrf.mxu0
      %1469 = vmatprep.mubr.f32.mxu0 0.0
      %1470 = vmatmul.mubr.f32.gmra.mxu0 %v473
      %v1471 = vpop.f32.mrf.mxu0
      %v1472 = vadd.f32 %v1364, %v1471
      %v1473 = vpop.f32.mrf.mxu0
      %1474 = vmatprep.mubr.f32.mxu0 0.0
      %1475 = vmatmul.mubr.f32.gmra.mxu0 %v476
      %v1476 = vpop.f32.mrf.mxu0
      %v1477 = vadd.f32 %v1369, %v1476
      %v1478 = vpop.f32.mrf.mxu0
      %1479 = vmatprep.mubr.f32.mxu0 0.0
      %1480 = vmatmul.mubr.f32.gmra.mxu0 %v479
      %v1481 = vpop.f32.mrf.mxu0
      %v1482 = vadd.f32 %v1374, %v1481
      %v1483 = vpop.f32.mrf.mxu0
      %1484 = vmatprep.mubr.f32.mxu0 0.0
      %1485 = vmatmul.mubr.f32.gmra.mxu0 %v482
      %v1486 = vpop.f32.mrf.mxu0
      %v1487 = vadd.f32 %v1379, %v1486
      %v1488 = vpop.f32.mrf.mxu0
      %1489 = vdwg.mxu0
      %s1490 = sadd.s32 %s159, 2
      %s1491 = smul.u32 %s1490, 16
      %s1492 = scalar_lea.vmem %s152, %s1491
      %v1493 = vld [vmem:[%s1492] sm:$0xff]
      %v1494 = vld [vmem:[%s1492 + $0x10] sm:$0xff]
      %v1495 = vld [vmem:[%s1492 + $0x20] sm:$0xff]
      %v1496 = vld [vmem:[%s1492 + $0x30] sm:$0xff]
      %v1497 = vld [vmem:[%s1492 + $0x40] sm:$0xff]
      %v1498 = vld [vmem:[%s1492 + $0x50] sm:$0xff]
      %v1499 = vld [vmem:[%s1492 + $0x60] sm:$0xff]
      %v1500 = vld [vmem:[%s1492 + $0x70] sm:$0xff]
      %s1501 = scalar_lea.vmem %s1, 40
      %v1502 = vld [vmem:[%s1501] sm:$0xf]
      %v1504 = vsel %vm181, %v1493, 0
      %v1507 = vsel %vm181, %v1494, 0
      %v1510 = vsel %vm181, %v1495, 0
      %v1513 = vsel %vm181, %v1496, 0
      %v1516 = vsel %vm181, %v1497, 0
      %v1519 = vsel %vm181, %v1498, 0
      %v1522 = vsel %vm181, %v1499, 0
      %v1525 = vsel %vm181, %v1500, 0
      %v1528 = vsel %vm206, %v1502, 0
      %1530 = vmatprep.subr.mxu0 0.0
      %1531 = vmatpush1.msra.mxu0 0.0
      %1532 = vmatprep.subr.mxu0 0.0
      %1533 = vmatpush1.msra.mxu0 0.0
      %1534 = vmatprep.subr.mxu0 0.0
      %1535 = vmatpush1.msra.mxu0 0.0
      %1536 = vmatprep.subr.mxu0 0.0
      %1537 = vmatpush1.msra.mxu0 0.0
      %1538 = vmatprep.subr.mxu0 0.0
      %1539 = vmatpush1.msra.mxu0 0.0
      %1540 = vmatprep.subr.mxu0 0.0
      %1541 = vmatpush1.msra.mxu0 0.0
      %1542 = vmatprep.subr.mxu0 0.0
      %1543 = vmatpush1.msra.mxu0 0.0
      %1544 = vmatprep.subr.mxu0 0.0
      %1545 = vmatpush1.msra.mxu0 0.0
      %1546 = vmatprep.subr.mxu0 0.0
      %1547 = vmatpush1.msra.mxu0 0.0
      %1548 = vmatprep.subr.mxu0 0.0
      %1549 = vmatpush1.msra.mxu0 0.0
      %1550 = vmatprep.subr.mxu0 0.0
      %1551 = vmatpush1.msra.mxu0 0.0
      %1552 = vmatprep.subr.mxu0 0.0
      %1553 = vmatpush1.msra.mxu0 0.0
      %1554 = vmatprep.subr.mxu0 0.0
      %1555 = vmatpush1.msra.mxu0 0.0
      %1556 = vmatprep.subr.mxu0 0.0
      %1557 = vmatpush1.msra.mxu0 0.0
      %1558 = vmatprep.subr.mxu0 0.0
      %1559 = vmatpush1.msra.mxu0 0.0
      %1560 = vmatprep.subr.mxu0 0.0
      %1561 = vmatpush1.msra.mxu0 %v1528
      %1562 = vmatprep.subr.mxu0 0.0
      %1563 = vmatpush2.msra.mxu0 0.0
      %1564 = vmatprep.subr.mxu0 0.0
      %1565 = vmatpush2.msra.mxu0 0.0
      %1566 = vmatprep.subr.mxu0 0.0
      %1567 = vmatpush2.msra.mxu0 0.0
      %1568 = vmatprep.subr.mxu0 0.0
      %1569 = vmatpush2.msra.mxu0 0.0
      %1570 = vmatprep.subr.mxu0 0.0
      %1571 = vmatpush2.msra.mxu0 0.0
      %1572 = vmatprep.subr.mxu0 0.0
      %1573 = vmatpush2.msra.mxu0 0.0
      %1574 = vmatprep.subr.mxu0 0.0
      %1575 = vmatpush2.msra.mxu0 0.0
      %1576 = vmatprep.subr.mxu0 0.0
      %1577 = vmatpush2.msra.mxu0 0.0
      %1578 = vmatprep.subr.mxu0 0.0
      %1579 = vmatpush2.msra.mxu0 0.0
      %1580 = vmatprep.subr.mxu0 0.0
      %1581 = vmatpush2.msra.mxu0 0.0
      %1582 = vmatprep.subr.mxu0 0.0
      %1583 = vmatpush2.msra.mxu0 0.0
      %1584 = vmatprep.subr.mxu0 0.0
      %1585 = vmatpush2.msra.mxu0 0.0
      %1586 = vmatprep.subr.mxu0 0.0
      %1587 = vmatpush2.msra.mxu0 0.0
      %1588 = vmatprep.subr.mxu0 0.0
      %1589 = vmatpush2.msra.mxu0 0.0
      %1590 = vmatprep.subr.mxu0 0.0
      %1591 = vmatpush2.msra.mxu0 0.0
      %1592 = vmatprep.subr.mxu0 0.0
      %1593 = vmatpush2.msra.mxu0 0.0
      %1594 = vmatprep.mubr.f32.mxu0 0.0
      %1595 = vmatmul.mubr.f32.gmra.mxu0 %v1504
      %v1596 = vpop.f32.mrf.mxu0
      %v1597 = vadd.f32 0.0, %v1596
      %v1598 = vpop.f32.mrf.mxu0
      %1599 = vmatprep.mubr.f32.mxu0 0.0
      %1600 = vmatmul.mubr.f32.gmra.mxu0 %v1507
      %v1601 = vpop.f32.mrf.mxu0
      %v1602 = vadd.f32 0.0, %v1601
      %v1603 = vpop.f32.mrf.mxu0
      %1604 = vmatprep.mubr.f32.mxu0 0.0
      %1605 = vmatmul.mubr.f32.gmra.mxu0 %v1510
      %v1606 = vpop.f32.mrf.mxu0
      %v1607 = vadd.f32 0.0, %v1606
      %v1608 = vpop.f32.mrf.mxu0
      %1609 = vmatprep.mubr.f32.mxu0 0.0
      %1610 = vmatmul.mubr.f32.gmra.mxu0 %v1513
      %v1611 = vpop.f32.mrf.mxu0
      %v1612 = vadd.f32 0.0, %v1611
      %v1613 = vpop.f32.mrf.mxu0
      %1614 = vmatprep.mubr.f32.mxu0 0.0
      %1615 = vmatmul.mubr.f32.gmra.mxu0 %v1516
      %v1616 = vpop.f32.mrf.mxu0
      %v1617 = vadd.f32 0.0, %v1616
      %v1618 = vpop.f32.mrf.mxu0
      %1619 = vmatprep.mubr.f32.mxu0 0.0
      %1620 = vmatmul.mubr.f32.gmra.mxu0 %v1519
      %v1621 = vpop.f32.mrf.mxu0
      %v1622 = vadd.f32 0.0, %v1621
      %v1623 = vpop.f32.mrf.mxu0
      %1624 = vmatprep.mubr.f32.mxu0 0.0
      %1625 = vmatmul.mubr.f32.gmra.mxu0 %v1522
      %v1626 = vpop.f32.mrf.mxu0
      %v1627 = vadd.f32 0.0, %v1626
      %v1628 = vpop.f32.mrf.mxu0
      %1629 = vmatprep.mubr.f32.mxu0 0.0
      %1630 = vmatmul.mubr.f32.gmra.mxu0 %v1525
      %v1631 = vpop.f32.mrf.mxu0
      %v1632 = vadd.f32 0.0, %v1631
      %v1633 = vpop.f32.mrf.mxu0
      %1634 = vdwg.mxu0
      %v1635 = vadd.f32 %v1452, %v1597
      %v1636 = vadd.f32 %v1457, %v1602
      %v1637 = vadd.f32 %v1462, %v1607
      %v1638 = vadd.f32 %v1467, %v1612
      %v1639 = vadd.f32 %v1472, %v1617
      %v1640 = vadd.f32 %v1477, %v1622
      %v1641 = vadd.f32 %v1482, %v1627
      %v1642 = vadd.f32 %v1487, %v1632
      %v1643 = vld [vmem:[%s1492 + $0x1] sm:$0xff]
      %v1644 = vld [vmem:[%s1492 + $0x11] sm:$0xff]
      %v1645 = vld [vmem:[%s1492 + $0x21] sm:$0xff]
      %v1646 = vld [vmem:[%s1492 + $0x31] sm:$0xff]
      %v1647 = vld [vmem:[%s1492 + $0x41] sm:$0xff]
      %v1648 = vld [vmem:[%s1492 + $0x51] sm:$0xff]
      %v1649 = vld [vmem:[%s1492 + $0x61] sm:$0xff]
      %v1650 = vld [vmem:[%s1492 + $0x71] sm:$0xff]
      %s1651 = scalar_lea.vmem %s1, 44
      %v1652 = vld [vmem:[%s1651] sm:$0xf]
      %v1654 = vsel %vm181, %v1643, 0
      %v1657 = vsel %vm181, %v1644, 0
      %v1660 = vsel %vm181, %v1645, 0
      %v1663 = vsel %vm181, %v1646, 0
      %v1666 = vsel %vm181, %v1647, 0
      %v1669 = vsel %vm181, %v1648, 0
      %v1672 = vsel %vm181, %v1649, 0
      %v1675 = vsel %vm181, %v1650, 0
      %v1678 = vsel %vm206, %v1652, 0
      %1680 = vmatprep.subr.mxu0 0.0
      %1681 = vmatpush1.msra.mxu0 0.0
      %1682 = vmatprep.subr.mxu0 0.0
      %1683 = vmatpush1.msra.mxu0 0.0
      %1684 = vmatprep.subr.mxu0 0.0
      %1685 = vmatpush1.msra.mxu0 0.0
      %1686 = vmatprep.subr.mxu0 0.0
      %1687 = vmatpush1.msra.mxu0 0.0
      %1688 = vmatprep.subr.mxu0 0.0
      %1689 = vmatpush1.msra.mxu0 0.0
      %1690 = vmatprep.subr.mxu0 0.0
      %1691 = vmatpush1.msra.mxu0 0.0
      %1692 = vmatprep.subr.mxu0 0.0
      %1693 = vmatpush1.msra.mxu0 0.0
      %1694 = vmatprep.subr.mxu0 0.0
      %1695 = vmatpush1.msra.mxu0 0.0
      %1696 = vmatprep.subr.mxu0 0.0
      %1697 = vmatpush1.msra.mxu0 0.0
      %1698 = vmatprep.subr.mxu0 0.0
      %1699 = vmatpush1.msra.mxu0 0.0
      %1700 = vmatprep.subr.mxu0 0.0
      %1701 = vmatpush1.msra.mxu0 0.0
      %1702 = vmatprep.subr.mxu0 0.0
      %1703 = vmatpush1.msra.mxu0 0.0
      %1704 = vmatprep.subr.mxu0 0.0
      %1705 = vmatpush1.msra.mxu0 0.0
      %1706 = vmatprep.subr.mxu0 0.0
      %1707 = vmatpush1.msra.mxu0 0.0
      %1708 = vmatprep.subr.mxu0 0.0
      %1709 = vmatpush1.msra.mxu0 0.0
      %1710 = vmatprep.subr.mxu0 0.0
      %1711 = vmatpush1.msra.mxu0 %v1678
      %1712 = vmatprep.subr.mxu0 0.0
      %1713 = vmatpush2.msra.mxu0 0.0
      %1714 = vmatprep.subr.mxu0 0.0
      %1715 = vmatpush2.msra.mxu0 0.0
      %1716 = vmatprep.subr.mxu0 0.0
      %1717 = vmatpush2.msra.mxu0 0.0
      %1718 = vmatprep.subr.mxu0 0.0
      %1719 = vmatpush2.msra.mxu0 0.0
      %1720 = vmatprep.subr.mxu0 0.0
      %1721 = vmatpush2.msra.mxu0 0.0
      %1722 = vmatprep.subr.mxu0 0.0
      %1723 = vmatpush2.msra.mxu0 0.0
      %1724 = vmatprep.subr.mxu0 0.0
      %1725 = vmatpush2.msra.mxu0 0.0
      %1726 = vmatprep.subr.mxu0 0.0
      %1727 = vmatpush2.msra.mxu0 0.0
      %1728 = vmatprep.subr.mxu0 0.0
      %1729 = vmatpush2.msra.mxu0 0.0
      %1730 = vmatprep.subr.mxu0 0.0
      %1731 = vmatpush2.msra.mxu0 0.0
      %1732 = vmatprep.subr.mxu0 0.0
      %1733 = vmatpush2.msra.mxu0 0.0
      %1734 = vmatprep.subr.mxu0 0.0
      %1735 = vmatpush2.msra.mxu0 0.0
      %1736 = vmatprep.subr.mxu0 0.0
      %1737 = vmatpush2.msra.mxu0 0.0
      %1738 = vmatprep.subr.mxu0 0.0
      %1739 = vmatpush2.msra.mxu0 0.0
      %1740 = vmatprep.subr.mxu0 0.0
      %1741 = vmatpush2.msra.mxu0 0.0
      %1742 = vmatprep.subr.mxu0 0.0
      %1743 = vmatpush2.msra.mxu0 0.0
      %1744 = vmatprep.mubr.f32.mxu0 0.0
      %1745 = vmatmul.mubr.f32.gmra.mxu0 %v1654
      %v1746 = vpop.f32.mrf.mxu0
      %v1747 = vadd.f32 0.0, %v1746
      %v1748 = vpop.f32.mrf.mxu0
      %1749 = vmatprep.mubr.f32.mxu0 0.0
      %1750 = vmatmul.mubr.f32.gmra.mxu0 %v1657
      %v1751 = vpop.f32.mrf.mxu0
      %v1752 = vadd.f32 0.0, %v1751
      %v1753 = vpop.f32.mrf.mxu0
      %1754 = vmatprep.mubr.f32.mxu0 0.0
      %1755 = vmatmul.mubr.f32.gmra.mxu0 %v1660
      %v1756 = vpop.f32.mrf.mxu0
      %v1757 = vadd.f32 0.0, %v1756
      %v1758 = vpop.f32.mrf.mxu0
      %1759 = vmatprep.mubr.f32.mxu0 0.0
      %1760 = vmatmul.mubr.f32.gmra.mxu0 %v1663
      %v1761 = vpop.f32.mrf.mxu0
      %v1762 = vadd.f32 0.0, %v1761
      %v1763 = vpop.f32.mrf.mxu0
      %1764 = vmatprep.mubr.f32.mxu0 0.0
      %1765 = vmatmul.mubr.f32.gmra.mxu0 %v1666
      %v1766 = vpop.f32.mrf.mxu0
      %v1767 = vadd.f32 0.0, %v1766
      %v1768 = vpop.f32.mrf.mxu0
      %1769 = vmatprep.mubr.f32.mxu0 0.0
      %1770 = vmatmul.mubr.f32.gmra.mxu0 %v1669
      %v1771 = vpop.f32.mrf.mxu0
      %v1772 = vadd.f32 0.0, %v1771
      %v1773 = vpop.f32.mrf.mxu0
      %1774 = vmatprep.mubr.f32.mxu0 0.0
      %1775 = vmatmul.mubr.f32.gmra.mxu0 %v1672
      %v1776 = vpop.f32.mrf.mxu0
      %v1777 = vadd.f32 0.0, %v1776
      %v1778 = vpop.f32.mrf.mxu0
      %1779 = vmatprep.mubr.f32.mxu0 0.0
      %1780 = vmatmul.mubr.f32.gmra.mxu0 %v1675
      %v1781 = vpop.f32.mrf.mxu0
      %v1782 = vadd.f32 0.0, %v1781
      %v1783 = vpop.f32.mrf.mxu0
      %1784 = vdwg.mxu0
      %v1785 = vadd.f32 %v1635, %v1747
      %v1786 = vadd.f32 %v1636, %v1752
      %v1787 = vadd.f32 %v1637, %v1757
      %v1788 = vadd.f32 %v1638, %v1762
      %v1789 = vadd.f32 %v1639, %v1767
      %v1790 = vadd.f32 %v1640, %v1772
      %v1791 = vadd.f32 %v1641, %v1777
      %v1792 = vadd.f32 %v1642, %v1782
      %s1793 = scalar_lea.vmem %s1, 48
      %v1794 = vld [vmem:[%s1793] sm:$0xf]
      %s1795 = scalar_lea.vmem %s1, 52
      %v1796 = vld [vmem:[%s1795] sm:$0xf]
      %v1798 = vsel %vm206, %v1796, 0
      %1800 = vmatprep.subr.mxu0 0.0
      %1801 = vmatpush1.msra.mxu0 0.0
      %1802 = vmatprep.subr.mxu0 0.0
      %1803 = vmatpush1.msra.mxu0 0.0
      %1804 = vmatprep.subr.mxu0 0.0
      %1805 = vmatpush1.msra.mxu0 0.0
      %1806 = vmatprep.subr.mxu0 0.0
      %1807 = vmatpush1.msra.mxu0 0.0
      %1808 = vmatprep.subr.mxu0 0.0
      %1809 = vmatpush1.msra.mxu0 0.0
      %1810 = vmatprep.subr.mxu0 0.0
      %1811 = vmatpush1.msra.mxu0 0.0
      %1812 = vmatprep.subr.mxu0 0.0
      %1813 = vmatpush1.msra.mxu0 0.0
      %1814 = vmatprep.subr.mxu0 0.0
      %1815 = vmatpush1.msra.mxu0 0.0
      %1816 = vmatprep.subr.mxu0 0.0
      %1817 = vmatpush1.msra.mxu0 0.0
      %1818 = vmatprep.subr.mxu0 0.0
      %1819 = vmatpush1.msra.mxu0 0.0
      %1820 = vmatprep.subr.mxu0 0.0
      %1821 = vmatpush1.msra.mxu0 0.0
      %1822 = vmatprep.subr.mxu0 0.0
      %1823 = vmatpush1.msra.mxu0 0.0
      %1824 = vmatprep.subr.mxu0 0.0
      %1825 = vmatpush1.msra.mxu0 0.0
      %1826 = vmatprep.subr.mxu0 0.0
      %1827 = vmatpush1.msra.mxu0 0.0
      %1828 = vmatprep.subr.mxu0 0.0
      %1829 = vmatpush1.msra.mxu0 0.0
      %1830 = vmatprep.subr.mxu0 0.0
      %1831 = vmatpush1.msra.mxu0 %v1798
      %1832 = vmatprep.subr.mxu0 0.0
      %1833 = vmatpush2.msra.mxu0 0.0
      %1834 = vmatprep.subr.mxu0 0.0
      %1835 = vmatpush2.msra.mxu0 0.0
      %1836 = vmatprep.subr.mxu0 0.0
      %1837 = vmatpush2.msra.mxu0 0.0
      %1838 = vmatprep.subr.mxu0 0.0
      %1839 = vmatpush2.msra.mxu0 0.0
      %1840 = vmatprep.subr.mxu0 0.0
      %1841 = vmatpush2.msra.mxu0 0.0
      %1842 = vmatprep.subr.mxu0 0.0
      %1843 = vmatpush2.msra.mxu0 0.0
      %1844 = vmatprep.subr.mxu0 0.0
      %1845 = vmatpush2.msra.mxu0 0.0
      %1846 = vmatprep.subr.mxu0 0.0
      %1847 = vmatpush2.msra.mxu0 0.0
      %1848 = vmatprep.subr.mxu0 0.0
      %1849 = vmatpush2.msra.mxu0 0.0
      %1850 = vmatprep.subr.mxu0 0.0
      %1851 = vmatpush2.msra.mxu0 0.0
      %1852 = vmatprep.subr.mxu0 0.0
      %1853 = vmatpush2.msra.mxu0 0.0
      %1854 = vmatprep.subr.mxu0 0.0
      %1855 = vmatpush2.msra.mxu0 0.0
      %1856 = vmatprep.subr.mxu0 0.0
      %1857 = vmatpush2.msra.mxu0 0.0
      %1858 = vmatprep.subr.mxu0 0.0
      %1859 = vmatpush2.msra.mxu0 0.0
      %1860 = vmatprep.subr.mxu0 0.0
      %1861 = vmatpush2.msra.mxu0 0.0
      %1862 = vmatprep.subr.mxu0 0.0
      %1863 = vmatpush2.msra.mxu0 0.0
      %1864 = vmatprep.mubr.f32.mxu0 0.0
      %1865 = vmatmul.mubr.f32.gmra.mxu0 %v1131
      %v1866 = vpop.f32.mrf.mxu0
      %v1867 = vadd.f32 0.0, %v1866
      %v1868 = vpop.f32.mrf.mxu0
      %1869 = vmatprep.mubr.f32.mxu0 0.0
      %1870 = vmatmul.mubr.f32.gmra.mxu0 %v1134
      %v1871 = vpop.f32.mrf.mxu0
      %v1872 = vadd.f32 0.0, %v1871
      %v1873 = vpop.f32.mrf.mxu0
      %1874 = vmatprep.mubr.f32.mxu0 0.0
      %1875 = vmatmul.mubr.f32.gmra.mxu0 %v1137
      %v1876 = vpop.f32.mrf.mxu0
      %v1877 = vadd.f32 0.0, %v1876
      %v1878 = vpop.f32.mrf.mxu0
      %1879 = vmatprep.mubr.f32.mxu0 0.0
      %1880 = vmatmul.mubr.f32.gmra.mxu0 %v1140
      %v1881 = vpop.f32.mrf.mxu0
      %v1882 = vadd.f32 0.0, %v1881
      %v1883 = vpop.f32.mrf.mxu0
      %1884 = vmatprep.mubr.f32.mxu0 0.0
      %1885 = vmatmul.mubr.f32.gmra.mxu0 %v1143
      %v1886 = vpop.f32.mrf.mxu0
      %v1887 = vadd.f32 0.0, %v1886
      %v1888 = vpop.f32.mrf.mxu0
      %1889 = vmatprep.mubr.f32.mxu0 0.0
      %1890 = vmatmul.mubr.f32.gmra.mxu0 %v1146
      %v1891 = vpop.f32.mrf.mxu0
      %v1892 = vadd.f32 0.0, %v1891
      %v1893 = vpop.f32.mrf.mxu0
      %1894 = vmatprep.mubr.f32.mxu0 0.0
      %1895 = vmatmul.mubr.f32.gmra.mxu0 %v1149
      %v1896 = vpop.f32.mrf.mxu0
      %v1897 = vadd.f32 0.0, %v1896
      %v1898 = vpop.f32.mrf.mxu0
      %1899 = vmatprep.mubr.f32.mxu0 0.0
      %1900 = vmatmul.mubr.f32.gmra.mxu0 %v1152
      %v1901 = vpop.f32.mrf.mxu0
      %v1902 = vadd.f32 0.0, %v1901
      %v1903 = vpop.f32.mrf.mxu0
      %1904 = vdwg.mxu0
      %v1906 = vsel %vm206, %v1794, 0
      %1908 = vmatprep.subr.mxu0 0.0
      %1909 = vmatpush1.msra.mxu0 0.0
      %1910 = vmatprep.subr.mxu0 0.0
      %1911 = vmatpush1.msra.mxu0 0.0
      %1912 = vmatprep.subr.mxu0 0.0
      %1913 = vmatpush1.msra.mxu0 0.0
      %1914 = vmatprep.subr.mxu0 0.0
      %1915 = vmatpush1.msra.mxu0 0.0
      %1916 = vmatprep.subr.mxu0 0.0
      %1917 = vmatpush1.msra.mxu0 0.0
      %1918 = vmatprep.subr.mxu0 0.0
      %1919 = vmatpush1.msra.mxu0 0.0
      %1920 = vmatprep.subr.mxu0 0.0
      %1921 = vmatpush1.msra.mxu0 0.0
      %1922 = vmatprep.subr.mxu0 0.0
      %1923 = vmatpush1.msra.mxu0 0.0
      %1924 = vmatprep.subr.mxu0 0.0
      %1925 = vmatpush1.msra.mxu0 0.0
      %1926 = vmatprep.subr.mxu0 0.0
      %1927 = vmatpush1.msra.mxu0 0.0
      %1928 = vmatprep.subr.mxu0 0.0
      %1929 = vmatpush1.msra.mxu0 0.0
      %1930 = vmatprep.subr.mxu0 0.0
      %1931 = vmatpush1.msra.mxu0 0.0
      %1932 = vmatprep.subr.mxu0 0.0
      %1933 = vmatpush1.msra.mxu0 0.0
      %1934 = vmatprep.subr.mxu0 0.0
      %1935 = vmatpush1.msra.mxu0 0.0
      %1936 = vmatprep.subr.mxu0 0.0
      %1937 = vmatpush1.msra.mxu0 0.0
      %1938 = vmatprep.subr.mxu0 0.0
      %1939 = vmatpush1.msra.mxu0 %v1906
      %1940 = vmatprep.subr.mxu0 0.0
      %1941 = vmatpush2.msra.mxu0 0.0
      %1942 = vmatprep.subr.mxu0 0.0
      %1943 = vmatpush2.msra.mxu0 0.0
      %1944 = vmatprep.subr.mxu0 0.0
      %1945 = vmatpush2.msra.mxu0 0.0
      %1946 = vmatprep.subr.mxu0 0.0
      %1947 = vmatpush2.msra.mxu0 0.0
      %1948 = vmatprep.subr.mxu0 0.0
      %1949 = vmatpush2.msra.mxu0 0.0
      %1950 = vmatprep.subr.mxu0 0.0
      %1951 = vmatpush2.msra.mxu0 0.0
      %1952 = vmatprep.subr.mxu0 0.0
      %1953 = vmatpush2.msra.mxu0 0.0
      %1954 = vmatprep.subr.mxu0 0.0
      %1955 = vmatpush2.msra.mxu0 0.0
      %1956 = vmatprep.subr.mxu0 0.0
      %1957 = vmatpush2.msra.mxu0 0.0
      %1958 = vmatprep.subr.mxu0 0.0
      %1959 = vmatpush2.msra.mxu0 0.0
      %1960 = vmatprep.subr.mxu0 0.0
      %1961 = vmatpush2.msra.mxu0 0.0
      %1962 = vmatprep.subr.mxu0 0.0
      %1963 = vmatpush2.msra.mxu0 0.0
      %1964 = vmatprep.subr.mxu0 0.0
      %1965 = vmatpush2.msra.mxu0 0.0
      %1966 = vmatprep.subr.mxu0 0.0
      %1967 = vmatpush2.msra.mxu0 0.0
      %1968 = vmatprep.subr.mxu0 0.0
      %1969 = vmatpush2.msra.mxu0 0.0
      %1970 = vmatprep.subr.mxu0 0.0
      %1971 = vmatpush2.msra.mxu0 0.0
      %1972 = vmatprep.mubr.f32.mxu0 0.0
      %1973 = vmatmul.mubr.f32.gmra.mxu0 %v611
      %v1974 = vpop.f32.mrf.mxu0
      %v1975 = vadd.f32 %v1867, %v1974
      %v1976 = vpop.f32.mrf.mxu0
      %1977 = vmatprep.mubr.f32.mxu0 0.0
      %1978 = vmatmul.mubr.f32.gmra.mxu0 %v614
      %v1979 = vpop.f32.mrf.mxu0
      %v1980 = vadd.f32 %v1872, %v1979
      %v1981 = vpop.f32.mrf.mxu0
      %1982 = vmatprep.mubr.f32.mxu0 0.0
      %1983 = vmatmul.mubr.f32.gmra.mxu0 %v617
      %v1984 = vpop.f32.mrf.mxu0
      %v1985 = vadd.f32 %v1877, %v1984
      %v1986 = vpop.f32.mrf.mxu0
      %1987 = vmatprep.mubr.f32.mxu0 0.0
      %1988 = vmatmul.mubr.f32.gmra.mxu0 %v620
      %v1989 = vpop.f32.mrf.mxu0
      %v1990 = vadd.f32 %v1882, %v1989
      %v1991 = vpop.f32.mrf.mxu0
      %1992 = vmatprep.mubr.f32.mxu0 0.0
      %1993 = vmatmul.mubr.f32.gmra.mxu0 %v623
      %v1994 = vpop.f32.mrf.mxu0
      %v1995 = vadd.f32 %v1887, %v1994
      %v1996 = vpop.f32.mrf.mxu0
      %1997 = vmatprep.mubr.f32.mxu0 0.0
      %1998 = vmatmul.mubr.f32.gmra.mxu0 %v626
      %v1999 = vpop.f32.mrf.mxu0
      %v2000 = vadd.f32 %v1892, %v1999
      %v2001 = vpop.f32.mrf.mxu0
      %2002 = vmatprep.mubr.f32.mxu0 0.0
      %2003 = vmatmul.mubr.f32.gmra.mxu0 %v629
      %v2004 = vpop.f32.mrf.mxu0
      %v2005 = vadd.f32 %v1897, %v2004
      %v2006 = vpop.f32.mrf.mxu0
      %2007 = vmatprep.mubr.f32.mxu0 0.0
      %2008 = vmatmul.mubr.f32.gmra.mxu0 %v632
      %v2009 = vpop.f32.mrf.mxu0
      %v2010 = vadd.f32 %v1902, %v2009
      %v2011 = vpop.f32.mrf.mxu0
      %2012 = vdwg.mxu0
      %s2013 = scalar_lea.vmem %s1, 56
      %v2014 = vld [vmem:[%s2013] sm:$0xf]
      %v2016 = vsel %vm206, %v2014, 0
      %2018 = vmatprep.subr.mxu0 0.0
      %2019 = vmatpush1.msra.mxu0 0.0
      %2020 = vmatprep.subr.mxu0 0.0
      %2021 = vmatpush1.msra.mxu0 0.0
      %2022 = vmatprep.subr.mxu0 0.0
      %2023 = vmatpush1.msra.mxu0 0.0
      %2024 = vmatprep.subr.mxu0 0.0
      %2025 = vmatpush1.msra.mxu0 0.0
      %2026 = vmatprep.subr.mxu0 0.0
      %2027 = vmatpush1.msra.mxu0 0.0
      %2028 = vmatprep.subr.mxu0 0.0
      %2029 = vmatpush1.msra.mxu0 0.0
      %2030 = vmatprep.subr.mxu0 0.0
      %2031 = vmatpush1.msra.mxu0 0.0
      %2032 = vmatprep.subr.mxu0 0.0
      %2033 = vmatpush1.msra.mxu0 0.0
      %2034 = vmatprep.subr.mxu0 0.0
      %2035 = vmatpush1.msra.mxu0 0.0
      %2036 = vmatprep.subr.mxu0 0.0
      %2037 = vmatpush1.msra.mxu0 0.0
      %2038 = vmatprep.subr.mxu0 0.0
      %2039 = vmatpush1.msra.mxu0 0.0
      %2040 = vmatprep.subr.mxu0 0.0
      %2041 = vmatpush1.msra.mxu0 0.0
      %2042 = vmatprep.subr.mxu0 0.0
      %2043 = vmatpush1.msra.mxu0 0.0
      %2044 = vmatprep.subr.mxu0 0.0
      %2045 = vmatpush1.msra.mxu0 0.0
      %2046 = vmatprep.subr.mxu0 0.0
      %2047 = vmatpush1.msra.mxu0 0.0
      %2048 = vmatprep.subr.mxu0 0.0
      %2049 = vmatpush1.msra.mxu0 %v2016
      %2050 = vmatprep.subr.mxu0 0.0
      %2051 = vmatpush2.msra.mxu0 0.0
      %2052 = vmatprep.subr.mxu0 0.0
      %2053 = vmatpush2.msra.mxu0 0.0
      %2054 = vmatprep.subr.mxu0 0.0
      %2055 = vmatpush2.msra.mxu0 0.0
      %2056 = vmatprep.subr.mxu0 0.0
      %2057 = vmatpush2.msra.mxu0 0.0
      %2058 = vmatprep.subr.mxu0 0.0
      %2059 = vmatpush2.msra.mxu0 0.0
      %2060 = vmatprep.subr.mxu0 0.0
      %2061 = vmatpush2.msra.mxu0 0.0
      %2062 = vmatprep.subr.mxu0 0.0
      %2063 = vmatpush2.msra.mxu0 0.0
      %2064 = vmatprep.subr.mxu0 0.0
      %2065 = vmatpush2.msra.mxu0 0.0
      %2066 = vmatprep.subr.mxu0 0.0
      %2067 = vmatpush2.msra.mxu0 0.0
      %2068 = vmatprep.subr.mxu0 0.0
      %2069 = vmatpush2.msra.mxu0 0.0
      %2070 = vmatprep.subr.mxu0 0.0
      %2071 = vmatpush2.msra.mxu0 0.0
      %2072 = vmatprep.subr.mxu0 0.0
      %2073 = vmatpush2.msra.mxu0 0.0
      %2074 = vmatprep.subr.mxu0 0.0
      %2075 = vmatpush2.msra.mxu0 0.0
      %2076 = vmatprep.subr.mxu0 0.0
      %2077 = vmatpush2.msra.mxu0 0.0
      %2078 = vmatprep.subr.mxu0 0.0
      %2079 = vmatpush2.msra.mxu0 0.0
      %2080 = vmatprep.subr.mxu0 0.0
      %2081 = vmatpush2.msra.mxu0 0.0
      %2082 = vmatprep.mubr.f32.mxu0 0.0
      %2083 = vmatmul.mubr.f32.gmra.mxu0 %v1654
      %v2084 = vpop.f32.mrf.mxu0
      %v2085 = vadd.f32 0.0, %v2084
      %v2086 = vpop.f32.mrf.mxu0
      %2087 = vmatprep.mubr.f32.mxu0 0.0
      %2088 = vmatmul.mubr.f32.gmra.mxu0 %v1657
      %v2089 = vpop.f32.mrf.mxu0
      %v2090 = vadd.f32 0.0, %v2089
      %v2091 = vpop.f32.mrf.mxu0
      %2092 = vmatprep.mubr.f32.mxu0 0.0
      %2093 = vmatmul.mubr.f32.gmra.mxu0 %v1660
      %v2094 = vpop.f32.mrf.mxu0
      %v2095 = vadd.f32 0.0, %v2094
      %v2096 = vpop.f32.mrf.mxu0
      %2097 = vmatprep.mubr.f32.mxu0 0.0
      %2098 = vmatmul.mubr.f32.gmra.mxu0 %v1663
      %v2099 = vpop.f32.mrf.mxu0
      %v2100 = vadd.f32 0.0, %v2099
      %v2101 = vpop.f32.mrf.mxu0
      %2102 = vmatprep.mubr.f32.mxu0 0.0
      %2103 = vmatmul.mubr.f32.gmra.mxu0 %v1666
      %v2104 = vpop.f32.mrf.mxu0
      %v2105 = vadd.f32 0.0, %v2104
      %v2106 = vpop.f32.mrf.mxu0
      %2107 = vmatprep.mubr.f32.mxu0 0.0
      %2108 = vmatmul.mubr.f32.gmra.mxu0 %v1669
      %v2109 = vpop.f32.mrf.mxu0
      %v2110 = vadd.f32 0.0, %v2109
      %v2111 = vpop.f32.mrf.mxu0
      %2112 = vmatprep.mubr.f32.mxu0 0.0
      %2113 = vmatmul.mubr.f32.gmra.mxu0 %v1672
      %v2114 = vpop.f32.mrf.mxu0
      %v2115 = vadd.f32 0.0, %v2114
      %v2116 = vpop.f32.mrf.mxu0
      %2117 = vmatprep.mubr.f32.mxu0 0.0
      %2118 = vmatmul.mubr.f32.gmra.mxu0 %v1675
      %v2119 = vpop.f32.mrf.mxu0
      %v2120 = vadd.f32 0.0, %v2119
      %v2121 = vpop.f32.mrf.mxu0
      %2122 = vdwg.mxu0
      %v2123 = vadd.f32 %v1975, %v2085
      %v2124 = vadd.f32 %v1980, %v2090
      %v2125 = vadd.f32 %v1985, %v2095
      %v2126 = vadd.f32 %v1990, %v2100
      %v2127 = vadd.f32 %v1995, %v2105
      %v2128 = vadd.f32 %v2000, %v2110
      %v2129 = vadd.f32 %v2005, %v2115
      %v2130 = vadd.f32 %v2010, %v2120
      %v2131 = vld [vmem:[%s1492 + $0x2] sm:$0xff]
      %v2132 = vld [vmem:[%s1492 + $0x12] sm:$0xff]
      %v2133 = vld [vmem:[%s1492 + $0x22] sm:$0xff]
      %v2134 = vld [vmem:[%s1492 + $0x32] sm:$0xff]
      %v2135 = vld [vmem:[%s1492 + $0x42] sm:$0xff]
      %v2136 = vld [vmem:[%s1492 + $0x52] sm:$0xff]
      %v2137 = vld [vmem:[%s1492 + $0x62] sm:$0xff]
      %v2138 = vld [vmem:[%s1492 + $0x72] sm:$0xff]
      %s2139 = scalar_lea.vmem %s1, 60
      %v2140 = vld [vmem:[%s2139] sm:$0xf]
      %v2142 = vsel %vm181, %v2131, 0
      %v2145 = vsel %vm181, %v2132, 0
      %v2148 = vsel %vm181, %v2133, 0
      %v2151 = vsel %vm181, %v2134, 0
      %v2154 = vsel %vm181, %v2135, 0
      %v2157 = vsel %vm181, %v2136, 0
      %v2160 = vsel %vm181, %v2137, 0
      %v2163 = vsel %vm181, %v2138, 0
      %v2166 = vsel %vm206, %v2140, 0
      %2168 = vmatprep.subr.mxu0 0.0
      %2169 = vmatpush1.msra.mxu0 0.0
      %2170 = vmatprep.subr.mxu0 0.0
      %2171 = vmatpush1.msra.mxu0 0.0
      %2172 = vmatprep.subr.mxu0 0.0
      %2173 = vmatpush1.msra.mxu0 0.0
      %2174 = vmatprep.subr.mxu0 0.0
      %2175 = vmatpush1.msra.mxu0 0.0
      %2176 = vmatprep.subr.mxu0 0.0
      %2177 = vmatpush1.msra.mxu0 0.0
      %2178 = vmatprep.subr.mxu0 0.0
      %2179 = vmatpush1.msra.mxu0 0.0
      %2180 = vmatprep.subr.mxu0 0.0
      %2181 = vmatpush1.msra.mxu0 0.0
      %2182 = vmatprep.subr.mxu0 0.0
      %2183 = vmatpush1.msra.mxu0 0.0
      %2184 = vmatprep.subr.mxu0 0.0
      %2185 = vmatpush1.msra.mxu0 0.0
      %2186 = vmatprep.subr.mxu0 0.0
      %2187 = vmatpush1.msra.mxu0 0.0
      %2188 = vmatprep.subr.mxu0 0.0
      %2189 = vmatpush1.msra.mxu0 0.0
      %2190 = vmatprep.subr.mxu0 0.0
      %2191 = vmatpush1.msra.mxu0 0.0
      %2192 = vmatprep.subr.mxu0 0.0
      %2193 = vmatpush1.msra.mxu0 0.0
      %2194 = vmatprep.subr.mxu0 0.0
      %2195 = vmatpush1.msra.mxu0 0.0
      %2196 = vmatprep.subr.mxu0 0.0
      %2197 = vmatpush1.msra.mxu0 0.0
      %2198 = vmatprep.subr.mxu0 0.0
      %2199 = vmatpush1.msra.mxu0 %v2166
      %2200 = vmatprep.subr.mxu0 0.0
      %2201 = vmatpush2.msra.mxu0 0.0
      %2202 = vmatprep.subr.mxu0 0.0
      %2203 = vmatpush2.msra.mxu0 0.0
      %2204 = vmatprep.subr.mxu0 0.0
      %2205 = vmatpush2.msra.mxu0 0.0
      %2206 = vmatprep.subr.mxu0 0.0
      %2207 = vmatpush2.msra.mxu0 0.0
      %2208 = vmatprep.subr.mxu0 0.0
      %2209 = vmatpush2.msra.mxu0 0.0
      %2210 = vmatprep.subr.mxu0 0.0
      %2211 = vmatpush2.msra.mxu0 0.0
      %2212 = vmatprep.subr.mxu0 0.0
      %2213 = vmatpush2.msra.mxu0 0.0
      %2214 = vmatprep.subr.mxu0 0.0
      %2215 = vmatpush2.msra.mxu0 0.0
      %2216 = vmatprep.subr.mxu0 0.0
      %2217 = vmatpush2.msra.mxu0 0.0
      %2218 = vmatprep.subr.mxu0 0.0
      %2219 = vmatpush2.msra.mxu0 0.0
      %2220 = vmatprep.subr.mxu0 0.0
      %2221 = vmatpush2.msra.mxu0 0.0
      %2222 = vmatprep.subr.mxu0 0.0
      %2223 = vmatpush2.msra.mxu0 0.0
      %2224 = vmatprep.subr.mxu0 0.0
      %2225 = vmatpush2.msra.mxu0 0.0
      %2226 = vmatprep.subr.mxu0 0.0
      %2227 = vmatpush2.msra.mxu0 0.0
      %2228 = vmatprep.subr.mxu0 0.0
      %2229 = vmatpush2.msra.mxu0 0.0
      %2230 = vmatprep.subr.mxu0 0.0
      %2231 = vmatpush2.msra.mxu0 0.0
      %2232 = vmatprep.mubr.f32.mxu0 0.0
      %2233 = vmatmul.mubr.f32.gmra.mxu0 %v2142
      %v2234 = vpop.f32.mrf.mxu0
      %v2235 = vadd.f32 0.0, %v2234
      %v2236 = vpop.f32.mrf.mxu0
      %2237 = vmatprep.mubr.f32.mxu0 0.0
      %2238 = vmatmul.mubr.f32.gmra.mxu0 %v2145
      %v2239 = vpop.f32.mrf.mxu0
      %v2240 = vadd.f32 0.0, %v2239
      %v2241 = vpop.f32.mrf.mxu0
      %2242 = vmatprep.mubr.f32.mxu0 0.0
      %2243 = vmatmul.mubr.f32.gmra.mxu0 %v2148
      %v2244 = vpop.f32.mrf.mxu0
      %v2245 = vadd.f32 0.0, %v2244
      %v2246 = vpop.f32.mrf.mxu0
      %2247 = vmatprep.mubr.f32.mxu0 0.0
      %2248 = vmatmul.mubr.f32.gmra.mxu0 %v2151
      %v2249 = vpop.f32.mrf.mxu0
      %v2250 = vadd.f32 0.0, %v2249
      %v2251 = vpop.f32.mrf.mxu0
      %2252 = vmatprep.mubr.f32.mxu0 0.0
      %2253 = vmatmul.mubr.f32.gmra.mxu0 %v2154
      %v2254 = vpop.f32.mrf.mxu0
      %v2255 = vadd.f32 0.0, %v2254
      %v2256 = vpop.f32.mrf.mxu0
      %2257 = vmatprep.mubr.f32.mxu0 0.0
      %2258 = vmatmul.mubr.f32.gmra.mxu0 %v2157
      %v2259 = vpop.f32.mrf.mxu0
      %v2260 = vadd.f32 0.0, %v2259
      %v2261 = vpop.f32.mrf.mxu0
      %2262 = vmatprep.mubr.f32.mxu0 0.0
      %2263 = vmatmul.mubr.f32.gmra.mxu0 %v2160
      %v2264 = vpop.f32.mrf.mxu0
      %v2265 = vadd.f32 0.0, %v2264
      %v2266 = vpop.f32.mrf.mxu0
      %2267 = vmatprep.mubr.f32.mxu0 0.0
      %2268 = vmatmul.mubr.f32.gmra.mxu0 %v2163
      %v2269 = vpop.f32.mrf.mxu0
      %v2270 = vadd.f32 0.0, %v2269
      %v2271 = vpop.f32.mrf.mxu0
      %2272 = vdwg.mxu0
      %v2273 = vadd.f32 %v2123, %v2235
      %v2274 = vadd.f32 %v2124, %v2240
      %v2275 = vadd.f32 %v2125, %v2245
      %v2276 = vadd.f32 %v2126, %v2250
      %v2277 = vadd.f32 %v2127, %v2255
      %v2278 = vadd.f32 %v2128, %v2260
      %v2279 = vadd.f32 %v2129, %v2265
      %v2280 = vadd.f32 %v2130, %v2270
      %vm2281 = vcmask 64512
      %v2282 = vsel %vm2281, %v742, 0.0
      %v2283 = vsel %vm2281, %v743, 0.0
      %v2284 = vadd.f32 %v2282, %v2283
      %v2285 = vsel %vm2281, %v744, 0.0
      %v2286 = vadd.f32 %v2284, %v2285
      %v2287 = vsel %vm2281, %v745, 0.0
      %v2288 = vadd.f32 %v2286, %v2287
      %v2289 = vsel %vm2281, %v746, 0.0
      %v2290 = vadd.f32 %v2288, %v2289
      %v2291 = vsel %vm2281, %v747, 0.0
      %v2292 = vadd.f32 %v2290, %v2291
      %v2293 = vsel %vm2281, %v748, 0.0
      %v2294 = vadd.f32 %v2292, %v2293
      %v2295 = vsel %vm2281, %v749, 0.0
      %v2296 = vadd.f32 %v2294, %v2295
      %v2297 = vrot.slane %v2296, 4
      %v2298 = vadd.f32 %v2296, %v2297
      %v2299 = vrot.slane %v2298, 2
      %v2300 = vadd.f32 %v2298, %v2299
      %v2301 = vrot.slane %v2300, 1
      %v2302 = vadd.f32 %v2300, %v2301
      %v2303 = vadd.f32 %v2302, 0.0
      %v2304 = vmul.f32 %v742, %v742
      %v2305 = vmul.f32 %v743, %v743
      %v2306 = vmul.f32 %v744, %v744
      %v2307 = vmul.f32 %v745, %v745
      %v2308 = vmul.f32 %v746, %v746
      %v2309 = vmul.f32 %v747, %v747
      %v2310 = vmul.f32 %v748, %v748
      %v2311 = vmul.f32 %v749, %v749
      %v2312 = vsel %vm2281, %v2304, 0.0
      %v2313 = vsel %vm2281, %v2305, 0.0
      %v2314 = vadd.f32 %v2312, %v2313
      %v2315 = vsel %vm2281, %v2306, 0.0
      %v2316 = vadd.f32 %v2314, %v2315
      %v2317 = vsel %vm2281, %v2307, 0.0
      %v2318 = vadd.f32 %v2316, %v2317
      %v2319 = vsel %vm2281, %v2308, 0.0
      %v2320 = vadd.f32 %v2318, %v2319
      %v2321 = vsel %vm2281, %v2309, 0.0
      %v2322 = vadd.f32 %v2320, %v2321
      %v2323 = vsel %vm2281, %v2310, 0.0
      %v2324 = vadd.f32 %v2322, %v2323
      %v2325 = vsel %vm2281, %v2311, 0.0
      %v2326 = vadd.f32 %v2324, %v2325
      %v2327 = vrot.slane %v2326, 4
      %v2328 = vadd.f32 %v2326, %v2327
      %v2329 = vrot.slane %v2328, 2
      %v2330 = vadd.f32 %v2328, %v2329
      %v2331 = vrot.slane %v2330, 1
      %v2332 = vadd.f32 %v2330, %v2331
      %v2333 = vadd.f32 %v2332, 0.0
      %v2334 = vsel %vm2281, %v1262, 0.0
      %v2335 = vsel %vm2281, %v1263, 0.0
      %v2336 = vadd.f32 %v2334, %v2335
      %v2337 = vsel %vm2281, %v1264, 0.0
      %v2338 = vadd.f32 %v2336, %v2337
      %v2339 = vsel %vm2281, %v1265, 0.0
      %v2340 = vadd.f32 %v2338, %v2339
      %v2341 = vsel %vm2281, %v1266, 0.0
      %v2342 = vadd.f32 %v2340, %v2341
      %v2343 = vsel %vm2281, %v1267, 0.0
      %v2344 = vadd.f32 %v2342, %v2343
      %v2345 = vsel %vm2281, %v1268, 0.0
      %v2346 = vadd.f32 %v2344, %v2345
      %v2347 = vsel %vm2281, %v1269, 0.0
      %v2348 = vadd.f32 %v2346, %v2347
      %v2349 = vrot.slane %v2348, 4
      %v2350 = vadd.f32 %v2348, %v2349
      %v2351 = vrot.slane %v2350, 2
      %v2352 = vadd.f32 %v2350, %v2351
      %v2353 = vrot.slane %v2352, 1
      %v2354 = vadd.f32 %v2352, %v2353
      %v2355 = vadd.f32 %v2303, %v2354
      %v2356 = vmul.f32 %v1262, %v1262
      %v2357 = vmul.f32 %v1263, %v1263
      %v2358 = vmul.f32 %v1264, %v1264
      %v2359 = vmul.f32 %v1265, %v1265
      %v2360 = vmul.f32 %v1266, %v1266
      %v2361 = vmul.f32 %v1267, %v1267
      %v2362 = vmul.f32 %v1268, %v1268
      %v2363 = vmul.f32 %v1269, %v1269
      %v2364 = vsel %vm2281, %v2356, 0.0
      %v2365 = vsel %vm2281, %v2357, 0.0
      %v2366 = vadd.f32 %v2364, %v2365
      %v2367 = vsel %vm2281, %v2358, 0.0
      %v2368 = vadd.f32 %v2366, %v2367
      %v2369 = vsel %vm2281, %v2359, 0.0
      %v2370 = vadd.f32 %v2368, %v2369
      %v2371 = vsel %vm2281, %v2360, 0.0
      %v2372 = vadd.f32 %v2370, %v2371
      %v2373 = vsel %vm2281, %v2361, 0.0
      %v2374 = vadd.f32 %v2372, %v2373
      %v2375 = vsel %vm2281, %v2362, 0.0
      %v2376 = vadd.f32 %v2374, %v2375
      %v2377 = vsel %vm2281, %v2363, 0.0
      %v2378 = vadd.f32 %v2376, %v2377
      %v2379 = vrot.slane %v2378, 4
      %v2380 = vadd.f32 %v2378, %v2379
      %v2381 = vrot.slane %v2380, 2
      %v2382 = vadd.f32 %v2380, %v2381
      %v2383 = vrot.slane %v2382, 1
      %v2384 = vadd.f32 %v2382, %v2383
      %v2385 = vadd.f32 %v2333, %v2384
      %v2386 = vsel %vm2281, %v1785, 0.0
      %v2387 = vsel %vm2281, %v1786, 0.0
      %v2388 = vadd.f32 %v2386, %v2387
      %v2389 = vsel %vm2281, %v1787, 0.0
      %v2390 = vadd.f32 %v2388, %v2389
      %v2391 = vsel %vm2281, %v1788, 0.0
      %v2392 = vadd.f32 %v2390, %v2391
      %v2393 = vsel %vm2281, %v1789, 0.0
      %v2394 = vadd.f32 %v2392, %v2393
      %v2395 = vsel %vm2281, %v1790, 0.0
      %v2396 = vadd.f32 %v2394, %v2395
      %v2397 = vsel %vm2281, %v1791, 0.0
      %v2398 = vadd.f32 %v2396, %v2397
      %v2399 = vsel %vm2281, %v1792, 0.0
      %v2400 = vadd.f32 %v2398, %v2399
      %v2401 = vrot.slane %v2400, 4
      %v2402 = vadd.f32 %v2400, %v2401
      %v2403 = vrot.slane %v2402, 2
      %v2404 = vadd.f32 %v2402, %v2403
      %v2405 = vrot.slane %v2404, 1
      %v2406 = vadd.f32 %v2404, %v2405
      %v2407 = vadd.f32 %v2355, %v2406
      %v2408 = vmul.f32 %v1785, %v1785
      %v2409 = vmul.f32 %v1786, %v1786
      %v2410 = vmul.f32 %v1787, %v1787
      %v2411 = vmul.f32 %v1788, %v1788
      %v2412 = vmul.f32 %v1789, %v1789
      %v2413 = vmul.f32 %v1790, %v1790
      %v2414 = vmul.f32 %v1791, %v1791
      %v2415 = vmul.f32 %v1792, %v1792
      %v2416 = vsel %vm2281, %v2408, 0.0
      %v2417 = vsel %vm2281, %v2409, 0.0
      %v2418 = vadd.f32 %v2416, %v2417
      %v2419 = vsel %vm2281, %v2410, 0.0
      %v2420 = vadd.f32 %v2418, %v2419
      %v2421 = vsel %vm2281, %v2411, 0.0
      %v2422 = vadd.f32 %v2420, %v2421
      %v2423 = vsel %vm2281, %v2412, 0.0
      %v2424 = vadd.f32 %v2422, %v2423
      %v2425 = vsel %vm2281, %v2413, 0.0
      %v2426 = vadd.f32 %v2424, %v2425
      %v2427 = vsel %vm2281, %v2414, 0.0
      %v2428 = vadd.f32 %v2426, %v2427
      %v2429 = vsel %vm2281, %v2415, 0.0
      %v2430 = vadd.f32 %v2428, %v2429
      %v2431 = vrot.slane %v2430, 4
      %v2432 = vadd.f32 %v2430, %v2431
      %v2433 = vrot.slane %v2432, 2
      %v2434 = vadd.f32 %v2432, %v2433
      %v2435 = vrot.slane %v2434, 1
      %v2436 = vadd.f32 %v2434, %v2435
      %v2437 = vadd.f32 %v2385, %v2436
      %v2438 = vsel %vm2281, %v2273, 0.0
      %v2439 = vsel %vm2281, %v2274, 0.0
      %v2440 = vadd.f32 %v2438, %v2439
      %v2441 = vsel %vm2281, %v2275, 0.0
      %v2442 = vadd.f32 %v2440, %v2441
      %v2443 = vsel %vm2281, %v2276, 0.0
      %v2444 = vadd.f32 %v2442, %v2443
      %v2445 = vsel %vm2281, %v2277, 0.0
      %v2446 = vadd.f32 %v2444, %v2445
      %v2447 = vsel %vm2281, %v2278, 0.0
      %v2448 = vadd.f32 %v2446, %v2447
      %v2449 = vsel %vm2281, %v2279, 0.0
      %v2450 = vadd.f32 %v2448, %v2449
      %v2451 = vsel %vm2281, %v2280, 0.0
      %v2452 = vadd.f32 %v2450, %v2451
      %v2453 = vrot.slane %v2452, 4
      %v2454 = vadd.f32 %v2452, %v2453
      %v2455 = vrot.slane %v2454, 2
      %v2456 = vadd.f32 %v2454, %v2455
      %v2457 = vrot.slane %v2456, 1
      %v2458 = vadd.f32 %v2456, %v2457
      %v2459 = vadd.f32 %v2407, %v2458
      %v2460 = vmul.f32 %v2273, %v2273
      %v2461 = vmul.f32 %v2274, %v2274
      %v2462 = vmul.f32 %v2275, %v2275
      %v2463 = vmul.f32 %v2276, %v2276
      %v2464 = vmul.f32 %v2277, %v2277
      %v2465 = vmul.f32 %v2278, %v2278
      %v2466 = vmul.f32 %v2279, %v2279
      %v2467 = vmul.f32 %v2280, %v2280
      %v2468 = vsel %vm2281, %v2460, 0.0
      %v2469 = vsel %vm2281, %v2461, 0.0
      %v2470 = vadd.f32 %v2468, %v2469
      %v2471 = vsel %vm2281, %v2462, 0.0
      %v2472 = vadd.f32 %v2470, %v2471
      %v2473 = vsel %vm2281, %v2463, 0.0
      %v2474 = vadd.f32 %v2472, %v2473
      %v2475 = vsel %vm2281, %v2464, 0.0
      %v2476 = vadd.f32 %v2474, %v2475
      %v2477 = vsel %vm2281, %v2465, 0.0
      %v2478 = vadd.f32 %v2476, %v2477
      %v2479 = vsel %vm2281, %v2466, 0.0
      %v2480 = vadd.f32 %v2478, %v2479
      %v2481 = vsel %vm2281, %v2467, 0.0
      %v2482 = vadd.f32 %v2480, %v2481
      %v2483 = vrot.slane %v2482, 4
      %v2484 = vadd.f32 %v2482, %v2483
      %v2485 = vrot.slane %v2484, 2
      %v2486 = vadd.f32 %v2484, %v2485
      %v2487 = vrot.slane %v2486, 1
      %v2488 = vadd.f32 %v2486, %v2487
      %v2489 = vadd.f32 %v2437, %v2488
      %vm2490 = vcmask 1040384
      %v2491 = vsel %vm2490, %v2459, %v2489
      %vm2492 = vcmask 58368
      %2493 = vst.msk [vmem:[%s157] sm:$0x3] %vm2492, %v2491
      %s2494 = sadd.s32 %s17, %s18
      %p2495 = scmp.lt.s32.totalorder %s2494, 1
      %s2496 = scalar_select %p2495, %s2494, 1
      %s2497 = smul.addr %s2496, 2
      %s2498 = scalar_lea.vmem %s2, %s2497
      // Predicated region
      $region29: #{unet_up_forward.2} parent=27 // pred_check
        %p2499 = pneg %p92
      $region30: #{unet_up_forward.2} parent=27 // pred_check_branch
        %2501 = sbr.rel (%p2499) target = $region32
      $region31: #{unet_up_forward.2} parent=27 // pred_region
        %s2502 = sadd.s32 %s17, %s18
      $region32: #{unet_up_forward.2} parent=27 // pred_fallthru
        _
    $region28: #{unet_up_forward.2} parent=5 // pred_fallthru
      _
    %p2503 = scmp.le.s32.totalorder 2, %s8
    // Predicated region
    $region33: #{unet_up_forward.2} parent=5 // pred_check
      %p2504 = pneg %p2503
    $region34: #{unet_up_forward.2} parent=5 // pred_check_branch
      %2506 = sbr.rel (%p2504) target = $region36
    $region35: #{unet_up_forward.2} parent=5 // pred_region
      %s2507 = ssub.s32 %s8, 2
      // Predicated region
      $region37: #{unet_up_forward.2} parent=35 // pred_check
        %p2508 = pneg %p98
      $region38: #{unet_up_forward.2} parent=35 // pred_check_branch
        %2510 = sbr.rel (%p2508) target = $region40
      $region39: #{unet_up_forward.2} parent=35 // pred_region
        %s2511 = sadd.s32 %s19, %s20
        %p2512 = scmp.lt.s32.totalorder %s2511, 1
        %s2513 = scalar_select %p2512, %s2511, 1
        %s2514 = smul.addr %s2513, 2
        %s2515 = scalar_lea.vmem %s2, %s2514
      $region40: #{unet_up_forward.2} parent=35 // pred_fallthru
        _
    $region36: #{unet_up_forward.2} parent=5 // pred_fallthru
      _
  $region6: #{unet_up_forward.2} parent=0 // loop_footer
    %s12 = sadd.s32 1, %s8
  $region7: #{unet_up_forward.2} parent=0 // loop_footer_branch
    %7 = sbr.rel target = $region3
  $region8: #{unet_up_forward.2} parent=0 // loop_exit
    _

// kernel: unet_up_forward.3
$region0: #{unet_up_forward.3}
  #allocation0 [shape = 'u32[]', space=smem, size = 0x4, offset = 0x4, fixed_abs, tag = 'smem constant byte address 0x4 - core index']
  #allocation1 [shape = 'u32[144,128]{1,0:T(1,128)}', space=vmem, size = 0x12000, scoped, tag = 'internal scratch']
  %s0 = inlined_call_operand.vmem [shape: f32[2,10,10,4], index: 0, kind: input, shape index: {}]
  %s1 = inlined_call_operand.vmem [shape: f32[16,4,8], index: 1, kind: input, shape index: {}]
  %s2 = inlined_call_operand.vmem [shape: f32[1,8], index: 2, kind: input, shape index: {}]
  %s3 = inlined_call_operand.vmem [shape: f32[2,4,64,8], index: 3, kind: output, shape index: {}]
  %s4 = sld [smem:[#allocation0]]
  $region45: #{unet_up_forward.3} parent=0
    _
  %s6 = ssub.s32 1, %s4
  %s7 = scalar_select 0, %s6, %s4
  loop: start=0, step=1, limit=4
  $region2: #{unet_up_forward.3} parent=0 // loop_pre_header
    _
  $region3: #{unet_up_forward.3} parent=0 // loop_header
    %s9 = sphi 0, %s13
    %p10 = scmp.ge.s32.totalorder %s9, 4
    %s16 = sphi 0, %s28
    %s17 = sphi 0, %s24
    %s18 = sphi 0, %s16
    %s19 = sphi 0, %s17
    %s20 = sphi 0, %s18
    %s21 = sphi 0, %s19
    %s31 = sphi 0, %s33
    %s34 = sphi 0, %s31
    %s35 = sphi 0, %s34
    %s51 = sphi 0, %s35
    %s55 = sphi 0, %s55
    %s57 = sphi 0, %s55
    %s58 = sphi 0, %s57
    %s72 = sphi 0, %s58
    %s76 = sphi 0, %s76
    %s78 = sphi 0, %s76
    %s79 = sphi 0, %s78
    %s93 = sphi 0, %s79
    %s101 = sphi 0, %s103
    %s104 = sphi 0, %s101
    %s105 = sphi 0, %s104
    %s121 = sphi 0, %s105
  $region4: #{unet_up_forward.3} parent=0 // loop_header_branch
    %12 = sbr.rel (%p10) target = $region8
  $region5: #{unet_up_forward.3} parent=0 // loop_body
    %s14 = ssub.s32 %s9, 1
    %s15 = ssub.s32 %s9, 2
    %s22 = sadd.s32 1, %s17
    %p23 = scmp.ge.s32.totalorder %s22, 1
    %s24 = scalar_select %p23, 0, %s22
    %s25 = sadd.s32 1, %s16
    %s26 = scalar_select %p23, %s25, %s16
    %p27 = scmp.ge.s32.totalorder %s26, 2
    %s28 = scalar_select %p27, 0, %s26
    %s29 = ssub.s32 %s16, %s28
    %p30 = scmp.eq.s32.totalorder %s29, 0
    %s32 = sadd.s32 %s31, 1
    %s33 = scalar_select %p30, %s31, %s32
    %p36 = pneg %p30
    %p37 = scmp.eq.s32.totalorder %s9, 1
    %p38 = por %p36, %p37
    %p39 = scmp.ne.s32.totalorder %s31, %s34
    %p40 = scmp.eq.s32.totalorder %s9, 0
    %p41 = por %p39, %p40
    %p42 = scmp.ne.s32.totalorder %s31, %s34
    %p43 = scmp.eq.s32.totalorder %s14, 1
    %p44 = por %p42, %p43
    %p45 = scmp.ne.s32.totalorder %s34, %s35
    %p46 = scmp.eq.s32.totalorder %s14, 0
    %p47 = por %p45, %p46
    %p48 = scmp.ne.s32.totalorder %s34, %s35
    %p49 = scmp.eq.s32.totalorder %s15, 1
    %p50 = por %p48, %p49
    %p52 = scmp.ne.s32.totalorder %s35, %s51
    %p53 = scmp.eq.s32.totalorder %s15, 0
    %p54 = por %p52, %p53
    %s56 = sadd.s32 %s55, 1
    %p59 = scmp.eq.s32.totalorder %s9, 1
    %p60 = scmp.ne.s32.totalorder %s55, %s57
    %p61 = scmp.eq.s32.totalorder %s9, 0
    %p62 = por %p60, %p61
    %p63 = scmp.ne.s32.totalorder %s55, %s57
    %p64 = scmp.eq.s32.totalorder %s14, 1
    %p65 = por %p63, %p64
    %p66 = scmp.ne.s32.totalorder %s57, %s58
    %p67 = scmp.eq.s32.totalorder %s14, 0
    %p68 = por %p66, %p67
    %p69 = scmp.ne.s32.totalorder %s57, %s58
    %p70 = scmp.eq.s32.totalorder %s15, 1
    %p71 = por %p69, %p70
    %p73 = scmp.ne.s32.totalorder %s58, %s72
    %p74 = scmp.eq.s32.totalorder %s15, 0
    %p75 = por %p73, %p74
    %s77 = sadd.s32 %s76, 1
    %p80 = scmp.eq.s32.totalorder %s9, 1
    %p81 = scmp.ne.s32.totalorder %s76, %s78
    %p82 = scmp.eq.s32.totalorder %s9, 0
    %p83 = por %p81, %p82
    %p84 = scmp.ne.s32.totalorder %s76, %s78
    %p85 = scmp.eq.s32.totalorder %s14, 1
    %p86 = por %p84, %p85
    %p87 = scmp.ne.s32.totalorder %s78, %s79
    %p88 = scmp.eq.s32.totalorder %s14, 0
    %p89 = por %p87, %p88
    %p90 = scmp.ne.s32.totalorder %s78, %s79
    %p91 = scmp.eq.s32.totalorder %s15, 1
    %p92 = por %p90, %p91
    %p94 = scmp.ne.s32.totalorder %s79, %s93
    %p95 = scmp.eq.s32.totalorder %s15, 0
    %p96 = por %p94, %p95
    %s97 = ssub.s32 %s16, %s28
    %s98 = ssub.s32 %s17, %s24
    %s99 = sor.u32 %s97, %s98
    %p100 = scmp.eq.s32.totalorder %s99, 0
    %s102 = sadd.s32 %s101, 1
    %s103 = scalar_select %p100, %s101, %s102
    %p106 = pneg %p100
    %p107 = scmp.eq.s32.totalorder %s9, 1
    %p108 = por %p106, %p107
    %p109 = scmp.ne.s32.totalorder %s101, %s104
    %p110 = scmp.eq.s32.totalorder %s9, 0
    %p111 = por %p109, %p110
    %p112 = scmp.ne.s32.totalorder %s101, %s104
    %p113 = scmp.eq.s32.totalorder %s14, 1
    %p114 = por %p112, %p113
    %p115 = scmp.ne.s32.totalorder %s104, %s105
    %p116 = scmp.eq.s32.totalorder %s14, 0
    %p117 = por %p115, %p116
    %p118 = scmp.ne.s32.totalorder %s104, %s105
    %p119 = scmp.eq.s32.totalorder %s15, 1
    %p120 = por %p118, %p119
    %p122 = scmp.ne.s32.totalorder %s105, %s121
    %p123 = scmp.eq.s32.totalorder %s15, 0
    %p124 = por %p122, %p123
    %p125 = scmp.le.s32.totalorder 1, %s9
    %p126 = scmp.lt.s32.totalorder %s9, 3
    %p127 = pnand %p125, %p126
    %p128 = pneg %p127
    // Predicated region
    $region9: #{unet_up_forward.3} parent=5 // pred_check
      _
    $region10: #{unet_up_forward.3} parent=5 // pred_check_branch
      %130 = sbr.rel (%p127) target = $region12
    $region11: #{unet_up_forward.3} parent=5 // pred_region
      %s131 = ssub.s32 %s9, 1
      // Predicated region
      $region13: #{unet_up_forward.3} parent=11 // pred_check
        %p132 = pneg %p68
      $region14: #{unet_up_forward.3} parent=11 // pred_check_branch
        %134 = sbr.rel (%p132) target = $region16
      $region15: #{unet_up_forward.3} parent=11 // pred_region
        _
      $region16: #{unet_up_forward.3} parent=11 // pred_fallthru
        _
      // Predicated region
      $region17: #{unet_up_forward.3} parent=11 // pred_check
        %p135 = pneg %p89
      $region18: #{unet_up_forward.3} parent=11 // pred_check_branch
        %137 = sbr.rel (%p135) target = $region20
      $region19: #{unet_up_forward.3} parent=11 // pred_region
        _
      $region20: #{unet_up_forward.3} parent=11 // pred_fallthru
        _
    $region12: #{unet_up_forward.3} parent=5 // pred_fallthru
      _
    %p138 = scmp.lt.s32.totalorder %s9, 2
    // Predicated region
    $region21: #{unet_up_forward.3} parent=5 // pred_check
      %p139 = pneg %p138
    $region22: #{unet_up_forward.3} parent=5 // pred_check_branch
      %141 = sbr.rel (%p139) target = $region24
    $region23: #{unet_up_forward.3} parent=5 // pred_region
      // Predicated region
      $region25: #{unet_up_forward.3} parent=23 // pred_check
        %p142 = pneg %p41
      $region26: #{unet_up_forward.3} parent=23 // pred_check_branch
        %144 = sbr.rel (%p142) target = $region28
      $region27: #{unet_up_forward.3} parent=23 // pred_region
        %p145 = scmp.lt.s32.totalorder %s16, 1
        %s146 = scalar_select %p145, %s16, 1
        %s147 = smul.addr %s146, 20
        %s148 = smul.addr %s147, 8
        %s149 = scalar_lea.vmem %s0, %s148
      $region28: #{unet_up_forward.3} parent=23 // pred_fallthru
        _
    $region24: #{unet_up_forward.3} parent=5 // pred_fallthru
      _
    %p150 = scmp.le.s32.totalorder 1, %s9
    %p151 = scmp.lt.s32.totalorder %s9, 3
    %p152 = pnand %p150, %p151
    %p153 = pneg %p152
    // Predicated region
    $region29: #{unet_up_forward.3} parent=5 // pred_check
      _
    $region30: #{unet_up_forward.3} parent=5 // pred_check_branch
      %155 = sbr.rel (%p152) target = $region32
    $region31: #{unet_up_forward.3} parent=5 // pred_region
      %s156 = ssub.s32 %s9, 1
      %p157 = scmp.lt.s32.totalorder %s18, 1
      %s158 = scalar_select %p157, %s18, 1
      %s159 = smul.addr %s158, 20
      %s160 = smul.addr %s159, 8
      %s161 = scalar_lea.vmem %s0, %s160
      %p162 = pneg %p47
      %p163 = pneg %p44
      %p164 = pneg %p68
      %p165 = pneg %p65
      %p166 = pneg %p89
      %p167 = pneg %p86
      %p168 = pneg %p117
      %p169 = pneg %p114
      %s170 = smul.u32 8, %s19
      %p171 = scmp.lt.s32.totalorder %s18, 1
      %s172 = scalar_select %p171, %s18, 1
      %p173 = scmp.lt.s32.totalorder %s170, 7
      %s174 = scalar_select %p173, %s170, 7
      %s175 = smul.addr %s172, 32
      %s176 = sadd.s32 %s174, %s175
      %s177 = smul.addr %s176, 8
      %s178 = scalar_lea.vmem %s3, %s177
      %p179 = scmp.lt.s32.totalorder %s18, 1
      %s180 = scalar_select %p179, %s18, 1
      %s181 = smul.addr %s180, 20
      %s182 = smul.addr %s181, 8
      %s183 = scalar_lea.vmem %s0, %s182
      %s184 = smul.u32 8, %s19
      %p185 = scmp.lt.s32.totalorder %s18, 1
      %s186 = scalar_select %p185, %s18, 1
      %p187 = scmp.lt.s32.totalorder %s184, 7
      %s188 = scalar_select %p187, %s184, 7
      %s189 = smul.addr %s186, 32
      %s190 = sadd.s32 %s188, %s189
      %s191 = smul.addr %s190, 8
      %s192 = scalar_lea.vmem %s3, %s191
      %s193 = smul.u32 8, %s19
      %s194 = smul.u32 %s19, 8
      %s195 = smul.u32 %s194, 16
      %s196 = scalar_lea.vmem %s183, %s195
      %v197 = vld [vmem:[%s196] sm:$0xff]
      %v198 = vld [vmem:[%s196 + $0x10] sm:$0xff]
      %v199 = vld [vmem:[%s196 + $0x20] sm:$0xff]
      %v200 = vld [vmem:[%s196 + $0x30] sm:$0xff]
      %v201 = vld [vmem:[%s196 + $0x40] sm:$0xff]
      %v202 = vld [vmem:[%s196 + $0x50] sm:$0xff]
      %v203 = vld [vmem:[%s196 + $0x60] sm:$0xff]
      %v204 = vld [vmem:[%s196 + $0x70] sm:$0xff]
      %v205 = vld [vmem:[%s1] sm:$0xf]
      %v206 = vld [vmem:[%s196 + $0x1] sm:$0xff]
      %v207 = vld [vmem:[%s196 + $0x11] sm:$0xff]
      %v208 = vld [vmem:[%s196 + $0x21] sm:$0xff]
      %v209 = vld [vmem:[%s196 + $0x31] sm:$0xff]
      %v210 = vld [vmem:[%s196 + $0x41] sm:$0xff]
      %v211 = vld [vmem:[%s196 + $0x51] sm:$0xff]
      %v212 = vld [vmem:[%s196 + $0x61] sm:$0xff]
      %v213 = vld [vmem:[%s196 + $0x71] sm:$0xff]
      %s214 = scalar_lea.vmem %s1, 4
      %v215 = vld [vmem:[%s214] sm:$0xf]
      %vm216 = vcmask 31744
      %v218 = vsel %vm216, %v206, 0
      %v221 = vsel %vm216, %v207, 0
      %v224 = vsel %vm216, %v208, 0
      %v227 = vsel %vm216, %v209, 0
      %v230 = vsel %vm216, %v210, 0
      %v233 = vsel %vm216, %v211, 0
      %v236 = vsel %vm216, %v212, 0
      %v239 = vsel %vm216, %v213, 0
      %vm241 = vcmask 1043456
      %v243 = vsel %vm241, %v215, 0
      %245 = vmatprep.subr.mxu0 0.0
      %246 = vmatpush1.msra.mxu0 0.0
      %247 = vmatprep.subr.mxu0 0.0
      %248 = vmatpush1.msra.mxu0 0.0
      %249 = vmatprep.subr.mxu0 0.0
      %250 = vmatpush1.msra.mxu0 0.0
      %251 = vmatprep.subr.mxu0 0.0
      %252 = vmatpush1.msra.mxu0 0.0
      %253 = vmatprep.subr.mxu0 0.0
      %254 = vmatpush1.msra.mxu0 0.0
      %255 = vmatprep.subr.mxu0 0.0
      %256 = vmatpush1.msra.mxu0 0.0
      %257 = vmatprep.subr.mxu0 0.0
      %258 = vmatpush1.msra.mxu0 0.0
      %259 = vmatprep.subr.mxu0 0.0
      %260 = vmatpush1.msra.mxu0 0.0
      %261 = vmatprep.subr.mxu0 0.0
      %262 = vmatpush1.msra.mxu0 0.0
      %263 = vmatprep.subr.mxu0 0.0
      %264 = vmatpush1.msra.mxu0 0.0
      %265 = vmatprep.subr.mxu0 0.0
      %266 = vmatpush1.msra.mxu0 0.0
      %267 = vmatprep.subr.mxu0 0.0
      %268 = vmatpush1.msra.mxu0 0.0
      %269 = vmatprep.subr.mxu0 0.0
      %270 = vmatpush1.msra.mxu0 0.0
      %271 = vmatprep.subr.mxu0 0.0
      %272 = vmatpush1.msra.mxu0 0.0
      %273 = vmatprep.subr.mxu0 0.0
      %274 = vmatpush1.msra.mxu0 0.0
      %275 = vmatprep.subr.mxu0 0.0
      %276 = vmatpush1.msra.mxu0 %v243
      %277 = vmatprep.subr.mxu0 0.0
      %278 = vmatpush2.msra.mxu0 0.0
      %279 = vmatprep.subr.mxu0 0.0
      %280 = vmatpush2.msra.mxu0 0.0
      %281 = vmatprep.subr.mxu0 0.0
      %282 = vmatpush2.msra.mxu0 0.0
      %283 = vmatprep.subr.mxu0 0.0
      %284 = vmatpush2.msra.mxu0 0.0
      %285 = vmatprep.subr.mxu0 0.0
      %286 = vmatpush2.msra.mxu0 0.0
      %287 = vmatprep.subr.mxu0 0.0
      %288 = vmatpush2.msra.mxu0 0.0
      %289 = vmatprep.subr.mxu0 0.0
      %290 = vmatpush2.msra.mxu0 0.0
      %291 = vmatprep.subr.mxu0 0.0
      %292 = vmatpush2.msra.mxu0 0.0
      %293 = vmatprep.subr.mxu0 0.0
      %294 = vmatpush2.msra.mxu0 0.0
      %295 = vmatprep.subr.mxu0 0.0
      %296 = vmatpush2.msra.mxu0 0.0
      %297 = vmatprep.subr.mxu0 0.0
      %298 = vmatpush2.msra.mxu0 0.0
      %299 = vmatprep.subr.mxu0 0.0
      %300 = vmatpush2.msra.mxu0 0.0
      %301 = vmatprep.subr.mxu0 0.0
      %302 = vmatpush2.msra.mxu0 0.0
      %303 = vmatprep.subr.mxu0 0.0
      %304 = vmatpush2.msra.mxu0 0.0
      %305 = vmatprep.subr.mxu0 0.0
      %306 = vmatpush2.msra.mxu0 0.0
      %307 = vmatprep.subr.mxu0 0.0
      %308 = vmatpush2.msra.mxu0 0.0
      %309 = vmatprep.mubr.f32.mxu0 0.0
      %310 = vmatmul.mubr.f32.gmra.mxu0 %v218
      %v311 = vpop.f32.mrf.mxu0
      %v312 = vadd.f32 0.0, %v311
      %v313 = vpop.f32.mrf.mxu0
      %314 = vmatprep.mubr.f32.mxu0 0.0
      %315 = vmatmul.mubr.f32.gmra.mxu0 %v221
      %v316 = vpop.f32.mrf.mxu0
      %v317 = vadd.f32 0.0, %v316
      %v318 = vpop.f32.mrf.mxu0
      %319 = vmatprep.mubr.f32.mxu0 0.0
      %320 = vmatmul.mubr.f32.gmra.mxu0 %v224
      %v321 = vpop.f32.mrf.mxu0
      %v322 = vadd.f32 0.0, %v321
      %v323 = vpop.f32.mrf.mxu0
      %324 = vmatprep.mubr.f32.mxu0 0.0
      %325 = vmatmul.mubr.f32.gmra.mxu0 %v227
      %v326 = vpop.f32.mrf.mxu0
      %v327 = vadd.f32 0.0, %v326
      %v328 = vpop.f32.mrf.mxu0
      %329 = vmatprep.mubr.f32.mxu0 0.0
      %330 = vmatmul.mubr.f32.gmra.mxu0 %v230
      %v331 = vpop.f32.mrf.mxu0
      %v332 = vadd.f32 0.0, %v331
      %v333 = vpop.f32.mrf.mxu0
      %334 = vmatprep.mubr.f32.mxu0 0.0
      %335 = vmatmul.mubr.f32.gmra.mxu0 %v233
      %v336 = vpop.f32.mrf.mxu0
      %v337 = vadd.f32 0.0, %v336
      %v338 = vpop.f32.mrf.mxu0
      %339 = vmatprep.mubr.f32.mxu0 0.0
      %340 = vmatmul.mubr.f32.gmra.mxu0 %v236
      %v341 = vpop.f32.mrf.mxu0
      %v342 = vadd.f32 0.0, %v341
      %v343 = vpop.f32.mrf.mxu0
      %344 = vmatprep.mubr.f32.mxu0 0.0
      %345 = vmatmul.mubr.f32.gmra.mxu0 %v239
      %v346 = vpop.f32.mrf.mxu0
      %v347 = vadd.f32 0.0, %v346
      %v348 = vpop.f32.mrf.mxu0
      %349 = vdwg.mxu0
      %v351 = vsel %vm216, %v197, 0
      %v354 = vsel %vm216, %v198, 0
      %v357 = vsel %vm216, %v199, 0
      %v360 = vsel %vm216, %v200, 0
      %v363 = vsel %vm216, %v201, 0
      %v366 = vsel %vm216, %v202, 0
      %v369 = vsel %vm216, %v203, 0
      %v372 = vsel %vm216, %v204, 0
      %v375 = vsel %vm241, %v205, 0
      %377 = vmatprep.subr.mxu0 0.0
      %378 = vmatpush1.msra.mxu0 0.0
      %379 = vmatprep.subr.mxu0 0.0
      %380 = vmatpush1.msra.mxu0 0.0
      %381 = vmatprep.subr.mxu0 0.0
      %382 = vmatpush1.msra.mxu0 0.0
      %383 = vmatprep.subr.mxu0 0.0
      %384 = vmatpush1.msra.mxu0 0.0
      %385 = vmatprep.subr.mxu0 0.0
      %386 = vmatpush1.msra.mxu0 0.0
      %387 = vmatprep.subr.mxu0 0.0
      %388 = vmatpush1.msra.mxu0 0.0
      %389 = vmatprep.subr.mxu0 0.0
      %390 = vmatpush1.msra.mxu0 0.0
      %391 = vmatprep.subr.mxu0 0.0
      %392 = vmatpush1.msra.mxu0 0.0
      %393 = vmatprep.subr.mxu0 0.0
      %394 = vmatpush1.msra.mxu0 0.0
      %395 = vmatprep.subr.mxu0 0.0
      %396 = vmatpush1.msra.mxu0 0.0
      %397 = vmatprep.subr.mxu0 0.0
      %398 = vmatpush1.msra.mxu0 0.0
      %399 = vmatprep.subr.mxu0 0.0
      %400 = vmatpush1.msra.mxu0 0.0
      %401 = vmatprep.subr.mxu0 0.0
      %402 = vmatpush1.msra.mxu0 0.0
      %403 = vmatprep.subr.mxu0 0.0
      %404 = vmatpush1.msra.mxu0 0.0
      %405 = vmatprep.subr.mxu0 0.0
      %406 = vmatpush1.msra.mxu0 0.0
      %407 = vmatprep.subr.mxu0 0.0
      %408 = vmatpush1.msra.mxu0 %v375
      %409 = vmatprep.subr.mxu0 0.0
      %410 = vmatpush2.msra.mxu0 0.0
      %411 = vmatprep.subr.mxu0 0.0
      %412 = vmatpush2.msra.mxu0 0.0
      %413 = vmatprep.subr.mxu0 0.0
      %414 = vmatpush2.msra.mxu0 0.0
      %415 = vmatprep.subr.mxu0 0.0
      %416 = vmatpush2.msra.mxu0 0.0
      %417 = vmatprep.subr.mxu0 0.0
      %418 = vmatpush2.msra.mxu0 0.0
      %419 = vmatprep.subr.mxu0 0.0
      %420 = vmatpush2.msra.mxu0 0.0
      %421 = vmatprep.subr.mxu0 0.0
      %422 = vmatpush2.msra.mxu0 0.0
      %423 = vmatprep.subr.mxu0 0.0
      %424 = vmatpush2.msra.mxu0 0.0
      %425 = vmatprep.subr.mxu0 0.0
      %426 = vmatpush2.msra.mxu0 0.0
      %427 = vmatprep.subr.mxu0 0.0
      %428 = vmatpush2.msra.mxu0 0.0
      %429 = vmatprep.subr.mxu0 0.0
      %430 = vmatpush2.msra.mxu0 0.0
      %431 = vmatprep.subr.mxu0 0.0
      %432 = vmatpush2.msra.mxu0 0.0
      %433 = vmatprep.subr.mxu0 0.0
      %434 = vmatpush2.msra.mxu0 0.0
      %435 = vmatprep.subr.mxu0 0.0
      %436 = vmatpush2.msra.mxu0 0.0
      %437 = vmatprep.subr.mxu0 0.0
      %438 = vmatpush2.msra.mxu0 0.0
      %439 = vmatprep.subr.mxu0 0.0
      %440 = vmatpush2.msra.mxu0 0.0
      %441 = vmatprep.mubr.f32.mxu0 0.0
      %442 = vmatmul.mubr.f32.gmra.mxu0 %v351
      %v443 = vpop.f32.mrf.mxu0
      %v444 = vadd.f32 %v312, %v443
      %v445 = vpop.f32.mrf.mxu0
      %446 = vmatprep.mubr.f32.mxu0 0.0
      %447 = vmatmul.mubr.f32.gmra.mxu0 %v354
      %v448 = vpop.f32.mrf.mxu0
      %v449 = vadd.f32 %v317, %v448
      %v450 = vpop.f32.mrf.mxu0
      %451 = vmatprep.mubr.f32.mxu0 0.0
      %452 = vmatmul.mubr.f32.gmra.mxu0 %v357
      %v453 = vpop.f32.mrf.mxu0
      %v454 = vadd.f32 %v322, %v453
      %v455 = vpop.f32.mrf.mxu0
      %456 = vmatprep.mubr.f32.mxu0 0.0
      %457 = vmatmul.mubr.f32.gmra.mxu0 %v360
      %v458 = vpop.f32.mrf.mxu0
      %v459 = vadd.f32 %v327, %v458
      %v460 = vpop.f32.mrf.mxu0
      %461 = vmatprep.mubr.f32.mxu0 0.0
      %462 = vmatmul.mubr.f32.gmra.mxu0 %v363
      %v463 = vpop.f32.mrf.mxu0
      %v464 = vadd.f32 %v332, %v463
      %v465 = vpop.f32.mrf.mxu0
      %466 = vmatprep.mubr.f32.mxu0 0.0
      %467 = vmatmul.mubr.f32.gmra.mxu0 %v366
      %v468 = vpop.f32.mrf.mxu0
      %v469 = vadd.f32 %v337, %v468
      %v470 = vpop.f32.mrf.mxu0
      %471 = vmatprep.mubr.f32.mxu0 0.0
      %472 = vmatmul.mubr.f32.gmra.mxu0 %v369
      %v473 = vpop.f32.mrf.mxu0
      %v474 = vadd.f32 %v342, %v473
      %v475 = vpop.f32.mrf.mxu0
      %476 = vmatprep.mubr.f32.mxu0 0.0
      %477 = vmatmul.mubr.f32.gmra.mxu0 %v372
      %v478 = vpop.f32.mrf.mxu0
      %v479 = vadd.f32 %v347, %v478
      %v480 = vpop.f32.mrf.mxu0
      %481 = vdwg.mxu0
      %s482 = sadd.s32 %s194, 1
      %s483 = smul.u32 %s482, 16
      %s484 = scalar_lea.vmem %s183, %s483
      %v485 = vld [vmem:[%s484] sm:$0xff]
      %v486 = vld [vmem:[%s484 + $0x10] sm:$0xff]
      %v487 = vld [vmem:[%s484 + $0x20] sm:$0xff]
      %v488 = vld [vmem:[%s484 + $0x30] sm:$0xff]
      %v489 = vld [vmem:[%s484 + $0x40] sm:$0xff]
      %v490 = vld [vmem:[%s484 + $0x50] sm:$0xff]
      %v491 = vld [vmem:[%s484 + $0x60] sm:$0xff]
      %v492 = vld [vmem:[%s484 + $0x70] sm:$0xff]
      %s493 = scalar_lea.vmem %s1, 8
      %v494 = vld [vmem:[%s493] sm:$0xf]
      %v496 = vsel %vm216, %v485, 0
      %v499 = vsel %vm216, %v486, 0
      %v502 = vsel %vm216, %v487, 0
      %v505 = vsel %vm216, %v488, 0
      %v508 = vsel %vm216, %v489, 0
      %v511 = vsel %vm216, %v490, 0
      %v514 = vsel %vm216, %v491, 0
      %v517 = vsel %vm216, %v492, 0
      %v520 = vsel %vm241, %v494, 0
      %522 = vmatprep.subr.mxu0 0.0
      %523 = vmatpush1.msra.mxu0 0.0
      %524 = vmatprep.subr.mxu0 0.0
      %525 = vmatpush1.msra.mxu0 0.0
      %526 = vmatprep.subr.mxu0 0.0
      %527 = vmatpush1.msra.mxu0 0.0
      %528 = vmatprep.subr.mxu0 0.0
      %529 = vmatpush1.msra.mxu0 0.0
      %530 = vmatprep.subr.mxu0 0.0
      %531 = vmatpush1.msra.mxu0 0.0
      %532 = vmatprep.subr.mxu0 0.0
      %533 = vmatpush1.msra.mxu0 0.0
      %534 = vmatprep.subr.mxu0 0.0
      %535 = vmatpush1.msra.mxu0 0.0
      %536 = vmatprep.subr.mxu0 0.0
      %537 = vmatpush1.msra.mxu0 0.0
      %538 = vmatprep.subr.mxu0 0.0
      %539 = vmatpush1.msra.mxu0 0.0
      %540 = vmatprep.subr.mxu0 0.0
      %541 = vmatpush1.msra.mxu0 0.0
      %542 = vmatprep.subr.mxu0 0.0
      %543 = vmatpush1.msra.mxu0 0.0
      %544 = vmatprep.subr.mxu0 0.0
      %545 = vmatpush1.msra.mxu0 0.0
      %546 = vmatprep.subr.mxu0 0.0
      %547 = vmatpush1.msra.mxu0 0.0
      %548 = vmatprep.subr.mxu0 0.0
      %549 = vmatpush1.msra.mxu0 0.0
      %550 = vmatprep.subr.mxu0 0.0
      %551 = vmatpush1.msra.mxu0 0.0
      %552 = vmatprep.subr.mxu0 0.0
      %553 = vmatpush1.msra.mxu0 %v520
      %554 = vmatprep.subr.mxu0 0.0
      %555 = vmatpush2.msra.mxu0 0.0
      %556 = vmatprep.subr.mxu0 0.0
      %557 = vmatpush2.msra.mxu0 0.0
      %558 = vmatprep.subr.mxu0 0.0
      %559 = vmatpush2.msra.mxu0 0.0
      %560 = vmatprep.subr.mxu0 0.0
      %561 = vmatpush2.msra.mxu0 0.0
      %562 = vmatprep.subr.mxu0 0.0
      %563 = vmatpush2.msra.mxu0 0.0
      %564 = vmatprep.subr.mxu0 0.0
      %565 = vmatpush2.msra.mxu0 0.0
      %566 = vmatprep.subr.mxu0 0.0
      %567 = vmatpush2.msra.mxu0 0.0
      %568 = vmatprep.subr.mxu0 0.0
      %569 = vmatpush2.msra.mxu0 0.0
      %570 = vmatprep.subr.mxu0 0.0
      %571 = vmatpush2.msra.mxu0 0.0
      %572 = vmatprep.subr.mxu0 0.0
      %573 = vmatpush2.msra.mxu0 0.0
      %574 = vmatprep.subr.mxu0 0.0
      %575 = vmatpush2.msra.mxu0 0.0
      %576 = vmatprep.subr.mxu0 0.0
      %577 = vmatpush2.msra.mxu0 0.0
      %578 = vmatprep.subr.mxu0 0.0
      %579 = vmatpush2.msra.mxu0 0.0
      %580 = vmatprep.subr.mxu0 0.0
      %581 = vmatpush2.msra.mxu0 0.0
      %582 = vmatprep.subr.mxu0 0.0
      %583 = vmatpush2.msra.mxu0 0.0
      %584 = vmatprep.subr.mxu0 0.0
      %585 = vmatpush2.msra.mxu0 0.0
      %586 = vmatprep.mubr.f32.mxu0 0.0
      %587 = vmatmul.mubr.f32.gmra.mxu0 %v496
      %v588 = vpop.f32.mrf.mxu0
      %v589 = vadd.f32 0.0, %v588
      %v590 = vpop.f32.mrf.mxu0
      %591 = vmatprep.mubr.f32.mxu0 0.0
      %592 = vmatmul.mubr.f32.gmra.mxu0 %v499
      %v593 = vpop.f32.mrf.mxu0
      %v594 = vadd.f32 0.0, %v593
      %v595 = vpop.f32.mrf.mxu0
      %596 = vmatprep.mubr.f32.mxu0 0.0
      %597 = vmatmul.mubr.f32.gmra.mxu0 %v502
      %v598 = vpop.f32.mrf.mxu0
      %v599 = vadd.f32 0.0, %v598
      %v600 = vpop.f32.mrf.mxu0
      %601 = vmatprep.mubr.f32.mxu0 0.0
      %602 = vmatmul.mubr.f32.gmra.mxu0 %v505
      %v603 = vpop.f32.mrf.mxu0
      %v604 = vadd.f32 0.0, %v603
      %v605 = vpop.f32.mrf.mxu0
      %606 = vmatprep.mubr.f32.mxu0 0.0
      %607 = vmatmul.mubr.f32.gmra.mxu0 %v508
      %v608 = vpop.f32.mrf.mxu0
      %v609 = vadd.f32 0.0, %v608
      %v610 = vpop.f32.mrf.mxu0
      %611 = vmatprep.mubr.f32.mxu0 0.0
      %612 = vmatmul.mubr.f32.gmra.mxu0 %v511
      %v613 = vpop.f32.mrf.mxu0
      %v614 = vadd.f32 0.0, %v613
      %v615 = vpop.f32.mrf.mxu0
      %616 = vmatprep.mubr.f32.mxu0 0.0
      %617 = vmatmul.mubr.f32.gmra.mxu0 %v514
      %v618 = vpop.f32.mrf.mxu0
      %v619 = vadd.f32 0.0, %v618
      %v620 = vpop.f32.mrf.mxu0
      %621 = vmatprep.mubr.f32.mxu0 0.0
      %622 = vmatmul.mubr.f32.gmra.mxu0 %v517
      %v623 = vpop.f32.mrf.mxu0
      %v624 = vadd.f32 0.0, %v623
      %v625 = vpop.f32.mrf.mxu0
      %626 = vdwg.mxu0
      %v627 = vadd.f32 %v444, %v589
      %v628 = vadd.f32 %v449, %v594
      %v629 = vadd.f32 %v454, %v599
      %v630 = vadd.f32 %v459, %v604
      %v631 = vadd.f32 %v464, %v609
      %v632 = vadd.f32 %v469, %v614
      %v633 = vadd.f32 %v474, %v619
      %v634 = vadd.f32 %v479, %v624
      %v635 = vld [vmem:[%s484 + $0x1] sm:$0xff]
      %v636 = vld [vmem:[%s484 + $0x11] sm:$0xff]
      %v637 = vld [vmem:[%s484 + $0x21] sm:$0xff]
      %v638 = vld [vmem:[%s484 + $0x31] sm:$0xff]
      %v639 = vld [vmem:[%s484 + $0x41] sm:$0xff]
      %v640 = vld [vmem:[%s484 + $0x51] sm:$0xff]
      %v641 = vld [vmem:[%s484 + $0x61] sm:$0xff]
      %v642 = vld [vmem:[%s484 + $0x71] sm:$0xff]
      %s643 = scalar_lea.vmem %s1, 12
      %v644 = vld [vmem:[%s643] sm:$0xf]
      %v646 = vsel %vm216, %v635, 0
      %v649 = vsel %vm216, %v636, 0
      %v652 = vsel %vm216, %v637, 0
      %v655 = vsel %vm216, %v638, 0
      %v658 = vsel %vm216, %v639, 0
      %v661 = vsel %vm216, %v640, 0
      %v664 = vsel %vm216, %v641, 0
      %v667 = vsel %vm216, %v642, 0
      %v670 = vsel %vm241, %v644, 0
      %672 = vmatprep.subr.mxu0 0.0
      %673 = vmatpush1.msra.mxu0 0.0
      %674 = vmatprep.subr.mxu0 0.0
      %675 = vmatpush1.msra.mxu0 0.0
      %676 = vmatprep.subr.mxu0 0.0
      %677 = vmatpush1.msra.mxu0 0.0
      %678 = vmatprep.subr.mxu0 0.0
      %679 = vmatpush1.msra.mxu0 0.0
      %680 = vmatprep.subr.mxu0 0.0
      %681 = vmatpush1.msra.mxu0 0.0
      %682 = vmatprep.subr.mxu0 0.0
      %683 = vmatpush1.msra.mxu0 0.0
      %684 = vmatprep.subr.mxu0 0.0
      %685 = vmatpush1.msra.mxu0 0.0
      %686 = vmatprep.subr.mxu0 0.0
      %687 = vmatpush1.msra.mxu0 0.0
      %688 = vmatprep.subr.mxu0 0.0
      %689 = vmatpush1.msra.mxu0 0.0
      %690 = vmatprep.subr.mxu0 0.0
      %691 = vmatpush1.msra.mxu0 0.0
      %692 = vmatprep.subr.mxu0 0.0
      %693 = vmatpush1.msra.mxu0 0.0
      %694 = vmatprep.subr.mxu0 0.0
      %695 = vmatpush1.msra.mxu0 0.0
      %696 = vmatprep.subr.mxu0 0.0
      %697 = vmatpush1.msra.mxu0 0.0
      %698 = vmatprep.subr.mxu0 0.0
      %699 = vmatpush1.msra.mxu0 0.0
      %700 = vmatprep.subr.mxu0 0.0
      %701 = vmatpush1.msra.mxu0 0.0
      %702 = vmatprep.subr.mxu0 0.0
      %703 = vmatpush1.msra.mxu0 %v670
      %704 = vmatprep.subr.mxu0 0.0
      %705 = vmatpush2.msra.mxu0 0.0
      %706 = vmatprep.subr.mxu0 0.0
      %707 = vmatpush2.msra.mxu0 0.0
      %708 = vmatprep.subr.mxu0 0.0
      %709 = vmatpush2.msra.mxu0 0.0
      %710 = vmatprep.subr.mxu0 0.0
      %711 = vmatpush2.msra.mxu0 0.0
      %712 = vmatprep.subr.mxu0 0.0
      %713 = vmatpush2.msra.mxu0 0.0
      %714 = vmatprep.subr.mxu0 0.0
      %715 = vmatpush2.msra.mxu0 0.0
      %716 = vmatprep.subr.mxu0 0.0
      %717 = vmatpush2.msra.mxu0 0.0
      %718 = vmatprep.subr.mxu0 0.0
      %719 = vmatpush2.msra.mxu0 0.0
      %720 = vmatprep.subr.mxu0 0.0
      %721 = vmatpush2.msra.mxu0 0.0
      %722 = vmatprep.subr.mxu0 0.0
      %723 = vmatpush2.msra.mxu0 0.0
      %724 = vmatprep.subr.mxu0 0.0
      %725 = vmatpush2.msra.mxu0 0.0
      %726 = vmatprep.subr.mxu0 0.0
      %727 = vmatpush2.msra.mxu0 0.0
      %728 = vmatprep.subr.mxu0 0.0
      %729 = vmatpush2.msra.mxu0 0.0
      %730 = vmatprep.subr.mxu0 0.0
      %731 = vmatpush2.msra.mxu0 0.0
      %732 = vmatprep.subr.mxu0 0.0
      %733 = vmatpush2.msra.mxu0 0.0
      %734 = vmatprep.subr.mxu0 0.0
      %735 = vmatpush2.msra.mxu0 0.0
      %736 = vmatprep.mubr.f32.mxu0 0.0
      %737 = vmatmul.mubr.f32.gmra.mxu0 %v646
      %v738 = vpop.f32.mrf.mxu0
      %v739 = vadd.f32 0.0, %v738
      %v740 = vpop.f32.mrf.mxu0
      %741 = vmatprep.mubr.f32.mxu0 0.0
      %742 = vmatmul.mubr.f32.gmra.mxu0 %v649
      %v743 = vpop.f32.mrf.mxu0
      %v744 = vadd.f32 0.0, %v743
      %v745 = vpop.f32.mrf.mxu0
      %746 = vmatprep.mubr.f32.mxu0 0.0
      %747 = vmatmul.mubr.f32.gmra.mxu0 %v652
      %v748 = vpop.f32.mrf.mxu0
      %v749 = vadd.f32 0.0, %v748
      %v750 = vpop.f32.mrf.mxu0
      %751 = vmatprep.mubr.f32.mxu0 0.0
      %752 = vmatmul.mubr.f32.gmra.mxu0 %v655
      %v753 = vpop.f32.mrf.mxu0
      %v754 = vadd.f32 0.0, %v753
      %v755 = vpop.f32.mrf.mxu0
      %756 = vmatprep.mubr.f32.mxu0 0.0
      %757 = vmatmul.mubr.f32.gmra.mxu0 %v658
      %v758 = vpop.f32.mrf.mxu0
      %v759 = vadd.f32 0.0, %v758
      %v760 = vpop.f32.mrf.mxu0
      %761 = vmatprep.mubr.f32.mxu0 0.0
      %762 = vmatmul.mubr.f32.gmra.mxu0 %v661
      %v763 = vpop.f32.mrf.mxu0
      %v764 = vadd.f32 0.0, %v763
      %v765 = vpop.f32.mrf.mxu0
      %766 = vmatprep.mubr.f32.mxu0 0.0
      %767 = vmatmul.mubr.f32.gmra.mxu0 %v664
      %v768 = vpop.f32.mrf.mxu0
      %v769 = vadd.f32 0.0, %v768
      %v770 = vpop.f32.mrf.mxu0
      %771 = vmatprep.mubr.f32.mxu0 0.0
      %772 = vmatmul.mubr.f32.gmra.mxu0 %v667
      %v773 = vpop.f32.mrf.mxu0
      %v774 = vadd.f32 0.0, %v773
      %v775 = vpop.f32.mrf.mxu0
      %776 = vdwg.mxu0
      %v777 = vadd.f32 %v627, %v739
      %v778 = vadd.f32 %v628, %v744
      %v779 = vadd.f32 %v629, %v749
      %v780 = vadd.f32 %v630, %v754
      %v781 = vadd.f32 %v631, %v759
      %v782 = vadd.f32 %v632, %v764
      %v783 = vadd.f32 %v633, %v769
      %v784 = vadd.f32 %v634, %v774
      %s785 = scalar_lea.vmem %s1, 16
      %v786 = vld [vmem:[%s785] sm:$0xf]
      %v787 = vld [vmem:[%s196 + $0x2] sm:$0xff]
      %v788 = vld [vmem:[%s196 + $0x12] sm:$0xff]
      %v789 = vld [vmem:[%s196 + $0x22] sm:$0xff]
      %v790 = vld [vmem:[%s196 + $0x32] sm:$0xff]
      %v791 = vld [vmem:[%s196 + $0x42] sm:$0xff]
      %v792 = vld [vmem:[%s196 + $0x52] sm:$0xff]
      %v793 = vld [vmem:[%s196 + $0x62] sm:$0xff]
      %v794 = vld [vmem:[%s196 + $0x72] sm:$0xff]
      %s795 = scalar_lea.vmem %s1, 20
      %v796 = vld [vmem:[%s795] sm:$0xf]
      %v798 = vsel %vm216, %v787, 0
      %v801 = vsel %vm216, %v788, 0
      %v804 = vsel %vm216, %v789, 0
      %v807 = vsel %vm216, %v790, 0
      %v810 = vsel %vm216, %v791, 0
      %v813 = vsel %vm216, %v792, 0
      %v816 = vsel %vm216, %v793, 0
      %v819 = vsel %vm216, %v794, 0
      %v822 = vsel %vm241, %v796, 0
      %824 = vmatprep.subr.mxu0 0.0
      %825 = vmatpush1.msra.mxu0 0.0
      %826 = vmatprep.subr.mxu0 0.0
      %827 = vmatpush1.msra.mxu0 0.0
      %828 = vmatprep.subr.mxu0 0.0
      %829 = vmatpush1.msra.mxu0 0.0
      %830 = vmatprep.subr.mxu0 0.0
      %831 = vmatpush1.msra.mxu0 0.0
      %832 = vmatprep.subr.mxu0 0.0
      %833 = vmatpush1.msra.mxu0 0.0
      %834 = vmatprep.subr.mxu0 0.0
      %835 = vmatpush1.msra.mxu0 0.0
      %836 = vmatprep.subr.mxu0 0.0
      %837 = vmatpush1.msra.mxu0 0.0
      %838 = vmatprep.subr.mxu0 0.0
      %839 = vmatpush1.msra.mxu0 0.0
      %840 = vmatprep.subr.mxu0 0.0
      %841 = vmatpush1.msra.mxu0 0.0
      %842 = vmatprep.subr.mxu0 0.0
      %843 = vmatpush1.msra.mxu0 0.0
      %844 = vmatprep.subr.mxu0 0.0
      %845 = vmatpush1.msra.mxu0 0.0
      %846 = vmatprep.subr.mxu0 0.0
      %847 = vmatpush1.msra.mxu0 0.0
      %848 = vmatprep.subr.mxu0 0.0
      %849 = vmatpush1.msra.mxu0 0.0
      %850 = vmatprep.subr.mxu0 0.0
      %851 = vmatpush1.msra.mxu0 0.0
      %852 = vmatprep.subr.mxu0 0.0
      %853 = vmatpush1.msra.mxu0 0.0
      %854 = vmatprep.subr.mxu0 0.0
      %855 = vmatpush1.msra.mxu0 %v822
      %856 = vmatprep.subr.mxu0 0.0
      %857 = vmatpush2.msra.mxu0 0.0
      %858 = vmatprep.subr.mxu0 0.0
      %859 = vmatpush2.msra.mxu0 0.0
      %860 = vmatprep.subr.mxu0 0.0
      %861 = vmatpush2.msra.mxu0 0.0
      %862 = vmatprep.subr.mxu0 0.0
      %863 = vmatpush2.msra.mxu0 0.0
      %864 = vmatprep.subr.mxu0 0.0
      %865 = vmatpush2.msra.mxu0 0.0
      %866 = vmatprep.subr.mxu0 0.0
      %867 = vmatpush2.msra.mxu0 0.0
      %868 = vmatprep.subr.mxu0 0.0
      %869 = vmatpush2.msra.mxu0 0.0
      %870 = vmatprep.subr.mxu0 0.0
      %871 = vmatpush2.msra.mxu0 0.0
      %872 = vmatprep.subr.mxu0 0.0
      %873 = vmatpush2.msra.mxu0 0.0
      %874 = vmatprep.subr.mxu0 0.0
      %875 = vmatpush2.msra.mxu0 0.0
      %876 = vmatprep.subr.mxu0 0.0
      %877 = vmatpush2.msra.mxu0 0.0
      %878 = vmatprep.subr.mxu0 0.0
      %879 = vmatpush2.msra.mxu0 0.0
      %880 = vmatprep.subr.mxu0 0.0
      %881 = vmatpush2.msra.mxu0 0.0
      %882 = vmatprep.subr.mxu0 0.0
      %883 = vmatpush2.msra.mxu0 0.0
      %884 = vmatprep.subr.mxu0 0.0
      %885 = vmatpush2.msra.mxu0 0.0
      %886 = vmatprep.subr.mxu0 0.0
      %887 = vmatpush2.msra.mxu0 0.0
      %888 = vmatprep.mubr.f32.mxu0 0.0
      %889 = vmatmul.mubr.f32.gmra.mxu0 %v798
      %v890 = vpop.f32.mrf.mxu0
      %v891 = vadd.f32 0.0, %v890
      %v892 = vpop.f32.mrf.mxu0
      %893 = vmatprep.mubr.f32.mxu0 0.0
      %894 = vmatmul.mubr.f32.gmra.mxu0 %v801
      %v895 = vpop.f32.mrf.mxu0
      %v896 = vadd.f32 0.0, %v895
      %v897 = vpop.f32.mrf.mxu0
      %898 = vmatprep.mubr.f32.mxu0 0.0
      %899 = vmatmul.mubr.f32.gmra.mxu0 %v804
      %v900 = vpop.f32.mrf.mxu0
      %v901 = vadd.f32 0.0, %v900
      %v902 = vpop.f32.mrf.mxu0
      %903 = vmatprep.mubr.f32.mxu0 0.0
      %904 = vmatmul.mubr.f32.gmra.mxu0 %v807
      %v905 = vpop.f32.mrf.mxu0
      %v906 = vadd.f32 0.0, %v905
      %v907 = vpop.f32.mrf.mxu0
      %908 = vmatprep.mubr.f32.mxu0 0.0
      %909 = vmatmul.mubr.f32.gmra.mxu0 %v810
      %v910 = vpop.f32.mrf.mxu0
      %v911 = vadd.f32 0.0, %v910
      %v912 = vpop.f32.mrf.mxu0
      %913 = vmatprep.mubr.f32.mxu0 0.0
      %914 = vmatmul.mubr.f32.gmra.mxu0 %v813
      %v915 = vpop.f32.mrf.mxu0
      %v916 = vadd.f32 0.0, %v915
      %v917 = vpop.f32.mrf.mxu0
      %918 = vmatprep.mubr.f32.mxu0 0.0
      %919 = vmatmul.mubr.f32.gmra.mxu0 %v816
      %v920 = vpop.f32.mrf.mxu0
      %v921 = vadd.f32 0.0, %v920
      %v922 = vpop.f32.mrf.mxu0
      %923 = vmatprep.mubr.f32.mxu0 0.0
      %924 = vmatmul.mubr.f32.gmra.mxu0 %v819
      %v925 = vpop.f32.mrf.mxu0
      %v926 = vadd.f32 0.0, %v925
      %v927 = vpop.f32.mrf.mxu0
      %928 = vdwg.mxu0
      %v930 = vsel %vm241, %v786, 0
      %932 = vmatprep.subr.mxu0 0.0
      %933 = vmatpush1.msra.mxu0 0.0
      %934 = vmatprep.subr.mxu0 0.0
      %935 = vmatpush1.msra.mxu0 0.0
      %936 = vmatprep.subr.mxu0 0.0
      %937 = vmatpush1.msra.mxu0 0.0
      %938 = vmatprep.subr.mxu0 0.0
      %939 = vmatpush1.msra.mxu0 0.0
      %940 = vmatprep.subr.mxu0 0.0
      %941 = vmatpush1.msra.mxu0 0.0
      %942 = vmatprep.subr.mxu0 0.0
      %943 = vmatpush1.msra.mxu0 0.0
      %944 = vmatprep.subr.mxu0 0.0
      %945 = vmatpush1.msra.mxu0 0.0
      %946 = vmatprep.subr.mxu0 0.0
      %947 = vmatpush1.msra.mxu0 0.0
      %948 = vmatprep.subr.mxu0 0.0
      %949 = vmatpush1.msra.mxu0 0.0
      %950 = vmatprep.subr.mxu0 0.0
      %951 = vmatpush1.msra.mxu0 0.0
      %952 = vmatprep.subr.mxu0 0.0
      %953 = vmatpush1.msra.mxu0 0.0
      %954 = vmatprep.subr.mxu0 0.0
      %955 = vmatpush1.msra.mxu0 0.0
      %956 = vmatprep.subr.mxu0 0.0
      %957 = vmatpush1.msra.mxu0 0.0
      %958 = vmatprep.subr.mxu0 0.0
      %959 = vmatpush1.msra.mxu0 0.0
      %960 = vmatprep.subr.mxu0 0.0
      %961 = vmatpush1.msra.mxu0 0.0
      %962 = vmatprep.subr.mxu0 0.0
      %963 = vmatpush1.msra.mxu0 %v930
      %964 = vmatprep.subr.mxu0 0.0
      %965 = vmatpush2.msra.mxu0 0.0
      %966 = vmatprep.subr.mxu0 0.0
      %967 = vmatpush2.msra.mxu0 0.0
      %968 = vmatprep.subr.mxu0 0.0
      %969 = vmatpush2.msra.mxu0 0.0
      %970 = vmatprep.subr.mxu0 0.0
      %971 = vmatpush2.msra.mxu0 0.0
      %972 = vmatprep.subr.mxu0 0.0
      %973 = vmatpush2.msra.mxu0 0.0
      %974 = vmatprep.subr.mxu0 0.0
      %975 = vmatpush2.msra.mxu0 0.0
      %976 = vmatprep.subr.mxu0 0.0
      %977 = vmatpush2.msra.mxu0 0.0
      %978 = vmatprep.subr.mxu0 0.0
      %979 = vmatpush2.msra.mxu0 0.0
      %980 = vmatprep.subr.mxu0 0.0
      %981 = vmatpush2.msra.mxu0 0.0
      %982 = vmatprep.subr.mxu0 0.0
      %983 = vmatpush2.msra.mxu0 0.0
      %984 = vmatprep.subr.mxu0 0.0
      %985 = vmatpush2.msra.mxu0 0.0
      %986 = vmatprep.subr.mxu0 0.0
      %987 = vmatpush2.msra.mxu0 0.0
      %988 = vmatprep.subr.mxu0 0.0
      %989 = vmatpush2.msra.mxu0 0.0
      %990 = vmatprep.subr.mxu0 0.0
      %991 = vmatpush2.msra.mxu0 0.0
      %992 = vmatprep.subr.mxu0 0.0
      %993 = vmatpush2.msra.mxu0 0.0
      %994 = vmatprep.subr.mxu0 0.0
      %995 = vmatpush2.msra.mxu0 0.0
      %996 = vmatprep.mubr.f32.mxu0 0.0
      %997 = vmatmul.mubr.f32.gmra.mxu0 %v218
      %v998 = vpop.f32.mrf.mxu0
      %v999 = vadd.f32 %v891, %v998
      %v1000 = vpop.f32.mrf.mxu0
      %1001 = vmatprep.mubr.f32.mxu0 0.0
      %1002 = vmatmul.mubr.f32.gmra.mxu0 %v221
      %v1003 = vpop.f32.mrf.mxu0
      %v1004 = vadd.f32 %v896, %v1003
      %v1005 = vpop.f32.mrf.mxu0
      %1006 = vmatprep.mubr.f32.mxu0 0.0
      %1007 = vmatmul.mubr.f32.gmra.mxu0 %v224
      %v1008 = vpop.f32.mrf.mxu0
      %v1009 = vadd.f32 %v901, %v1008
      %v1010 = vpop.f32.mrf.mxu0
      %1011 = vmatprep.mubr.f32.mxu0 0.0
      %1012 = vmatmul.mubr.f32.gmra.mxu0 %v227
      %v1013 = vpop.f32.mrf.mxu0
      %v1014 = vadd.f32 %v906, %v1013
      %v1015 = vpop.f32.mrf.mxu0
      %1016 = vmatprep.mubr.f32.mxu0 0.0
      %1017 = vmatmul.mubr.f32.gmra.mxu0 %v230
      %v1018 = vpop.f32.mrf.mxu0
      %v1019 = vadd.f32 %v911, %v1018
      %v1020 = vpop.f32.mrf.mxu0
      %1021 = vmatprep.mubr.f32.mxu0 0.0
      %1022 = vmatmul.mubr.f32.gmra.mxu0 %v233
      %v1023 = vpop.f32.mrf.mxu0
      %v1024 = vadd.f32 %v916, %v1023
      %v1025 = vpop.f32.mrf.mxu0
      %1026 = vmatprep.mubr.f32.mxu0 0.0
      %1027 = vmatmul.mubr.f32.gmra.mxu0 %v236
      %v1028 = vpop.f32.mrf.mxu0
      %v1029 = vadd.f32 %v921, %v1028
      %v1030 = vpop.f32.mrf.mxu0
      %1031 = vmatprep.mubr.f32.mxu0 0.0
      %1032 = vmatmul.mubr.f32.gmra.mxu0 %v239
      %v1033 = vpop.f32.mrf.mxu0
      %v1034 = vadd.f32 %v926, %v1033
      %v1035 = vpop.f32.mrf.mxu0
      %1036 = vdwg.mxu0
      %s1037 = scalar_lea.vmem %s1, 24
      %v1038 = vld [vmem:[%s1037] sm:$0xf]
      %v1040 = vsel %vm241, %v1038, 0
      %1042 = vmatprep.subr.mxu0 0.0
      %1043 = vmatpush1.msra.mxu0 0.0
      %1044 = vmatprep.subr.mxu0 0.0
      %1045 = vmatpush1.msra.mxu0 0.0
      %1046 = vmatprep.subr.mxu0 0.0
      %1047 = vmatpush1.msra.mxu0 0.0
      %1048 = vmatprep.subr.mxu0 0.0
      %1049 = vmatpush1.msra.mxu0 0.0
      %1050 = vmatprep.subr.mxu0 0.0
      %1051 = vmatpush1.msra.mxu0 0.0
      %1052 = vmatprep.subr.mxu0 0.0
      %1053 = vmatpush1.msra.mxu0 0.0
      %1054 = vmatprep.subr.mxu0 0.0
      %1055 = vmatpush1.msra.mxu0 0.0
      %1056 = vmatprep.subr.mxu0 0.0
      %1057 = vmatpush1.msra.mxu0 0.0
      %1058 = vmatprep.subr.mxu0 0.0
      %1059 = vmatpush1.msra.mxu0 0.0
      %1060 = vmatprep.subr.mxu0 0.0
      %1061 = vmatpush1.msra.mxu0 0.0
      %1062 = vmatprep.subr.mxu0 0.0
      %1063 = vmatpush1.msra.mxu0 0.0
      %1064 = vmatprep.subr.mxu0 0.0
      %1065 = vmatpush1.msra.mxu0 0.0
      %1066 = vmatprep.subr.mxu0 0.0
      %1067 = vmatpush1.msra.mxu0 0.0
      %1068 = vmatprep.subr.mxu0 0.0
      %1069 = vmatpush1.msra.mxu0 0.0
      %1070 = vmatprep.subr.mxu0 0.0
      %1071 = vmatpush1.msra.mxu0 0.0
      %1072 = vmatprep.subr.mxu0 0.0
      %1073 = vmatpush1.msra.mxu0 %v1040
      %1074 = vmatprep.subr.mxu0 0.0
      %1075 = vmatpush2.msra.mxu0 0.0
      %1076 = vmatprep.subr.mxu0 0.0
      %1077 = vmatpush2.msra.mxu0 0.0
      %1078 = vmatprep.subr.mxu0 0.0
      %1079 = vmatpush2.msra.mxu0 0.0
      %1080 = vmatprep.subr.mxu0 0.0
      %1081 = vmatpush2.msra.mxu0 0.0
      %1082 = vmatprep.subr.mxu0 0.0
      %1083 = vmatpush2.msra.mxu0 0.0
      %1084 = vmatprep.subr.mxu0 0.0
      %1085 = vmatpush2.msra.mxu0 0.0
      %1086 = vmatprep.subr.mxu0 0.0
      %1087 = vmatpush2.msra.mxu0 0.0
      %1088 = vmatprep.subr.mxu0 0.0
      %1089 = vmatpush2.msra.mxu0 0.0
      %1090 = vmatprep.subr.mxu0 0.0
      %1091 = vmatpush2.msra.mxu0 0.0
      %1092 = vmatprep.subr.mxu0 0.0
      %1093 = vmatpush2.msra.mxu0 0.0
      %1094 = vmatprep.subr.mxu0 0.0
      %1095 = vmatpush2.msra.mxu0 0.0
      %1096 = vmatprep.subr.mxu0 0.0
      %1097 = vmatpush2.msra.mxu0 0.0
      %1098 = vmatprep.subr.mxu0 0.0
      %1099 = vmatpush2.msra.mxu0 0.0
      %1100 = vmatprep.subr.mxu0 0.0
      %1101 = vmatpush2.msra.mxu0 0.0
      %1102 = vmatprep.subr.mxu0 0.0
      %1103 = vmatpush2.msra.mxu0 0.0
      %1104 = vmatprep.subr.mxu0 0.0
      %1105 = vmatpush2.msra.mxu0 0.0
      %1106 = vmatprep.mubr.f32.mxu0 0.0
      %1107 = vmatmul.mubr.f32.gmra.mxu0 %v646
      %v1108 = vpop.f32.mrf.mxu0
      %v1109 = vadd.f32 0.0, %v1108
      %v1110 = vpop.f32.mrf.mxu0
      %1111 = vmatprep.mubr.f32.mxu0 0.0
      %1112 = vmatmul.mubr.f32.gmra.mxu0 %v649
      %v1113 = vpop.f32.mrf.mxu0
      %v1114 = vadd.f32 0.0, %v1113
      %v1115 = vpop.f32.mrf.mxu0
      %1116 = vmatprep.mubr.f32.mxu0 0.0
      %1117 = vmatmul.mubr.f32.gmra.mxu0 %v652
      %v1118 = vpop.f32.mrf.mxu0
      %v1119 = vadd.f32 0.0, %v1118
      %v1120 = vpop.f32.mrf.mxu0
      %1121 = vmatprep.mubr.f32.mxu0 0.0
      %1122 = vmatmul.mubr.f32.gmra.mxu0 %v655
      %v1123 = vpop.f32.mrf.mxu0
      %v1124 = vadd.f32 0.0, %v1123
      %v1125 = vpop.f32.mrf.mxu0
      %1126 = vmatprep.mubr.f32.mxu0 0.0
      %1127 = vmatmul.mubr.f32.gmra.mxu0 %v658
      %v1128 = vpop.f32.mrf.mxu0
      %v1129 = vadd.f32 0.0, %v1128
      %v1130 = vpop.f32.mrf.mxu0
      %1131 = vmatprep.mubr.f32.mxu0 0.0
      %1132 = vmatmul.mubr.f32.gmra.mxu0 %v661
      %v1133 = vpop.f32.mrf.mxu0
      %v1134 = vadd.f32 0.0, %v1133
      %v1135 = vpop.f32.mrf.mxu0
      %1136 = vmatprep.mubr.f32.mxu0 0.0
      %1137 = vmatmul.mubr.f32.gmra.mxu0 %v664
      %v1138 = vpop.f32.mrf.mxu0
      %v1139 = vadd.f32 0.0, %v1138
      %v1140 = vpop.f32.mrf.mxu0
      %1141 = vmatprep.mubr.f32.mxu0 0.0
      %1142 = vmatmul.mubr.f32.gmra.mxu0 %v667
      %v1143 = vpop.f32.mrf.mxu0
      %v1144 = vadd.f32 0.0, %v1143
      %v1145 = vpop.f32.mrf.mxu0
      %1146 = vdwg.mxu0
      %v1147 = vadd.f32 %v999, %v1109
      %v1148 = vadd.f32 %v1004, %v1114
      %v1149 = vadd.f32 %v1009, %v1119
      %v1150 = vadd.f32 %v1014, %v1124
      %v1151 = vadd.f32 %v1019, %v1129
      %v1152 = vadd.f32 %v1024, %v1134
      %v1153 = vadd.f32 %v1029, %v1139
      %v1154 = vadd.f32 %v1034, %v1144
      %v1155 = vld [vmem:[%s484 + $0x2] sm:$0xff]
      %v1156 = vld [vmem:[%s484 + $0x12] sm:$0xff]
      %v1157 = vld [vmem:[%s484 + $0x22] sm:$0xff]
      %v1158 = vld [vmem:[%s484 + $0x32] sm:$0xff]
      %v1159 = vld [vmem:[%s484 + $0x42] sm:$0xff]
      %v1160 = vld [vmem:[%s484 + $0x52] sm:$0xff]
      %v1161 = vld [vmem:[%s484 + $0x62] sm:$0xff]
      %v1162 = vld [vmem:[%s484 + $0x72] sm:$0xff]
      %s1163 = scalar_lea.vmem %s1, 28
      %v1164 = vld [vmem:[%s1163] sm:$0xf]
      %v1166 = vsel %vm216, %v1155, 0
      %v1169 = vsel %vm216, %v1156, 0
      %v1172 = vsel %vm216, %v1157, 0
      %v1175 = vsel %vm216, %v1158, 0
      %v1178 = vsel %vm216, %v1159, 0
      %v1181 = vsel %vm216, %v1160, 0
      %v1184 = vsel %vm216, %v1161, 0
      %v1187 = vsel %vm216, %v1162, 0
      %v1190 = vsel %vm241, %v1164, 0
      %1192 = vmatprep.subr.mxu0 0.0
      %1193 = vmatpush1.msra.mxu0 0.0
      %1194 = vmatprep.subr.mxu0 0.0
      %1195 = vmatpush1.msra.mxu0 0.0
      %1196 = vmatprep.subr.mxu0 0.0
      %1197 = vmatpush1.msra.mxu0 0.0
      %1198 = vmatprep.subr.mxu0 0.0
      %1199 = vmatpush1.msra.mxu0 0.0
      %1200 = vmatprep.subr.mxu0 0.0
      %1201 = vmatpush1.msra.mxu0 0.0
      %1202 = vmatprep.subr.mxu0 0.0
      %1203 = vmatpush1.msra.mxu0 0.0
      %1204 = vmatprep.subr.mxu0 0.0
      %1205 = vmatpush1.msra.mxu0 0.0
      %1206 = vmatprep.subr.mxu0 0.0
      %1207 = vmatpush1.msra.mxu0 0.0
      %1208 = vmatprep.subr.mxu0 0.0
      %1209 = vmatpush1.msra.mxu0 0.0
      %1210 = vmatprep.subr.mxu0 0.0
      %1211 = vmatpush1.msra.mxu0 0.0
      %1212 = vmatprep.subr.mxu0 0.0
      %1213 = vmatpush1.msra.mxu0 0.0
      %1214 = vmatprep.subr.mxu0 0.0
      %1215 = vmatpush1.msra.mxu0 0.0
      %1216 = vmatprep.subr.mxu0 0.0
      %1217 = vmatpush1.msra.mxu0 0.0
      %1218 = vmatprep.subr.mxu0 0.0
      %1219 = vmatpush1.msra.mxu0 0.0
      %1220 = vmatprep.subr.mxu0 0.0
      %1221 = vmatpush1.msra.mxu0 0.0
      %1222 = vmatprep.subr.mxu0 0.0
      %1223 = vmatpush1.msra.mxu0 %v1190
      %1224 = vmatprep.subr.mxu0 0.0
      %1225 = vmatpush2.msra.mxu0 0.0
      %1226 = vmatprep.subr.mxu0 0.0
      %1227 = vmatpush2.msra.mxu0 0.0
      %1228 = vmatprep.subr.mxu0 0.0
      %1229 = vmatpush2.msra.mxu0 0.0
      %1230 = vmatprep.subr.mxu0 0.0
      %1231 = vmatpush2.msra.mxu0 0.0
      %1232 = vmatprep.subr.mxu0 0.0
      %1233 = vmatpush2.msra.mxu0 0.0
      %1234 = vmatprep.subr.mxu0 0.0
      %1235 = vmatpush2.msra.mxu0 0.0
      %1236 = vmatprep.subr.mxu0 0.0
      %1237 = vmatpush2.msra.mxu0 0.0
      %1238 = vmatprep.subr.mxu0 0.0
      %1239 = vmatpush2.msra.mxu0 0.0
      %1240 = vmatprep.subr.mxu0 0.0
      %1241 = vmatpush2.msra.mxu0 0.0
      %1242 = vmatprep.subr.mxu0 0.0
      %1243 = vmatpush2.msra.mxu0 0.0
      %1244 = vmatprep.subr.mxu0 0.0
      %1245 = vmatpush2.msra.mxu0 0.0
      %1246 = vmatprep.subr.mxu0 0.0
      %1247 = vmatpush2.msra.mxu0 0.0
      %1248 = vmatprep.subr.mxu0 0.0
      %1249 = vmatpush2.msra.mxu0 0.0
      %1250 = vmatprep.subr.mxu0 0.0
      %1251 = vmatpush2.msra.mxu0 0.0
      %1252 = vmatprep.subr.mxu0 0.0
      %1253 = vmatpush2.msra.mxu0 0.0
      %1254 = vmatprep.subr.mxu0 0.0
      %1255 = vmatpush2.msra.mxu0 0.0
      %1256 = vmatprep.mubr.f32.mxu0 0.0
      %1257 = vmatmul.mubr.f32.gmra.mxu0 %v1166
      %v1258 = vpop.f32.mrf.mxu0
      %v1259 = vadd.f32 0.0, %v1258
      %v1260 = vpop.f32.mrf.mxu0
      %1261 = vmatprep.mubr.f32.mxu0 0.0
      %1262 = vmatmul.mubr.f32.gmra.mxu0 %v1169
      %v1263 = vpop.f32.mrf.mxu0
      %v1264 = vadd.f32 0.0, %v1263
      %v1265 = vpop.f32.mrf.mxu0
      %1266 = vmatprep.mubr.f32.mxu0 0.0
      %1267 = vmatmul.mubr.f32.gmra.mxu0 %v1172
      %v1268 = vpop.f32.mrf.mxu0
      %v1269 = vadd.f32 0.0, %v1268
      %v1270 = vpop.f32.mrf.mxu0
      %1271 = vmatprep.mubr.f32.mxu0 0.0
      %1272 = vmatmul.mubr.f32.gmra.mxu0 %v1175
      %v1273 = vpop.f32.mrf.mxu0
      %v1274 = vadd.f32 0.0, %v1273
      %v1275 = vpop.f32.mrf.mxu0
      %1276 = vmatprep.mubr.f32.mxu0 0.0
      %1277 = vmatmul.mubr.f32.gmra.mxu0 %v1178
      %v1278 = vpop.f32.mrf.mxu0
      %v1279 = vadd.f32 0.0, %v1278
      %v1280 = vpop.f32.mrf.mxu0
      %1281 = vmatprep.mubr.f32.mxu0 0.0
      %1282 = vmatmul.mubr.f32.gmra.mxu0 %v1181
      %v1283 = vpop.f32.mrf.mxu0
      %v1284 = vadd.f32 0.0, %v1283
      %v1285 = vpop.f32.mrf.mxu0
      %1286 = vmatprep.mubr.f32.mxu0 0.0
      %1287 = vmatmul.mubr.f32.gmra.mxu0 %v1184
      %v1288 = vpop.f32.mrf.mxu0
      %v1289 = vadd.f32 0.0, %v1288
      %v1290 = vpop.f32.mrf.mxu0
      %1291 = vmatprep.mubr.f32.mxu0 0.0
      %1292 = vmatmul.mubr.f32.gmra.mxu0 %v1187
      %v1293 = vpop.f32.mrf.mxu0
      %v1294 = vadd.f32 0.0, %v1293
      %v1295 = vpop.f32.mrf.mxu0
      %1296 = vdwg.mxu0
      %v1297 = vadd.f32 %v1147, %v1259
      %v1298 = vadd.f32 %v1148, %v1264
      %v1299 = vadd.f32 %v1149, %v1269
      %v1300 = vadd.f32 %v1150, %v1274
      %v1301 = vadd.f32 %v1151, %v1279
      %v1302 = vadd.f32 %v1152, %v1284
      %v1303 = vadd.f32 %v1153, %v1289
      %v1304 = vadd.f32 %v1154, %v1294
      %s1305 = scalar_lea.vmem %s1, 32
      %v1306 = vld [vmem:[%s1305] sm:$0xf]
      %s1307 = scalar_lea.vmem %s1, 36
      %v1308 = vld [vmem:[%s1307] sm:$0xf]
      %v1310 = vsel %vm241, %v1308, 0
      %1312 = vmatprep.subr.mxu0 0.0
      %1313 = vmatpush1.msra.mxu0 0.0
      %1314 = vmatprep.subr.mxu0 0.0
      %1315 = vmatpush1.msra.mxu0 0.0
      %1316 = vmatprep.subr.mxu0 0.0
      %1317 = vmatpush1.msra.mxu0 0.0
      %1318 = vmatprep.subr.mxu0 0.0
      %1319 = vmatpush1.msra.mxu0 0.0
      %1320 = vmatprep.subr.mxu0 0.0
      %1321 = vmatpush1.msra.mxu0 0.0
      %1322 = vmatprep.subr.mxu0 0.0
      %1323 = vmatpush1.msra.mxu0 0.0
      %1324 = vmatprep.subr.mxu0 0.0
      %1325 = vmatpush1.msra.mxu0 0.0
      %1326 = vmatprep.subr.mxu0 0.0
      %1327 = vmatpush1.msra.mxu0 0.0
      %1328 = vmatprep.subr.mxu0 0.0
      %1329 = vmatpush1.msra.mxu0 0.0
      %1330 = vmatprep.subr.mxu0 0.0
      %1331 = vmatpush1.msra.mxu0 0.0
      %1332 = vmatprep.subr.mxu0 0.0
      %1333 = vmatpush1.msra.mxu0 0.0
      %1334 = vmatprep.subr.mxu0 0.0
      %1335 = vmatpush1.msra.mxu0 0.0
      %1336 = vmatprep.subr.mxu0 0.0
      %1337 = vmatpush1.msra.mxu0 0.0
      %1338 = vmatprep.subr.mxu0 0.0
      %1339 = vmatpush1.msra.mxu0 0.0
      %1340 = vmatprep.subr.mxu0 0.0
      %1341 = vmatpush1.msra.mxu0 0.0
      %1342 = vmatprep.subr.mxu0 0.0
      %1343 = vmatpush1.msra.mxu0 %v1310
      %1344 = vmatprep.subr.mxu0 0.0
      %1345 = vmatpush2.msra.mxu0 0.0
      %1346 = vmatprep.subr.mxu0 0.0
      %1347 = vmatpush2.msra.mxu0 0.0
      %1348 = vmatprep.subr.mxu0 0.0
      %1349 = vmatpush2.msra.mxu0 0.0
      %1350 = vmatprep.subr.mxu0 0.0
      %1351 = vmatpush2.msra.mxu0 0.0
      %1352 = vmatprep.subr.mxu0 0.0
      %1353 = vmatpush2.msra.mxu0 0.0
      %1354 = vmatprep.subr.mxu0 0.0
      %1355 = vmatpush2.msra.mxu0 0.0
      %1356 = vmatprep.subr.mxu0 0.0
      %1357 = vmatpush2.msra.mxu0 0.0
      %1358 = vmatprep.subr.mxu0 0.0
      %1359 = vmatpush2.msra.mxu0 0.0
      %1360 = vmatprep.subr.mxu0 0.0
      %1361 = vmatpush2.msra.mxu0 0.0
      %1362 = vmatprep.subr.mxu0 0.0
      %1363 = vmatpush2.msra.mxu0 0.0
      %1364 = vmatprep.subr.mxu0 0.0
      %1365 = vmatpush2.msra.mxu0 0.0
      %1366 = vmatprep.subr.mxu0 0.0
      %1367 = vmatpush2.msra.mxu0 0.0
      %1368 = vmatprep.subr.mxu0 0.0
      %1369 = vmatpush2.msra.mxu0 0.0
      %1370 = vmatprep.subr.mxu0 0.0
      %1371 = vmatpush2.msra.mxu0 0.0
      %1372 = vmatprep.subr.mxu0 0.0
      %1373 = vmatpush2.msra.mxu0 0.0
      %1374 = vmatprep.subr.mxu0 0.0
      %1375 = vmatpush2.msra.mxu0 0.0
      %1376 = vmatprep.mubr.f32.mxu0 0.0
      %1377 = vmatmul.mubr.f32.gmra.mxu0 %v646
      %v1378 = vpop.f32.mrf.mxu0
      %v1379 = vadd.f32 0.0, %v1378
      %v1380 = vpop.f32.mrf.mxu0
      %1381 = vmatprep.mubr.f32.mxu0 0.0
      %1382 = vmatmul.mubr.f32.gmra.mxu0 %v649
      %v1383 = vpop.f32.mrf.mxu0
      %v1384 = vadd.f32 0.0, %v1383
      %v1385 = vpop.f32.mrf.mxu0
      %1386 = vmatprep.mubr.f32.mxu0 0.0
      %1387 = vmatmul.mubr.f32.gmra.mxu0 %v652
      %v1388 = vpop.f32.mrf.mxu0
      %v1389 = vadd.f32 0.0, %v1388
      %v1390 = vpop.f32.mrf.mxu0
      %1391 = vmatprep.mubr.f32.mxu0 0.0
      %1392 = vmatmul.mubr.f32.gmra.mxu0 %v655
      %v1393 = vpop.f32.mrf.mxu0
      %v1394 = vadd.f32 0.0, %v1393
      %v1395 = vpop.f32.mrf.mxu0
      %1396 = vmatprep.mubr.f32.mxu0 0.0
      %1397 = vmatmul.mubr.f32.gmra.mxu0 %v658
      %v1398 = vpop.f32.mrf.mxu0
      %v1399 = vadd.f32 0.0, %v1398
      %v1400 = vpop.f32.mrf.mxu0
      %1401 = vmatprep.mubr.f32.mxu0 0.0
      %1402 = vmatmul.mubr.f32.gmra.mxu0 %v661
      %v1403 = vpop.f32.mrf.mxu0
      %v1404 = vadd.f32 0.0, %v1403
      %v1405 = vpop.f32.mrf.mxu0
      %1406 = vmatprep.mubr.f32.mxu0 0.0
      %1407 = vmatmul.mubr.f32.gmra.mxu0 %v664
      %v1408 = vpop.f32.mrf.mxu0
      %v1409 = vadd.f32 0.0, %v1408
      %v1410 = vpop.f32.mrf.mxu0
      %1411 = vmatprep.mubr.f32.mxu0 0.0
      %1412 = vmatmul.mubr.f32.gmra.mxu0 %v667
      %v1413 = vpop.f32.mrf.mxu0
      %v1414 = vadd.f32 0.0, %v1413
      %v1415 = vpop.f32.mrf.mxu0
      %1416 = vdwg.mxu0
      %v1418 = vsel %vm241, %v1306, 0
      %1420 = vmatprep.subr.mxu0 0.0
      %1421 = vmatpush1.msra.mxu0 0.0
      %1422 = vmatprep.subr.mxu0 0.0
      %1423 = vmatpush1.msra.mxu0 0.0
      %1424 = vmatprep.subr.mxu0 0.0
      %1425 = vmatpush1.msra.mxu0 0.0
      %1426 = vmatprep.subr.mxu0 0.0
      %1427 = vmatpush1.msra.mxu0 0.0
      %1428 = vmatprep.subr.mxu0 0.0
      %1429 = vmatpush1.msra.mxu0 0.0
      %1430 = vmatprep.subr.mxu0 0.0
      %1431 = vmatpush1.msra.mxu0 0.0
      %1432 = vmatprep.subr.mxu0 0.0
      %1433 = vmatpush1.msra.mxu0 0.0
      %1434 = vmatprep.subr.mxu0 0.0
      %1435 = vmatpush1.msra.mxu0 0.0
      %1436 = vmatprep.subr.mxu0 0.0
      %1437 = vmatpush1.msra.mxu0 0.0
      %1438 = vmatprep.subr.mxu0 0.0
      %1439 = vmatpush1.msra.mxu0 0.0
      %1440 = vmatprep.subr.mxu0 0.0
      %1441 = vmatpush1.msra.mxu0 0.0
      %1442 = vmatprep.subr.mxu0 0.0
      %1443 = vmatpush1.msra.mxu0 0.0
      %1444 = vmatprep.subr.mxu0 0.0
      %1445 = vmatpush1.msra.mxu0 0.0
      %1446 = vmatprep.subr.mxu0 0.0
      %1447 = vmatpush1.msra.mxu0 0.0
      %1448 = vmatprep.subr.mxu0 0.0
      %1449 = vmatpush1.msra.mxu0 0.0
      %1450 = vmatprep.subr.mxu0 0.0
      %1451 = vmatpush1.msra.mxu0 %v1418
      %1452 = vmatprep.subr.mxu0 0.0
      %1453 = vmatpush2.msra.mxu0 0.0
      %1454 = vmatprep.subr.mxu0 0.0
      %1455 = vmatpush2.msra.mxu0 0.0
      %1456 = vmatprep.subr.mxu0 0.0
      %1457 = vmatpush2.msra.mxu0 0.0
      %1458 = vmatprep.subr.mxu0 0.0
      %1459 = vmatpush2.msra.mxu0 0.0
      %1460 = vmatprep.subr.mxu0 0.0
      %1461 = vmatpush2.msra.mxu0 0.0
      %1462 = vmatprep.subr.mxu0 0.0
      %1463 = vmatpush2.msra.mxu0 0.0
      %1464 = vmatprep.subr.mxu0 0.0
      %1465 = vmatpush2.msra.mxu0 0.0
      %1466 = vmatprep.subr.mxu0 0.0
      %1467 = vmatpush2.msra.mxu0 0.0
      %1468 = vmatprep.subr.mxu0 0.0
      %1469 = vmatpush2.msra.mxu0 0.0
      %1470 = vmatprep.subr.mxu0 0.0
      %1471 = vmatpush2.msra.mxu0 0.0
      %1472 = vmatprep.subr.mxu0 0.0
      %1473 = vmatpush2.msra.mxu0 0.0
      %1474 = vmatprep.subr.mxu0 0.0
      %1475 = vmatpush2.msra.mxu0 0.0
      %1476 = vmatprep.subr.mxu0 0.0
      %1477 = vmatpush2.msra.mxu0 0.0
      %1478 = vmatprep.subr.mxu0 0.0
      %1479 = vmatpush2.msra.mxu0 0.0
      %1480 = vmatprep.subr.mxu0 0.0
      %1481 = vmatpush2.msra.mxu0 0.0
      %1482 = vmatprep.subr.mxu0 0.0
      %1483 = vmatpush2.msra.mxu0 0.0
      %1484 = vmatprep.mubr.f32.mxu0 0.0
      %1485 = vmatmul.mubr.f32.gmra.mxu0 %v496
      %v1486 = vpop.f32.mrf.mxu0
      %v1487 = vadd.f32 %v1379, %v1486
      %v1488 = vpop.f32.mrf.mxu0
      %1489 = vmatprep.mubr.f32.mxu0 0.0
      %1490 = vmatmul.mubr.f32.gmra.mxu0 %v499
      %v1491 = vpop.f32.mrf.mxu0
      %v1492 = vadd.f32 %v1384, %v1491
      %v1493 = vpop.f32.mrf.mxu0
      %1494 = vmatprep.mubr.f32.mxu0 0.0
      %1495 = vmatmul.mubr.f32.gmra.mxu0 %v502
      %v1496 = vpop.f32.mrf.mxu0
      %v1497 = vadd.f32 %v1389, %v1496
      %v1498 = vpop.f32.mrf.mxu0
      %1499 = vmatprep.mubr.f32.mxu0 0.0
      %1500 = vmatmul.mubr.f32.gmra.mxu0 %v505
      %v1501 = vpop.f32.mrf.mxu0
      %v1502 = vadd.f32 %v1394, %v1501
      %v1503 = vpop.f32.mrf.mxu0
      %1504 = vmatprep.mubr.f32.mxu0 0.0
      %1505 = vmatmul.mubr.f32.gmra.mxu0 %v508
      %v1506 = vpop.f32.mrf.mxu0
      %v1507 = vadd.f32 %v1399, %v1506
      %v1508 = vpop.f32.mrf.mxu0
      %1509 = vmatprep.mubr.f32.mxu0 0.0
      %1510 = vmatmul.mubr.f32.gmra.mxu0 %v511
      %v1511 = vpop.f32.mrf.mxu0
      %v1512 = vadd.f32 %v1404, %v1511
      %v1513 = vpop.f32.mrf.mxu0
      %1514 = vmatprep.mubr.f32.mxu0 0.0
      %1515 = vmatmul.mubr.f32.gmra.mxu0 %v514
      %v1516 = vpop.f32.mrf.mxu0
      %v1517 = vadd.f32 %v1409, %v1516
      %v1518 = vpop.f32.mrf.mxu0
      %1519 = vmatprep.mubr.f32.mxu0 0.0
      %1520 = vmatmul.mubr.f32.gmra.mxu0 %v517
      %v1521 = vpop.f32.mrf.mxu0
      %v1522 = vadd.f32 %v1414, %v1521
      %v1523 = vpop.f32.mrf.mxu0
      %1524 = vdwg.mxu0
      %s1525 = sadd.s32 %s194, 2
      %s1526 = smul.u32 %s1525, 16
      %s1527 = scalar_lea.vmem %s183, %s1526
      %v1528 = vld [vmem:[%s1527] sm:$0xff]
      %v1529 = vld [vmem:[%s1527 + $0x10] sm:$0xff]
      %v1530 = vld [vmem:[%s1527 + $0x20] sm:$0xff]
      %v1531 = vld [vmem:[%s1527 + $0x30] sm:$0xff]
      %v1532 = vld [vmem:[%s1527 + $0x40] sm:$0xff]
      %v1533 = vld [vmem:[%s1527 + $0x50] sm:$0xff]
      %v1534 = vld [vmem:[%s1527 + $0x60] sm:$0xff]
      %v1535 = vld [vmem:[%s1527 + $0x70] sm:$0xff]
      %s1536 = scalar_lea.vmem %s1, 40
      %v1537 = vld [vmem:[%s1536] sm:$0xf]
      %v1539 = vsel %vm216, %v1528, 0
      %v1542 = vsel %vm216, %v1529, 0
      %v1545 = vsel %vm216, %v1530, 0
      %v1548 = vsel %vm216, %v1531, 0
      %v1551 = vsel %vm216, %v1532, 0
      %v1554 = vsel %vm216, %v1533, 0
      %v1557 = vsel %vm216, %v1534, 0
      %v1560 = vsel %vm216, %v1535, 0
      %v1563 = vsel %vm241, %v1537, 0
      %1565 = vmatprep.subr.mxu0 0.0
      %1566 = vmatpush1.msra.mxu0 0.0
      %1567 = vmatprep.subr.mxu0 0.0
      %1568 = vmatpush1.msra.mxu0 0.0
      %1569 = vmatprep.subr.mxu0 0.0
      %1570 = vmatpush1.msra.mxu0 0.0
      %1571 = vmatprep.subr.mxu0 0.0
      %1572 = vmatpush1.msra.mxu0 0.0
      %1573 = vmatprep.subr.mxu0 0.0
      %1574 = vmatpush1.msra.mxu0 0.0
      %1575 = vmatprep.subr.mxu0 0.0
      %1576 = vmatpush1.msra.mxu0 0.0
      %1577 = vmatprep.subr.mxu0 0.0
      %1578 = vmatpush1.msra.mxu0 0.0
      %1579 = vmatprep.subr.mxu0 0.0
      %1580 = vmatpush1.msra.mxu0 0.0
      %1581 = vmatprep.subr.mxu0 0.0
      %1582 = vmatpush1.msra.mxu0 0.0
      %1583 = vmatprep.subr.mxu0 0.0
      %1584 = vmatpush1.msra.mxu0 0.0
      %1585 = vmatprep.subr.mxu0 0.0
      %1586 = vmatpush1.msra.mxu0 0.0
      %1587 = vmatprep.subr.mxu0 0.0
      %1588 = vmatpush1.msra.mxu0 0.0
      %1589 = vmatprep.subr.mxu0 0.0
      %1590 = vmatpush1.msra.mxu0 0.0
      %1591 = vmatprep.subr.mxu0 0.0
      %1592 = vmatpush1.msra.mxu0 0.0
      %1593 = vmatprep.subr.mxu0 0.0
      %1594 = vmatpush1.msra.mxu0 0.0
      %1595 = vmatprep.subr.mxu0 0.0
      %1596 = vmatpush1.msra.mxu0 %v1563
      %1597 = vmatprep.subr.mxu0 0.0
      %1598 = vmatpush2.msra.mxu0 0.0
      %1599 = vmatprep.subr.mxu0 0.0
      %1600 = vmatpush2.msra.mxu0 0.0
      %1601 = vmatprep.subr.mxu0 0.0
      %1602 = vmatpush2.msra.mxu0 0.0
      %1603 = vmatprep.subr.mxu0 0.0
      %1604 = vmatpush2.msra.mxu0 0.0
      %1605 = vmatprep.subr.mxu0 0.0
      %1606 = vmatpush2.msra.mxu0 0.0
      %1607 = vmatprep.subr.mxu0 0.0
      %1608 = vmatpush2.msra.mxu0 0.0
      %1609 = vmatprep.subr.mxu0 0.0
      %1610 = vmatpush2.msra.mxu0 0.0
      %1611 = vmatprep.subr.mxu0 0.0
      %1612 = vmatpush2.msra.mxu0 0.0
      %1613 = vmatprep.subr.mxu0 0.0
      %1614 = vmatpush2.msra.mxu0 0.0
      %1615 = vmatprep.subr.mxu0 0.0
      %1616 = vmatpush2.msra.mxu0 0.0
      %1617 = vmatprep.subr.mxu0 0.0
      %1618 = vmatpush2.msra.mxu0 0.0
      %1619 = vmatprep.subr.mxu0 0.0
      %1620 = vmatpush2.msra.mxu0 0.0
      %1621 = vmatprep.subr.mxu0 0.0
      %1622 = vmatpush2.msra.mxu0 0.0
      %1623 = vmatprep.subr.mxu0 0.0
      %1624 = vmatpush2.msra.mxu0 0.0
      %1625 = vmatprep.subr.mxu0 0.0
      %1626 = vmatpush2.msra.mxu0 0.0
      %1627 = vmatprep.subr.mxu0 0.0
      %1628 = vmatpush2.msra.mxu0 0.0
      %1629 = vmatprep.mubr.f32.mxu0 0.0
      %1630 = vmatmul.mubr.f32.gmra.mxu0 %v1539
      %v1631 = vpop.f32.mrf.mxu0
      %v1632 = vadd.f32 0.0, %v1631
      %v1633 = vpop.f32.mrf.mxu0
      %1634 = vmatprep.mubr.f32.mxu0 0.0
      %1635 = vmatmul.mubr.f32.gmra.mxu0 %v1542
      %v1636 = vpop.f32.mrf.mxu0
      %v1637 = vadd.f32 0.0, %v1636
      %v1638 = vpop.f32.mrf.mxu0
      %1639 = vmatprep.mubr.f32.mxu0 0.0
      %1640 = vmatmul.mubr.f32.gmra.mxu0 %v1545
      %v1641 = vpop.f32.mrf.mxu0
      %v1642 = vadd.f32 0.0, %v1641
      %v1643 = vpop.f32.mrf.mxu0
      %1644 = vmatprep.mubr.f32.mxu0 0.0
      %1645 = vmatmul.mubr.f32.gmra.mxu0 %v1548
      %v1646 = vpop.f32.mrf.mxu0
      %v1647 = vadd.f32 0.0, %v1646
      %v1648 = vpop.f32.mrf.mxu0
      %1649 = vmatprep.mubr.f32.mxu0 0.0
      %1650 = vmatmul.mubr.f32.gmra.mxu0 %v1551
      %v1651 = vpop.f32.mrf.mxu0
      %v1652 = vadd.f32 0.0, %v1651
      %v1653 = vpop.f32.mrf.mxu0
      %1654 = vmatprep.mubr.f32.mxu0 0.0
      %1655 = vmatmul.mubr.f32.gmra.mxu0 %v1554
      %v1656 = vpop.f32.mrf.mxu0
      %v1657 = vadd.f32 0.0, %v1656
      %v1658 = vpop.f32.mrf.mxu0
      %1659 = vmatprep.mubr.f32.mxu0 0.0
      %1660 = vmatmul.mubr.f32.gmra.mxu0 %v1557
      %v1661 = vpop.f32.mrf.mxu0
      %v1662 = vadd.f32 0.0, %v1661
      %v1663 = vpop.f32.mrf.mxu0
      %1664 = vmatprep.mubr.f32.mxu0 0.0
      %1665 = vmatmul.mubr.f32.gmra.mxu0 %v1560
      %v1666 = vpop.f32.mrf.mxu0
      %v1667 = vadd.f32 0.0, %v1666
      %v1668 = vpop.f32.mrf.mxu0
      %1669 = vdwg.mxu0
      %v1670 = vadd.f32 %v1487, %v1632
      %v1671 = vadd.f32 %v1492, %v1637
      %v1672 = vadd.f32 %v1497, %v1642
      %v1673 = vadd.f32 %v1502, %v1647
      %v1674 = vadd.f32 %v1507, %v1652
      %v1675 = vadd.f32 %v1512, %v1657
      %v1676 = vadd.f32 %v1517, %v1662
      %v1677 = vadd.f32 %v1522, %v1667
      %v1678 = vld [vmem:[%s1527 + $0x1] sm:$0xff]
      %v1679 = vld [vmem:[%s1527 + $0x11] sm:$0xff]
      %v1680 = vld [vmem:[%s1527 + $0x21] sm:$0xff]
      %v1681 = vld [vmem:[%s1527 + $0x31] sm:$0xff]
      %v1682 = vld [vmem:[%s1527 + $0x41] sm:$0xff]
      %v1683 = vld [vmem:[%s1527 + $0x51] sm:$0xff]
      %v1684 = vld [vmem:[%s1527 + $0x61] sm:$0xff]
      %v1685 = vld [vmem:[%s1527 + $0x71] sm:$0xff]
      %s1686 = scalar_lea.vmem %s1, 44
      %v1687 = vld [vmem:[%s1686] sm:$0xf]
      %v1689 = vsel %vm216, %v1678, 0
      %v1692 = vsel %vm216, %v1679, 0
      %v1695 = vsel %vm216, %v1680, 0
      %v1698 = vsel %vm216, %v1681, 0
      %v1701 = vsel %vm216, %v1682, 0
      %v1704 = vsel %vm216, %v1683, 0
      %v1707 = vsel %vm216, %v1684, 0
      %v1710 = vsel %vm216, %v1685, 0
      %v1713 = vsel %vm241, %v1687, 0
      %1715 = vmatprep.subr.mxu0 0.0
      %1716 = vmatpush1.msra.mxu0 0.0
      %1717 = vmatprep.subr.mxu0 0.0
      %1718 = vmatpush1.msra.mxu0 0.0
      %1719 = vmatprep.subr.mxu0 0.0
      %1720 = vmatpush1.msra.mxu0 0.0
      %1721 = vmatprep.subr.mxu0 0.0
      %1722 = vmatpush1.msra.mxu0 0.0
      %1723 = vmatprep.subr.mxu0 0.0
      %1724 = vmatpush1.msra.mxu0 0.0
      %1725 = vmatprep.subr.mxu0 0.0
      %1726 = vmatpush1.msra.mxu0 0.0
      %1727 = vmatprep.subr.mxu0 0.0
      %1728 = vmatpush1.msra.mxu0 0.0
      %1729 = vmatprep.subr.mxu0 0.0
      %1730 = vmatpush1.msra.mxu0 0.0
      %1731 = vmatprep.subr.mxu0 0.0
      %1732 = vmatpush1.msra.mxu0 0.0
      %1733 = vmatprep.subr.mxu0 0.0
      %1734 = vmatpush1.msra.mxu0 0.0
      %1735 = vmatprep.subr.mxu0 0.0
      %1736 = vmatpush1.msra.mxu0 0.0
      %1737 = vmatprep.subr.mxu0 0.0
      %1738 = vmatpush1.msra.mxu0 0.0
      %1739 = vmatprep.subr.mxu0 0.0
      %1740 = vmatpush1.msra.mxu0 0.0
      %1741 = vmatprep.subr.mxu0 0.0
      %1742 = vmatpush1.msra.mxu0 0.0
      %1743 = vmatprep.subr.mxu0 0.0
      %1744 = vmatpush1.msra.mxu0 0.0
      %1745 = vmatprep.subr.mxu0 0.0
      %1746 = vmatpush1.msra.mxu0 %v1713
      %1747 = vmatprep.subr.mxu0 0.0
      %1748 = vmatpush2.msra.mxu0 0.0
      %1749 = vmatprep.subr.mxu0 0.0
      %1750 = vmatpush2.msra.mxu0 0.0
      %1751 = vmatprep.subr.mxu0 0.0
      %1752 = vmatpush2.msra.mxu0 0.0
      %1753 = vmatprep.subr.mxu0 0.0
      %1754 = vmatpush2.msra.mxu0 0.0
      %1755 = vmatprep.subr.mxu0 0.0
      %1756 = vmatpush2.msra.mxu0 0.0
      %1757 = vmatprep.subr.mxu0 0.0
      %1758 = vmatpush2.msra.mxu0 0.0
      %1759 = vmatprep.subr.mxu0 0.0
      %1760 = vmatpush2.msra.mxu0 0.0
      %1761 = vmatprep.subr.mxu0 0.0
      %1762 = vmatpush2.msra.mxu0 0.0
      %1763 = vmatprep.subr.mxu0 0.0
      %1764 = vmatpush2.msra.mxu0 0.0
      %1765 = vmatprep.subr.mxu0 0.0
      %1766 = vmatpush2.msra.mxu0 0.0
      %1767 = vmatprep.subr.mxu0 0.0
      %1768 = vmatpush2.msra.mxu0 0.0
      %1769 = vmatprep.subr.mxu0 0.0
      %1770 = vmatpush2.msra.mxu0 0.0
      %1771 = vmatprep.subr.mxu0 0.0
      %1772 = vmatpush2.msra.mxu0 0.0
      %1773 = vmatprep.subr.mxu0 0.0
      %1774 = vmatpush2.msra.mxu0 0.0
      %1775 = vmatprep.subr.mxu0 0.0
      %1776 = vmatpush2.msra.mxu0 0.0
      %1777 = vmatprep.subr.mxu0 0.0
      %1778 = vmatpush2.msra.mxu0 0.0
      %1779 = vmatprep.mubr.f32.mxu0 0.0
      %1780 = vmatmul.mubr.f32.gmra.mxu0 %v1689
      %v1781 = vpop.f32.mrf.mxu0
      %v1782 = vadd.f32 0.0, %v1781
      %v1783 = vpop.f32.mrf.mxu0
      %1784 = vmatprep.mubr.f32.mxu0 0.0
      %1785 = vmatmul.mubr.f32.gmra.mxu0 %v1692
      %v1786 = vpop.f32.mrf.mxu0
      %v1787 = vadd.f32 0.0, %v1786
      %v1788 = vpop.f32.mrf.mxu0
      %1789 = vmatprep.mubr.f32.mxu0 0.0
      %1790 = vmatmul.mubr.f32.gmra.mxu0 %v1695
      %v1791 = vpop.f32.mrf.mxu0
      %v1792 = vadd.f32 0.0, %v1791
      %v1793 = vpop.f32.mrf.mxu0
      %1794 = vmatprep.mubr.f32.mxu0 0.0
      %1795 = vmatmul.mubr.f32.gmra.mxu0 %v1698
      %v1796 = vpop.f32.mrf.mxu0
      %v1797 = vadd.f32 0.0, %v1796
      %v1798 = vpop.f32.mrf.mxu0
      %1799 = vmatprep.mubr.f32.mxu0 0.0
      %1800 = vmatmul.mubr.f32.gmra.mxu0 %v1701
      %v1801 = vpop.f32.mrf.mxu0
      %v1802 = vadd.f32 0.0, %v1801
      %v1803 = vpop.f32.mrf.mxu0
      %1804 = vmatprep.mubr.f32.mxu0 0.0
      %1805 = vmatmul.mubr.f32.gmra.mxu0 %v1704
      %v1806 = vpop.f32.mrf.mxu0
      %v1807 = vadd.f32 0.0, %v1806
      %v1808 = vpop.f32.mrf.mxu0
      %1809 = vmatprep.mubr.f32.mxu0 0.0
      %1810 = vmatmul.mubr.f32.gmra.mxu0 %v1707
      %v1811 = vpop.f32.mrf.mxu0
      %v1812 = vadd.f32 0.0, %v1811
      %v1813 = vpop.f32.mrf.mxu0
      %1814 = vmatprep.mubr.f32.mxu0 0.0
      %1815 = vmatmul.mubr.f32.gmra.mxu0 %v1710
      %v1816 = vpop.f32.mrf.mxu0
      %v1817 = vadd.f32 0.0, %v1816
      %v1818 = vpop.f32.mrf.mxu0
      %1819 = vdwg.mxu0
      %v1820 = vadd.f32 %v1670, %v1782
      %v1821 = vadd.f32 %v1671, %v1787
      %v1822 = vadd.f32 %v1672, %v1792
      %v1823 = vadd.f32 %v1673, %v1797
      %v1824 = vadd.f32 %v1674, %v1802
      %v1825 = vadd.f32 %v1675, %v1807
      %v1826 = vadd.f32 %v1676, %v1812
      %v1827 = vadd.f32 %v1677, %v1817
      %s1828 = scalar_lea.vmem %s1, 48
      %v1829 = vld [vmem:[%s1828] sm:$0xf]
      %s1830 = scalar_lea.vmem %s1, 52
      %v1831 = vld [vmem:[%s1830] sm:$0xf]
      %v1833 = vsel %vm241, %v1831, 0
      %1835 = vmatprep.subr.mxu0 0.0
      %1836 = vmatpush1.msra.mxu0 0.0
      %1837 = vmatprep.subr.mxu0 0.0
      %1838 = vmatpush1.msra.mxu0 0.0
      %1839 = vmatprep.subr.mxu0 0.0
      %1840 = vmatpush1.msra.mxu0 0.0
      %1841 = vmatprep.subr.mxu0 0.0
      %1842 = vmatpush1.msra.mxu0 0.0
      %1843 = vmatprep.subr.mxu0 0.0
      %1844 = vmatpush1.msra.mxu0 0.0
      %1845 = vmatprep.subr.mxu0 0.0
      %1846 = vmatpush1.msra.mxu0 0.0
      %1847 = vmatprep.subr.mxu0 0.0
      %1848 = vmatpush1.msra.mxu0 0.0
      %1849 = vmatprep.subr.mxu0 0.0
      %1850 = vmatpush1.msra.mxu0 0.0
      %1851 = vmatprep.subr.mxu0 0.0
      %1852 = vmatpush1.msra.mxu0 0.0
      %1853 = vmatprep.subr.mxu0 0.0
      %1854 = vmatpush1.msra.mxu0 0.0
      %1855 = vmatprep.subr.mxu0 0.0
      %1856 = vmatpush1.msra.mxu0 0.0
      %1857 = vmatprep.subr.mxu0 0.0
      %1858 = vmatpush1.msra.mxu0 0.0
      %1859 = vmatprep.subr.mxu0 0.0
      %1860 = vmatpush1.msra.mxu0 0.0
      %1861 = vmatprep.subr.mxu0 0.0
      %1862 = vmatpush1.msra.mxu0 0.0
      %1863 = vmatprep.subr.mxu0 0.0
      %1864 = vmatpush1.msra.mxu0 0.0
      %1865 = vmatprep.subr.mxu0 0.0
      %1866 = vmatpush1.msra.mxu0 %v1833
      %1867 = vmatprep.subr.mxu0 0.0
      %1868 = vmatpush2.msra.mxu0 0.0
      %1869 = vmatprep.subr.mxu0 0.0
      %1870 = vmatpush2.msra.mxu0 0.0
      %1871 = vmatprep.subr.mxu0 0.0
      %1872 = vmatpush2.msra.mxu0 0.0
      %1873 = vmatprep.subr.mxu0 0.0
      %1874 = vmatpush2.msra.mxu0 0.0
      %1875 = vmatprep.subr.mxu0 0.0
      %1876 = vmatpush2.msra.mxu0 0.0
      %1877 = vmatprep.subr.mxu0 0.0
      %1878 = vmatpush2.msra.mxu0 0.0
      %1879 = vmatprep.subr.mxu0 0.0
      %1880 = vmatpush2.msra.mxu0 0.0
      %1881 = vmatprep.subr.mxu0 0.0
      %1882 = vmatpush2.msra.mxu0 0.0
      %1883 = vmatprep.subr.mxu0 0.0
      %1884 = vmatpush2.msra.mxu0 0.0
      %1885 = vmatprep.subr.mxu0 0.0
      %1886 = vmatpush2.msra.mxu0 0.0
      %1887 = vmatprep.subr.mxu0 0.0
      %1888 = vmatpush2.msra.mxu0 0.0
      %1889 = vmatprep.subr.mxu0 0.0
      %1890 = vmatpush2.msra.mxu0 0.0
      %1891 = vmatprep.subr.mxu0 0.0
      %1892 = vmatpush2.msra.mxu0 0.0
      %1893 = vmatprep.subr.mxu0 0.0
      %1894 = vmatpush2.msra.mxu0 0.0
      %1895 = vmatprep.subr.mxu0 0.0
      %1896 = vmatpush2.msra.mxu0 0.0
      %1897 = vmatprep.subr.mxu0 0.0
      %1898 = vmatpush2.msra.mxu0 0.0
      %1899 = vmatprep.mubr.f32.mxu0 0.0
      %1900 = vmatmul.mubr.f32.gmra.mxu0 %v1166
      %v1901 = vpop.f32.mrf.mxu0
      %v1902 = vadd.f32 0.0, %v1901
      %v1903 = vpop.f32.mrf.mxu0
      %1904 = vmatprep.mubr.f32.mxu0 0.0
      %1905 = vmatmul.mubr.f32.gmra.mxu0 %v1169
      %v1906 = vpop.f32.mrf.mxu0
      %v1907 = vadd.f32 0.0, %v1906
      %v1908 = vpop.f32.mrf.mxu0
      %1909 = vmatprep.mubr.f32.mxu0 0.0
      %1910 = vmatmul.mubr.f32.gmra.mxu0 %v1172
      %v1911 = vpop.f32.mrf.mxu0
      %v1912 = vadd.f32 0.0, %v1911
      %v1913 = vpop.f32.mrf.mxu0
      %1914 = vmatprep.mubr.f32.mxu0 0.0
      %1915 = vmatmul.mubr.f32.gmra.mxu0 %v1175
      %v1916 = vpop.f32.mrf.mxu0
      %v1917 = vadd.f32 0.0, %v1916
      %v1918 = vpop.f32.mrf.mxu0
      %1919 = vmatprep.mubr.f32.mxu0 0.0
      %1920 = vmatmul.mubr.f32.gmra.mxu0 %v1178
      %v1921 = vpop.f32.mrf.mxu0
      %v1922 = vadd.f32 0.0, %v1921
      %v1923 = vpop.f32.mrf.mxu0
      %1924 = vmatprep.mubr.f32.mxu0 0.0
      %1925 = vmatmul.mubr.f32.gmra.mxu0 %v1181
      %v1926 = vpop.f32.mrf.mxu0
      %v1927 = vadd.f32 0.0, %v1926
      %v1928 = vpop.f32.mrf.mxu0
      %1929 = vmatprep.mubr.f32.mxu0 0.0
      %1930 = vmatmul.mubr.f32.gmra.mxu0 %v1184
      %v1931 = vpop.f32.mrf.mxu0
      %v1932 = vadd.f32 0.0, %v1931
      %v1933 = vpop.f32.mrf.mxu0
      %1934 = vmatprep.mubr.f32.mxu0 0.0
      %1935 = vmatmul.mubr.f32.gmra.mxu0 %v1187
      %v1936 = vpop.f32.mrf.mxu0
      %v1937 = vadd.f32 0.0, %v1936
      %v1938 = vpop.f32.mrf.mxu0
      %1939 = vdwg.mxu0
      %v1941 = vsel %vm241, %v1829, 0
      %1943 = vmatprep.subr.mxu0 0.0
      %1944 = vmatpush1.msra.mxu0 0.0
      %1945 = vmatprep.subr.mxu0 0.0
      %1946 = vmatpush1.msra.mxu0 0.0
      %1947 = vmatprep.subr.mxu0 0.0
      %1948 = vmatpush1.msra.mxu0 0.0
      %1949 = vmatprep.subr.mxu0 0.0
      %1950 = vmatpush1.msra.mxu0 0.0
      %1951 = vmatprep.subr.mxu0 0.0
      %1952 = vmatpush1.msra.mxu0 0.0
      %1953 = vmatprep.subr.mxu0 0.0
      %1954 = vmatpush1.msra.mxu0 0.0
      %1955 = vmatprep.subr.mxu0 0.0
      %1956 = vmatpush1.msra.mxu0 0.0
      %1957 = vmatprep.subr.mxu0 0.0
      %1958 = vmatpush1.msra.mxu0 0.0
      %1959 = vmatprep.subr.mxu0 0.0
      %1960 = vmatpush1.msra.mxu0 0.0
      %1961 = vmatprep.subr.mxu0 0.0
      %1962 = vmatpush1.msra.mxu0 0.0
      %1963 = vmatprep.subr.mxu0 0.0
      %1964 = vmatpush1.msra.mxu0 0.0
      %1965 = vmatprep.subr.mxu0 0.0
      %1966 = vmatpush1.msra.mxu0 0.0
      %1967 = vmatprep.subr.mxu0 0.0
      %1968 = vmatpush1.msra.mxu0 0.0
      %1969 = vmatprep.subr.mxu0 0.0
      %1970 = vmatpush1.msra.mxu0 0.0
      %1971 = vmatprep.subr.mxu0 0.0
      %1972 = vmatpush1.msra.mxu0 0.0
      %1973 = vmatprep.subr.mxu0 0.0
      %1974 = vmatpush1.msra.mxu0 %v1941
      %1975 = vmatprep.subr.mxu0 0.0
      %1976 = vmatpush2.msra.mxu0 0.0
      %1977 = vmatprep.subr.mxu0 0.0
      %1978 = vmatpush2.msra.mxu0 0.0
      %1979 = vmatprep.subr.mxu0 0.0
      %1980 = vmatpush2.msra.mxu0 0.0
      %1981 = vmatprep.subr.mxu0 0.0
      %1982 = vmatpush2.msra.mxu0 0.0
      %1983 = vmatprep.subr.mxu0 0.0
      %1984 = vmatpush2.msra.mxu0 0.0
      %1985 = vmatprep.subr.mxu0 0.0
      %1986 = vmatpush2.msra.mxu0 0.0
      %1987 = vmatprep.subr.mxu0 0.0
      %1988 = vmatpush2.msra.mxu0 0.0
      %1989 = vmatprep.subr.mxu0 0.0
      %1990 = vmatpush2.msra.mxu0 0.0
      %1991 = vmatprep.subr.mxu0 0.0
      %1992 = vmatpush2.msra.mxu0 0.0
      %1993 = vmatprep.subr.mxu0 0.0
      %1994 = vmatpush2.msra.mxu0 0.0
      %1995 = vmatprep.subr.mxu0 0.0
      %1996 = vmatpush2.msra.mxu0 0.0
      %1997 = vmatprep.subr.mxu0 0.0
      %1998 = vmatpush2.msra.mxu0 0.0
      %1999 = vmatprep.subr.mxu0 0.0
      %2000 = vmatpush2.msra.mxu0 0.0
      %2001 = vmatprep.subr.mxu0 0.0
      %2002 = vmatpush2.msra.mxu0 0.0
      %2003 = vmatprep.subr.mxu0 0.0
      %2004 = vmatpush2.msra.mxu0 0.0
      %2005 = vmatprep.subr.mxu0 0.0
      %2006 = vmatpush2.msra.mxu0 0.0
      %2007 = vmatprep.mubr.f32.mxu0 0.0
      %2008 = vmatmul.mubr.f32.gmra.mxu0 %v646
      %v2009 = vpop.f32.mrf.mxu0
      %v2010 = vadd.f32 %v1902, %v2009
      %v2011 = vpop.f32.mrf.mxu0
      %2012 = vmatprep.mubr.f32.mxu0 0.0
      %2013 = vmatmul.mubr.f32.gmra.mxu0 %v649
      %v2014 = vpop.f32.mrf.mxu0
      %v2015 = vadd.f32 %v1907, %v2014
      %v2016 = vpop.f32.mrf.mxu0
      %2017 = vmatprep.mubr.f32.mxu0 0.0
      %2018 = vmatmul.mubr.f32.gmra.mxu0 %v652
      %v2019 = vpop.f32.mrf.mxu0
      %v2020 = vadd.f32 %v1912, %v2019
      %v2021 = vpop.f32.mrf.mxu0
      %2022 = vmatprep.mubr.f32.mxu0 0.0
      %2023 = vmatmul.mubr.f32.gmra.mxu0 %v655
      %v2024 = vpop.f32.mrf.mxu0
      %v2025 = vadd.f32 %v1917, %v2024
      %v2026 = vpop.f32.mrf.mxu0
      %2027 = vmatprep.mubr.f32.mxu0 0.0
      %2028 = vmatmul.mubr.f32.gmra.mxu0 %v658
      %v2029 = vpop.f32.mrf.mxu0
      %v2030 = vadd.f32 %v1922, %v2029
      %v2031 = vpop.f32.mrf.mxu0
      %2032 = vmatprep.mubr.f32.mxu0 0.0
      %2033 = vmatmul.mubr.f32.gmra.mxu0 %v661
      %v2034 = vpop.f32.mrf.mxu0
      %v2035 = vadd.f32 %v1927, %v2034
      %v2036 = vpop.f32.mrf.mxu0
      %2037 = vmatprep.mubr.f32.mxu0 0.0
      %2038 = vmatmul.mubr.f32.gmra.mxu0 %v664
      %v2039 = vpop.f32.mrf.mxu0
      %v2040 = vadd.f32 %v1932, %v2039
      %v2041 = vpop.f32.mrf.mxu0
      %2042 = vmatprep.mubr.f32.mxu0 0.0
      %2043 = vmatmul.mubr.f32.gmra.mxu0 %v667
      %v2044 = vpop.f32.mrf.mxu0
      %v2045 = vadd.f32 %v1937, %v2044
      %v2046 = vpop.f32.mrf.mxu0
      %2047 = vdwg.mxu0
      %s2048 = scalar_lea.vmem %s1, 56
      %v2049 = vld [vmem:[%s2048] sm:$0xf]
      %v2051 = vsel %vm241, %v2049, 0
      %2053 = vmatprep.subr.mxu0 0.0
      %2054 = vmatpush1.msra.mxu0 0.0
      %2055 = vmatprep.subr.mxu0 0.0
      %2056 = vmatpush1.msra.mxu0 0.0
      %2057 = vmatprep.subr.mxu0 0.0
      %2058 = vmatpush1.msra.mxu0 0.0
      %2059 = vmatprep.subr.mxu0 0.0
      %2060 = vmatpush1.msra.mxu0 0.0
      %2061 = vmatprep.subr.mxu0 0.0
      %2062 = vmatpush1.msra.mxu0 0.0
      %2063 = vmatprep.subr.mxu0 0.0
      %2064 = vmatpush1.msra.mxu0 0.0
      %2065 = vmatprep.subr.mxu0 0.0
      %2066 = vmatpush1.msra.mxu0 0.0
      %2067 = vmatprep.subr.mxu0 0.0
      %2068 = vmatpush1.msra.mxu0 0.0
      %2069 = vmatprep.subr.mxu0 0.0
      %2070 = vmatpush1.msra.mxu0 0.0
      %2071 = vmatprep.subr.mxu0 0.0
      %2072 = vmatpush1.msra.mxu0 0.0
      %2073 = vmatprep.subr.mxu0 0.0
      %2074 = vmatpush1.msra.mxu0 0.0
      %2075 = vmatprep.subr.mxu0 0.0
      %2076 = vmatpush1.msra.mxu0 0.0
      %2077 = vmatprep.subr.mxu0 0.0
      %2078 = vmatpush1.msra.mxu0 0.0
      %2079 = vmatprep.subr.mxu0 0.0
      %2080 = vmatpush1.msra.mxu0 0.0
      %2081 = vmatprep.subr.mxu0 0.0
      %2082 = vmatpush1.msra.mxu0 0.0
      %2083 = vmatprep.subr.mxu0 0.0
      %2084 = vmatpush1.msra.mxu0 %v2051
      %2085 = vmatprep.subr.mxu0 0.0
      %2086 = vmatpush2.msra.mxu0 0.0
      %2087 = vmatprep.subr.mxu0 0.0
      %2088 = vmatpush2.msra.mxu0 0.0
      %2089 = vmatprep.subr.mxu0 0.0
      %2090 = vmatpush2.msra.mxu0 0.0
      %2091 = vmatprep.subr.mxu0 0.0
      %2092 = vmatpush2.msra.mxu0 0.0
      %2093 = vmatprep.subr.mxu0 0.0
      %2094 = vmatpush2.msra.mxu0 0.0
      %2095 = vmatprep.subr.mxu0 0.0
      %2096 = vmatpush2.msra.mxu0 0.0
      %2097 = vmatprep.subr.mxu0 0.0
      %2098 = vmatpush2.msra.mxu0 0.0
      %2099 = vmatprep.subr.mxu0 0.0
      %2100 = vmatpush2.msra.mxu0 0.0
      %2101 = vmatprep.subr.mxu0 0.0
      %2102 = vmatpush2.msra.mxu0 0.0
      %2103 = vmatprep.subr.mxu0 0.0
      %2104 = vmatpush2.msra.mxu0 0.0
      %2105 = vmatprep.subr.mxu0 0.0
      %2106 = vmatpush2.msra.mxu0 0.0
      %2107 = vmatprep.subr.mxu0 0.0
      %2108 = vmatpush2.msra.mxu0 0.0
      %2109 = vmatprep.subr.mxu0 0.0
      %2110 = vmatpush2.msra.mxu0 0.0
      %2111 = vmatprep.subr.mxu0 0.0
      %2112 = vmatpush2.msra.mxu0 0.0
      %2113 = vmatprep.subr.mxu0 0.0
      %2114 = vmatpush2.msra.mxu0 0.0
      %2115 = vmatprep.subr.mxu0 0.0
      %2116 = vmatpush2.msra.mxu0 0.0
      %2117 = vmatprep.mubr.f32.mxu0 0.0
      %2118 = vmatmul.mubr.f32.gmra.mxu0 %v1689
      %v2119 = vpop.f32.mrf.mxu0
      %v2120 = vadd.f32 0.0, %v2119
      %v2121 = vpop.f32.mrf.mxu0
      %2122 = vmatprep.mubr.f32.mxu0 0.0
      %2123 = vmatmul.mubr.f32.gmra.mxu0 %v1692
      %v2124 = vpop.f32.mrf.mxu0
      %v2125 = vadd.f32 0.0, %v2124
      %v2126 = vpop.f32.mrf.mxu0
      %2127 = vmatprep.mubr.f32.mxu0 0.0
      %2128 = vmatmul.mubr.f32.gmra.mxu0 %v1695
      %v2129 = vpop.f32.mrf.mxu0
      %v2130 = vadd.f32 0.0, %v2129
      %v2131 = vpop.f32.mrf.mxu0
      %2132 = vmatprep.mubr.f32.mxu0 0.0
      %2133 = vmatmul.mubr.f32.gmra.mxu0 %v1698
      %v2134 = vpop.f32.mrf.mxu0
      %v2135 = vadd.f32 0.0, %v2134
      %v2136 = vpop.f32.mrf.mxu0
      %2137 = vmatprep.mubr.f32.mxu0 0.0
      %2138 = vmatmul.mubr.f32.gmra.mxu0 %v1701
      %v2139 = vpop.f32.mrf.mxu0
      %v2140 = vadd.f32 0.0, %v2139
      %v2141 = vpop.f32.mrf.mxu0
      %2142 = vmatprep.mubr.f32.mxu0 0.0
      %2143 = vmatmul.mubr.f32.gmra.mxu0 %v1704
      %v2144 = vpop.f32.mrf.mxu0
      %v2145 = vadd.f32 0.0, %v2144
      %v2146 = vpop.f32.mrf.mxu0
      %2147 = vmatprep.mubr.f32.mxu0 0.0
      %2148 = vmatmul.mubr.f32.gmra.mxu0 %v1707
      %v2149 = vpop.f32.mrf.mxu0
      %v2150 = vadd.f32 0.0, %v2149
      %v2151 = vpop.f32.mrf.mxu0
      %2152 = vmatprep.mubr.f32.mxu0 0.0
      %2153 = vmatmul.mubr.f32.gmra.mxu0 %v1710
      %v2154 = vpop.f32.mrf.mxu0
      %v2155 = vadd.f32 0.0, %v2154
      %v2156 = vpop.f32.mrf.mxu0
      %2157 = vdwg.mxu0
      %v2158 = vadd.f32 %v2010, %v2120
      %v2159 = vadd.f32 %v2015, %v2125
      %v2160 = vadd.f32 %v2020, %v2130
      %v2161 = vadd.f32 %v2025, %v2135
      %v2162 = vadd.f32 %v2030, %v2140
      %v2163 = vadd.f32 %v2035, %v2145
      %v2164 = vadd.f32 %v2040, %v2150
      %v2165 = vadd.f32 %v2045, %v2155
      %v2166 = vld [vmem:[%s1527 + $0x2] sm:$0xff]
      %v2167 = vld [vmem:[%s1527 + $0x12] sm:$0xff]
      %v2168 = vld [vmem:[%s1527 + $0x22] sm:$0xff]
      %v2169 = vld [vmem:[%s1527 + $0x32] sm:$0xff]
      %v2170 = vld [vmem:[%s1527 + $0x42] sm:$0xff]
      %v2171 = vld [vmem:[%s1527 + $0x52] sm:$0xff]
      %v2172 = vld [vmem:[%s1527 + $0x62] sm:$0xff]
      %v2173 = vld [vmem:[%s1527 + $0x72] sm:$0xff]
      %s2174 = scalar_lea.vmem %s1, 60
      %v2175 = vld [vmem:[%s2174] sm:$0xf]
      %v2177 = vsel %vm216, %v2166, 0
      %v2180 = vsel %vm216, %v2167, 0
      %v2183 = vsel %vm216, %v2168, 0
      %v2186 = vsel %vm216, %v2169, 0
      %v2189 = vsel %vm216, %v2170, 0
      %v2192 = vsel %vm216, %v2171, 0
      %v2195 = vsel %vm216, %v2172, 0
      %v2198 = vsel %vm216, %v2173, 0
      %v2201 = vsel %vm241, %v2175, 0
      %2203 = vmatprep.subr.mxu0 0.0
      %2204 = vmatpush1.msra.mxu0 0.0
      %2205 = vmatprep.subr.mxu0 0.0
      %2206 = vmatpush1.msra.mxu0 0.0
      %2207 = vmatprep.subr.mxu0 0.0
      %2208 = vmatpush1.msra.mxu0 0.0
      %2209 = vmatprep.subr.mxu0 0.0
      %2210 = vmatpush1.msra.mxu0 0.0
      %2211 = vmatprep.subr.mxu0 0.0
      %2212 = vmatpush1.msra.mxu0 0.0
      %2213 = vmatprep.subr.mxu0 0.0
      %2214 = vmatpush1.msra.mxu0 0.0
      %2215 = vmatprep.subr.mxu0 0.0
      %2216 = vmatpush1.msra.mxu0 0.0
      %2217 = vmatprep.subr.mxu0 0.0
      %2218 = vmatpush1.msra.mxu0 0.0
      %2219 = vmatprep.subr.mxu0 0.0
      %2220 = vmatpush1.msra.mxu0 0.0
      %2221 = vmatprep.subr.mxu0 0.0
      %2222 = vmatpush1.msra.mxu0 0.0
      %2223 = vmatprep.subr.mxu0 0.0
      %2224 = vmatpush1.msra.mxu0 0.0
      %2225 = vmatprep.subr.mxu0 0.0
      %2226 = vmatpush1.msra.mxu0 0.0
      %2227 = vmatprep.subr.mxu0 0.0
      %2228 = vmatpush1.msra.mxu0 0.0
      %2229 = vmatprep.subr.mxu0 0.0
      %2230 = vmatpush1.msra.mxu0 0.0
      %2231 = vmatprep.subr.mxu0 0.0
      %2232 = vmatpush1.msra.mxu0 0.0
      %2233 = vmatprep.subr.mxu0 0.0
      %2234 = vmatpush1.msra.mxu0 %v2201
      %2235 = vmatprep.subr.mxu0 0.0
      %2236 = vmatpush2.msra.mxu0 0.0
      %2237 = vmatprep.subr.mxu0 0.0
      %2238 = vmatpush2.msra.mxu0 0.0
      %2239 = vmatprep.subr.mxu0 0.0
      %2240 = vmatpush2.msra.mxu0 0.0
      %2241 = vmatprep.subr.mxu0 0.0
      %2242 = vmatpush2.msra.mxu0 0.0
      %2243 = vmatprep.subr.mxu0 0.0
      %2244 = vmatpush2.msra.mxu0 0.0
      %2245 = vmatprep.subr.mxu0 0.0
      %2246 = vmatpush2.msra.mxu0 0.0
      %2247 = vmatprep.subr.mxu0 0.0
      %2248 = vmatpush2.msra.mxu0 0.0
      %2249 = vmatprep.subr.mxu0 0.0
      %2250 = vmatpush2.msra.mxu0 0.0
      %2251 = vmatprep.subr.mxu0 0.0
      %2252 = vmatpush2.msra.mxu0 0.0
      %2253 = vmatprep.subr.mxu0 0.0
      %2254 = vmatpush2.msra.mxu0 0.0
      %2255 = vmatprep.subr.mxu0 0.0
      %2256 = vmatpush2.msra.mxu0 0.0
      %2257 = vmatprep.subr.mxu0 0.0
      %2258 = vmatpush2.msra.mxu0 0.0
      %2259 = vmatprep.subr.mxu0 0.0
      %2260 = vmatpush2.msra.mxu0 0.0
      %2261 = vmatprep.subr.mxu0 0.0
      %2262 = vmatpush2.msra.mxu0 0.0
      %2263 = vmatprep.subr.mxu0 0.0
      %2264 = vmatpush2.msra.mxu0 0.0
      %2265 = vmatprep.subr.mxu0 0.0
      %2266 = vmatpush2.msra.mxu0 0.0
      %2267 = vmatprep.mubr.f32.mxu0 0.0
      %2268 = vmatmul.mubr.f32.gmra.mxu0 %v2177
      %v2269 = vpop.f32.mrf.mxu0
      %v2270 = vadd.f32 0.0, %v2269
      %v2271 = vpop.f32.mrf.mxu0
      %2272 = vmatprep.mubr.f32.mxu0 0.0
      %2273 = vmatmul.mubr.f32.gmra.mxu0 %v2180
      %v2274 = vpop.f32.mrf.mxu0
      %v2275 = vadd.f32 0.0, %v2274
      %v2276 = vpop.f32.mrf.mxu0
      %2277 = vmatprep.mubr.f32.mxu0 0.0
      %2278 = vmatmul.mubr.f32.gmra.mxu0 %v2183
      %v2279 = vpop.f32.mrf.mxu0
      %v2280 = vadd.f32 0.0, %v2279
      %v2281 = vpop.f32.mrf.mxu0
      %2282 = vmatprep.mubr.f32.mxu0 0.0
      %2283 = vmatmul.mubr.f32.gmra.mxu0 %v2186
      %v2284 = vpop.f32.mrf.mxu0
      %v2285 = vadd.f32 0.0, %v2284
      %v2286 = vpop.f32.mrf.mxu0
      %2287 = vmatprep.mubr.f32.mxu0 0.0
      %2288 = vmatmul.mubr.f32.gmra.mxu0 %v2189
      %v2289 = vpop.f32.mrf.mxu0
      %v2290 = vadd.f32 0.0, %v2289
      %v2291 = vpop.f32.mrf.mxu0
      %2292 = vmatprep.mubr.f32.mxu0 0.0
      %2293 = vmatmul.mubr.f32.gmra.mxu0 %v2192
      %v2294 = vpop.f32.mrf.mxu0
      %v2295 = vadd.f32 0.0, %v2294
      %v2296 = vpop.f32.mrf.mxu0
      %2297 = vmatprep.mubr.f32.mxu0 0.0
      %2298 = vmatmul.mubr.f32.gmra.mxu0 %v2195
      %v2299 = vpop.f32.mrf.mxu0
      %v2300 = vadd.f32 0.0, %v2299
      %v2301 = vpop.f32.mrf.mxu0
      %2302 = vmatprep.mubr.f32.mxu0 0.0
      %2303 = vmatmul.mubr.f32.gmra.mxu0 %v2198
      %v2304 = vpop.f32.mrf.mxu0
      %v2305 = vadd.f32 0.0, %v2304
      %v2306 = vpop.f32.mrf.mxu0
      %2307 = vdwg.mxu0
      %v2308 = vadd.f32 %v2158, %v2270
      %v2309 = vadd.f32 %v2159, %v2275
      %v2310 = vadd.f32 %v2160, %v2280
      %v2311 = vadd.f32 %v2161, %v2285
      %v2312 = vadd.f32 %v2162, %v2290
      %v2313 = vadd.f32 %v2163, %v2295
      %v2314 = vadd.f32 %v2164, %v2300
      %v2315 = vadd.f32 %v2165, %v2305
      %v2316 = vld [vmem:[%s2] sm:$0x1]
      %v2318 = vlaneseq
      %v2319 = vshrl.u32 %v2318, 7
      %v2320 = vsub.s32 0, %v2319
      %v2321 = vrot.slane %v2316, %v2320
      %v2323 = vadd.f32 %v777, %v2321
      %v2324 = vadd.f32 %v778, %v2321
      %v2325 = vadd.f32 %v779, %v2321
      %v2326 = vadd.f32 %v780, %v2321
      %v2327 = vadd.f32 %v781, %v2321
      %v2328 = vadd.f32 %v782, %v2321
      %v2329 = vadd.f32 %v783, %v2321
      %v2330 = vadd.f32 %v784, %v2321
      %v2331 = vmax.f32 %v2323, 0.0
      %v2332 = vmax.f32 %v2324, 0.0
      %v2333 = vmax.f32 %v2325, 0.0
      %v2334 = vmax.f32 %v2326, 0.0
      %v2335 = vmax.f32 %v2327, 0.0
      %v2336 = vmax.f32 %v2328, 0.0
      %v2337 = vmax.f32 %v2329, 0.0
      %v2338 = vmax.f32 %v2330, 0.0
      %vm2339 = vcmask 64512
      %2340 = vst.msk [vmem:[%s192] sm:$0xff] %vm2339, %v2331
      %2341 = vst.msk [vmem:[%s192 + $0x8] sm:$0xff] %vm2339, %v2332
      %2342 = vst.msk [vmem:[%s192 + $0x10] sm:$0xff] %vm2339, %v2333
      %2343 = vst.msk [vmem:[%s192 + $0x18] sm:$0xff] %vm2339, %v2334
      %2344 = vst.msk [vmem:[%s192 + $0x20] sm:$0xff] %vm2339, %v2335
      %2345 = vst.msk [vmem:[%s192 + $0x28] sm:$0xff] %vm2339, %v2336
      %2346 = vst.msk [vmem:[%s192 + $0x30] sm:$0xff] %vm2339, %v2337
      %2347 = vst.msk [vmem:[%s192 + $0x38] sm:$0xff] %vm2339, %v2338
      %v2348 = vld [vmem:[%s2] sm:$0x1]
      %v2350 = vlaneseq
      %v2351 = vshrl.u32 %v2350, 7
      %v2352 = vsub.s32 0, %v2351
      %v2353 = vrot.slane %v2348, %v2352
      %v2355 = vadd.f32 %v1297, %v2353
      %v2356 = vadd.f32 %v1298, %v2353
      %v2357 = vadd.f32 %v1299, %v2353
      %v2358 = vadd.f32 %v1300, %v2353
      %v2359 = vadd.f32 %v1301, %v2353
      %v2360 = vadd.f32 %v1302, %v2353
      %v2361 = vadd.f32 %v1303, %v2353
      %v2362 = vadd.f32 %v1304, %v2353
      %v2363 = vmax.f32 %v2355, 0.0
      %v2364 = vmax.f32 %v2356, 0.0
      %v2365 = vmax.f32 %v2357, 0.0
      %v2366 = vmax.f32 %v2358, 0.0
      %v2367 = vmax.f32 %v2359, 0.0
      %v2368 = vmax.f32 %v2360, 0.0
      %v2369 = vmax.f32 %v2361, 0.0
      %v2370 = vmax.f32 %v2362, 0.0
      %s2371 = scalar_lea.vmem %s192, 64
      %2372 = vst.msk [vmem:[%s2371] sm:$0xff] %vm2339, %v2363
      %2373 = vst.msk [vmem:[%s2371 + $0x8] sm:$0xff] %vm2339, %v2364
      %2374 = vst.msk [vmem:[%s2371 + $0x10] sm:$0xff] %vm2339, %v2365
      %2375 = vst.msk [vmem:[%s2371 + $0x18] sm:$0xff] %vm2339, %v2366
      %2376 = vst.msk [vmem:[%s2371 + $0x20] sm:$0xff] %vm2339, %v2367
      %2377 = vst.msk [vmem:[%s2371 + $0x28] sm:$0xff] %vm2339, %v2368
      %2378 = vst.msk [vmem:[%s2371 + $0x30] sm:$0xff] %vm2339, %v2369
      %2379 = vst.msk [vmem:[%s2371 + $0x38] sm:$0xff] %vm2339, %v2370
      %v2380 = vld [vmem:[%s2] sm:$0x1]
      %v2382 = vlaneseq
      %v2383 = vshrl.u32 %v2382, 7
      %v2384 = vsub.s32 0, %v2383
      %v2385 = vrot.slane %v2380, %v2384
      %v2387 = vadd.f32 %v1820, %v2385
      %v2388 = vadd.f32 %v1821, %v2385
      %v2389 = vadd.f32 %v1822, %v2385
      %v2390 = vadd.f32 %v1823, %v2385
      %v2391 = vadd.f32 %v1824, %v2385
      %v2392 = vadd.f32 %v1825, %v2385
      %v2393 = vadd.f32 %v1826, %v2385
      %v2394 = vadd.f32 %v1827, %v2385
      %v2395 = vmax.f32 %v2387, 0.0
      %v2396 = vmax.f32 %v2388, 0.0
      %v2397 = vmax.f32 %v2389, 0.0
      %v2398 = vmax.f32 %v2390, 0.0
      %v2399 = vmax.f32 %v2391, 0.0
      %v2400 = vmax.f32 %v2392, 0.0
      %v2401 = vmax.f32 %v2393, 0.0
      %v2402 = vmax.f32 %v2394, 0.0
      %s2403 = scalar_lea.vmem %s192, 128
      %2404 = vst.msk [vmem:[%s2403] sm:$0xff] %vm2339, %v2395
      %2405 = vst.msk [vmem:[%s2403 + $0x8] sm:$0xff] %vm2339, %v2396
      %2406 = vst.msk [vmem:[%s2403 + $0x10] sm:$0xff] %vm2339, %v2397
      %2407 = vst.msk [vmem:[%s2403 + $0x18] sm:$0xff] %vm2339, %v2398
      %2408 = vst.msk [vmem:[%s2403 + $0x20] sm:$0xff] %vm2339, %v2399
      %2409 = vst.msk [vmem:[%s2403 + $0x28] sm:$0xff] %vm2339, %v2400
      %2410 = vst.msk [vmem:[%s2403 + $0x30] sm:$0xff] %vm2339, %v2401
      %2411 = vst.msk [vmem:[%s2403 + $0x38] sm:$0xff] %vm2339, %v2402
      %v2412 = vld [vmem:[%s2] sm:$0x1]
      %v2414 = vlaneseq
      %v2415 = vshrl.u32 %v2414, 7
      %v2416 = vsub.s32 0, %v2415
      %v2417 = vrot.slane %v2412, %v2416
      %v2419 = vadd.f32 %v2308, %v2417
      %v2420 = vadd.f32 %v2309, %v2417
      %v2421 = vadd.f32 %v2310, %v2417
      %v2422 = vadd.f32 %v2311, %v2417
      %v2423 = vadd.f32 %v2312, %v2417
      %v2424 = vadd.f32 %v2313, %v2417
      %v2425 = vadd.f32 %v2314, %v2417
      %v2426 = vadd.f32 %v2315, %v2417
      %v2427 = vmax.f32 %v2419, 0.0
      %v2428 = vmax.f32 %v2420, 0.0
      %v2429 = vmax.f32 %v2421, 0.0
      %v2430 = vmax.f32 %v2422, 0.0
      %v2431 = vmax.f32 %v2423, 0.0
      %v2432 = vmax.f32 %v2424, 0.0
      %v2433 = vmax.f32 %v2425, 0.0
      %v2434 = vmax.f32 %v2426, 0.0
      %s2435 = scalar_lea.vmem %s192, 192
      %2436 = vst.msk [vmem:[%s2435] sm:$0xff] %vm2339, %v2427
      %2437 = vst.msk [vmem:[%s2435 + $0x8] sm:$0xff] %vm2339, %v2428
      %2438 = vst.msk [vmem:[%s2435 + $0x10] sm:$0xff] %vm2339, %v2429
      %2439 = vst.msk [vmem:[%s2435 + $0x18] sm:$0xff] %vm2339, %v2430
      %2440 = vst.msk [vmem:[%s2435 + $0x20] sm:$0xff] %vm2339, %v2431
      %2441 = vst.msk [vmem:[%s2435 + $0x28] sm:$0xff] %vm2339, %v2432
      %2442 = vst.msk [vmem:[%s2435 + $0x30] sm:$0xff] %vm2339, %v2433
      %2443 = vst.msk [vmem:[%s2435 + $0x38] sm:$0xff] %vm2339, %v2434
      %s2444 = smul.u32 8, %s19
      %p2445 = scmp.lt.s32.totalorder %s18, 1
      %s2446 = scalar_select %p2445, %s18, 1
      %p2447 = scmp.lt.s32.totalorder %s2444, 7
      %s2448 = scalar_select %p2447, %s2444, 7
      %s2449 = smul.addr %s2446, 32
      %s2450 = sadd.s32 %s2448, %s2449
      %s2451 = smul.addr %s2450, 8
      %s2452 = scalar_lea.vmem %s3, %s2451
      // Predicated region
      $region33: #{unet_up_forward.3} parent=31 // pred_check
        %p2453 = pneg %p114
      $region34: #{unet_up_forward.3} parent=31 // pred_check_branch
        %2455 = sbr.rel (%p2453) target = $region36
      $region35: #{unet_up_forward.3} parent=31 // pred_region
        %s2456 = smul.u32 8, %s19
      $region36: #{unet_up_forward.3} parent=31 // pred_fallthru
        _
    $region32: #{unet_up_forward.3} parent=5 // pred_fallthru
      _
    %p2457 = scmp.le.s32.totalorder 2, %s9
    // Predicated region
    $region37: #{unet_up_forward.3} parent=5 // pred_check
      %p2458 = pneg %p2457
    $region38: #{unet_up_forward.3} parent=5 // pred_check_branch
      %2460 = sbr.rel (%p2458) target = $region40
    $region39: #{unet_up_forward.3} parent=5 // pred_region
      %s2461 = ssub.s32 %s9, 2
      // Predicated region
      $region41: #{unet_up_forward.3} parent=39 // pred_check
        %p2462 = pneg %p120
      $region42: #{unet_up_forward.3} parent=39 // pred_check_branch
        %2464 = sbr.rel (%p2462) target = $region44
      $region43: #{unet_up_forward.3} parent=39 // pred_region
        %s2465 = smul.u32 8, %s21
        %p2466 = scmp.lt.s32.totalorder %s20, 1
        %s2467 = scalar_select %p2466, %s20, 1
        %p2468 = scmp.lt.s32.totalorder %s2465, 7
        %s2469 = scalar_select %p2468, %s2465, 7
        %s2470 = smul.addr %s2467, 32
        %s2471 = sadd.s32 %s2469, %s2470
        %s2472 = smul.addr %s2471, 8
        %s2473 = scalar_lea.vmem %s3, %s2472
      $region44: #{unet_up_forward.3} parent=39 // pred_fallthru
        _
    $region40: #{unet_up_forward.3} parent=5 // pred_fallthru
      _
  $region6: #{unet_up_forward.3} parent=0 // loop_footer
    %s13 = sadd.s32 1, %s9
  $region7: #{unet_up_forward.3} parent=0 // loop_footer_branch
    %8 = sbr.rel target = $region3
  $region8: #{unet_up_forward.3} parent=0 // loop_exit
    _

</llo_original>
